<compile_context>
chip_gen: v7x
topology: tpu7x:2x2x1
jax: 0.10.0
libtpu: 0.0.40
codegen_flags: <defaults>
</compile_context>

<pallas_src>
import math
import functools

import jax
import jax.numpy as jnp
from jax.experimental import pallas as pl
from jax.experimental.pallas import tpu as pltpu


# ----------------------------- in-kernel helpers -----------------------------

def _layer_norm(x_f32, w_f32, b_f32, eps=1e-5):
    """LayerNorm over the last axis; stats in f32. w/b are pre-cast f32 rows."""
    mu = jnp.mean(x_f32, axis=-1, keepdims=True)
    xc = x_f32 - mu
    var = jnp.mean(xc * xc, axis=-1, keepdims=True)
    return xc * jax.lax.rsqrt(var + eps) * w_f32 + b_f32


# ------------------------------ fused forward kernel --------------------------

def fused_encoder_kernel(idx_ref, ep_ref, wa_ref, wb_ref, fcw_ref, vec_ref,
                         o_ref, *, batch, seq, n_heads, n_layers):
    VT, D = ep_ref.shape                   # VT = vocab + token_len
    BT = batch * seq
    Hn = n_heads
    hd = D // Hn
    H = o_ref.shape[1]
    scale = 1.0 / math.sqrt(hd)

    vecs = vec_ref[...]                    # [8*L + 5, W] f32 bias/LN slab

    def vrow(r, width):                    # one f32 vector row -> [1, width]
        return vecs[r:r + 1, 0:width]

    # --- embedding gather + positional add as ONE one-hot matmul ---
    # idx_ref[:, 0] = token id in [0, V); idx_ref[:, 1] = V + position.
    idx = idx_ref[...]                                             # [BT, 2] int32
    lane = jax.lax.broadcasted_iota(jnp.int32, (BT, VT), 1)
    onehot = ((lane == idx[:, 0:1]) | (lane == idx[:, 1:2])).astype(jnp.bfloat16)
    x = jnp.dot(onehot, ep_ref[...], preferred_element_type=jnp.float32)  # [BT, D]

    # --- transformer encoder layers (static unroll; L is small) ---
    for l in range(n_layers):
        base = 8 * l
        wa_l = wa_ref[l]                                           # [D, 6D] bf16

        # pre-norm multi-head self-attention block
        y1 = _layer_norm(x, vrow(base + 0, D), vrow(base + 1, D)).astype(jnp.bfloat16)
        qkv = jnp.dot(y1, wa_l[:, 0:3 * D], preferred_element_type=jnp.float32)
        qkv = qkv + vrow(base + 2, 3 * D)                          # [BT, 3D] f32
        qkv3 = qkv.reshape(batch, seq, 3 * D)

        # head-batched q/k/v: [Hn*B, T, hd] (leading-dim stack, no transposes)
        q_s = jnp.stack([qkv3[:, :, hh * hd:(hh + 1) * hd]
                         for hh in range(Hn)], axis=0).reshape(Hn * batch, seq, hd)
        k_s = jnp.stack([qkv3[:, :, D + hh * hd:D + (hh + 1) * hd]
                         for hh in range(Hn)], axis=0).reshape(Hn * batch, seq, hd)
        v_s = jnp.stack([qkv3[:, :, 2 * D + hh * hd:2 * D + (hh + 1) * hd]
                         for hh in range(Hn)], axis=0).reshape(Hn * batch, seq, hd)
        q_s = q_s.astype(jnp.bfloat16)
        k_s = k_s.astype(jnp.bfloat16)
        v_s = v_s.astype(jnp.bfloat16)

        s = jnp.einsum('bqd,bkd->bqk', q_s, k_s,
                       preferred_element_type=jnp.float32) * scale
        s = s - jnp.max(s, axis=-1, keepdims=True)
        p = jnp.exp(s)
        p = p / jnp.sum(p, axis=-1, keepdims=True)                 # exact division
        o = jnp.einsum('bqk,bkd->bqd', p.astype(jnp.bfloat16), v_s,
                       preferred_element_type=jnp.float32)         # [Hn*B, T, hd]

        # concat heads back onto the lane axis, then ONE out-projection matmul
        o4 = o.reshape(Hn, batch, seq, hd)
        cat = jnp.concatenate([o4[hh] for hh in range(Hn)], axis=-1)   # [B, T, D]
        cat = cat.reshape(BT, D).astype(jnp.bfloat16)
        attn = jnp.dot(cat, wa_l[:, 3 * D:4 * D], preferred_element_type=jnp.float32)
        x = x + attn + vrow(base + 3, D)                           # residual

        # pre-norm feed-forward block (ReLU activation)
        y2 = _layer_norm(x, vrow(base + 4, D), vrow(base + 5, D)).astype(jnp.bfloat16)
        f = jnp.dot(y2, wa_l[:, 4 * D:6 * D], preferred_element_type=jnp.float32)
        f = jnp.maximum(f + vrow(base + 6, 2 * D), 0.0).astype(jnp.bfloat16)
        f = jnp.dot(f, wb_ref[l], preferred_element_type=jnp.float32)
        x = x + f + vrow(base + 7, D)                              # residual

    # --- mean-pool over tokens + Linear + LN + LN head ---
    hb = 8 * n_layers
    pooled = jnp.mean(x.reshape(batch, seq, D), axis=1)            # [B, D] f32
    y = jnp.dot(pooled.astype(jnp.bfloat16), fcw_ref[...],
                preferred_element_type=jnp.float32)
    y = y + vrow(hb + 0, H)
    y = _layer_norm(y, vrow(hb + 1, H), vrow(hb + 2, H))
    y = _layer_norm(y, vrow(hb + 3, H), vrow(hb + 4, H))
    o_ref[...] = y.astype(jnp.bfloat16)


# --------------------------------- wrapper ------------------------------------

@functools.partial(jax.jit, static_argnames=("n_heads",))
def hyper_token_encoder(tokens, packed, *, n_heads):
    """tokens: int32 [B, token_len] -> bf16 [B, hypertoken_size]."""
    B, T = tokens.shape
    L = packed['w_a'].shape[0]
    H = packed['fc_w'].shape[1]
    V = packed['embed_pos'].shape[0] - T

    # [BT, 2]: column 0 = token id, column 1 = V + position  (fused gather index)
    tok = tokens.reshape(B * T).astype(jnp.int32)
    pos = jnp.tile(jnp.arange(T, dtype=jnp.int32) + V, (B,))
    idx = jnp.stack([tok, pos], axis=1)

    args = (idx, packed['embed_pos'], packed['w_a'], packed['w_b'],
            packed['fc_w'], packed['vecs'])

    kernel = functools.partial(fused_encoder_kernel, batch=B, seq=T,
                               n_heads=n_heads, n_layers=L)
    return pl.pallas_call(
        kernel,
        out_shape=jax.ShapeDtypeStruct((B, H), jnp.bfloat16),
        in_specs=[pl.BlockSpec(memory_space=pltpu.MemorySpace.VMEM)] * len(args),
        out_specs=pl.BlockSpec(memory_space=pltpu.MemorySpace.VMEM),
        # Everything (weights + activations) is VMEM-resident (~0.1 MiB here);
        # explicit limit turns VMEM overflow into a compile error when scaled.
        compiler_params=pltpu.CompilerParams(vmem_limit_bytes=32 * 1024 * 1024),
    )(*args)


# ------------------------------ parameter init --------------------------------

def init_params(key, vocab_size, token_len, embed_dim, n_layers, hypertoken_size):
    D, H, L = embed_dim, hypertoken_size, n_layers
    k_embed, k_pos, k_fc, k_layers = jax.random.split(key, 4)

    def w(k, shape, scale=0.02):
        return (scale * jax.random.normal(k, shape, jnp.float32)).astype(jnp.bfloat16)

    params = {
        'embed': w(k_embed, (vocab_size, D), 1.0),
        'pos_embed': w(k_pos, (token_len, D), 1.0),
    }

    qkv_w, qkv_b, out_w, out_b = [], [], [], []
    ff1_w, ff1_b, ff2_w, ff2_b = [], [], [], []
    for lk in jax.random.split(k_layers, L):
        ks = jax.random.split(lk, 8)
        # PyTorch in_proj_weight is [3D, D]; transpose -> [D, 3D] ([in, out]).
        qkv_w.append(w(ks[0], (3 * D, D)).T)
        qkv_b.append(w(ks[1], (3 * D,)))
        out_w.append(w(ks[2], (D, D)).T)
        out_b.append(w(ks[3], (D,)))
        ff1_w.append(w(ks[4], (2 * D, D)).T)
        ff1_b.append(w(ks[5], (2 * D,)))
        ff2_w.append(w(ks[6], (D, 2 * D)).T)
        ff2_b.append(w(ks[7], (D,)))

    params.update({
        'qkv_w': jnp.stack(qkv_w), 'qkv_b': jnp.stack(qkv_b),
        'out_w': jnp.stack(out_w), 'out_b': jnp.stack(out_b),
        'ff1_w': jnp.stack(ff1_w), 'ff1_b': jnp.stack(ff1_b),
        'ff2_w': jnp.stack(ff2_w), 'ff2_b': jnp.stack(ff2_b),
        'ln1_w': jnp.ones((L, D), jnp.bfloat16), 'ln1_b': jnp.zeros((L, D), jnp.bfloat16),
        'ln2_w': jnp.ones((L, D), jnp.bfloat16), 'ln2_b': jnp.zeros((L, D), jnp.bfloat16),
    })

    kf = jax.random.split(k_fc, 2)
    params['fc_w'] = w(kf[0], (H, D)).T            # Linear(D, H): [H, D] -> [D, H]
    params['fc_b'] = w(kf[1], (H,))
    params['ln_a_w'] = jnp.ones((H,), jnp.bfloat16)
    params['ln_a_b'] = jnp.zeros((H,), jnp.bfloat16)
    params['ln_b_w'] = jnp.ones((H,), jnp.bfloat16)
    params['ln_b_b'] = jnp.zeros((H,), jnp.bfloat16)
    return params


def pack_params(params):
    """One-time packing: 21 tensors -> 5 slabs (done outside the hot path)."""
    L, D, _ = params['qkv_w'].shape
    H = params['fc_b'].shape[0]
    W = max(3 * D, H)                              # lane width of the vector slab

    def row(v):
        v = jnp.asarray(v).astype(jnp.float32).reshape(-1)
        return jnp.pad(v, (0, W - v.shape[0]))

    embed_pos = jnp.concatenate([params['embed'], params['pos_embed']], axis=0)
    w_a = jnp.concatenate([params['qkv_w'], params['out_w'], params['ff1_w']],
                          axis=-1)                 # [L, D, 6D] bf16
    w_b = params['ff2_w']                          # [L, 2D, D] bf16

    rows = []
    for l in range(L):                             # 8 f32 rows per layer
        rows += [row(params['ln1_w'][l]), row(params['ln1_b'][l]),
                 row(params['qkv_b'][l]), row(params['out_b'][l]),
                 row(params['ln2_w'][l]), row(params['ln2_b'][l]),
                 row(params['ff1_b'][l]), row(params['ff2_b'][l])]
    rows += [row(params['fc_b']), row(params['ln_a_w']), row(params['ln_a_b']),
             row(params['ln_b_w']), row(params['ln_b_b'])]
    vecs = jnp.stack(rows)                         # [8L + 5, W] f32

    return {'embed_pos': embed_pos, 'w_a': w_a, 'w_b': w_b,
            'fc_w': params['fc_w'], 'vecs': vecs}


# ----------------------------------- main --------------------------------------

if __name__ == "__main__":
    vocab_size = 64
    token_len = 8
    embed_dim = 32
    head_size = 8            # -> n_heads = 4
    n_layers = 2
    hypertoken_size = 16
    batch = 2
    n_heads = embed_dim // head_size

    key = jax.random.PRNGKey(0)
    pk, xk = jax.random.split(key)
    params = init_params(pk, vocab_size, token_len, embed_dim, n_layers, hypertoken_size)
    packed = pack_params(params)

    tokens = jax.random.randint(xk, (batch, token_len), 0, vocab_size, dtype=jnp.int32)

    out = hyper_token_encoder(tokens, packed, n_heads=n_heads)
    out = jax.block_until_ready(out)

    assert out.shape == (batch, hypertoken_size), out.shape
    assert out.dtype == jnp.bfloat16, out.dtype
    print("KERNEL_OK")
</pallas_src>

<mosaic_0001>
module attributes {stable_mosaic.version = 11 : i64} {
  func.func @fused_encoder_kernel(%arg0: memref<16x2xi32, #tpu.memory_space<vmem>>, %arg1: memref<72x32xbf16, #tpu.memory_space<vmem>>, %arg2: memref<2x32x192xbf16, #tpu.memory_space<vmem>>, %arg3: memref<2x64x32xbf16, #tpu.memory_space<vmem>>, %arg4: memref<32x16xbf16, #tpu.memory_space<vmem>>, %arg5: memref<21x96xf32, #tpu.memory_space<vmem>>, %arg6: memref<2x16xbf16, #tpu.memory_space<vmem>>) attributes {dimension_semantics = [], scalar_prefetch = 0 : i64, scratch_operands = 0 : i64, tpu.core_type = #tpu.core_type<tc>} {
    %c0 = arith.constant 0 : index
    %c0_0 = arith.constant 0 : index
    %0 = vector.load %arg5[%c0, %c0_0] : memref<21x96xf32, #tpu.memory_space<vmem>>, vector<21x96xf32>
    %c0_1 = arith.constant 0 : index
    %c0_2 = arith.constant 0 : index
    %1 = vector.load %arg0[%c0_1, %c0_2] : memref<16x2xi32, #tpu.memory_space<vmem>>, vector<16x2xi32>
    %2 = tpu.iota {dimensions = array<i32: 1>} : vector<16x72xi32>
    %3 = vector.extract_strided_slice %1 {offsets = [0, 0], sizes = [16, 1], strides = [1, 1]} : vector<16x2xi32> to vector<16x1xi32>
    %4 = vector.broadcast %3 : vector<16x1xi32> to vector<16x72xi32>
    %5 = arith.cmpi eq, %2, %4 : vector<16x72xi32>
    %6 = vector.extract_strided_slice %1 {offsets = [0, 1], sizes = [16, 1], strides = [1, 1]} : vector<16x2xi32> to vector<16x1xi32>
    %7 = vector.broadcast %6 : vector<16x1xi32> to vector<16x72xi32>
    %8 = arith.cmpi eq, %2, %7 : vector<16x72xi32>
    %9 = arith.ori %5, %8 : vector<16x72xi1>
    %10 = arith.extui %9 : vector<16x72xi1> to vector<16x72xi32>
    %11 = arith.sitofp %10 : vector<16x72xi32> to vector<16x72xf32>
    %12 = arith.truncf %11 : vector<16x72xf32> to vector<16x72xbf16>
    %c0_3 = arith.constant 0 : index
    %c0_4 = arith.constant 0 : index
    %13 = vector.load %arg1[%c0_3, %c0_4] : memref<72x32xbf16, #tpu.memory_space<vmem>>, vector<72x32xbf16>
    %cst = arith.constant dense<0.000000e+00> : vector<16x32xf32>
    %14 = tpu.matmul %12, %13, %cst {dimension_numbers = #tpu.dot_dimension_numbers<[1], [0], [0], [1], [0, 0, 1, 1], [], []>} : vector<16x72xbf16>, vector<72x32xbf16>, vector<16x32xf32> -> vector<16x32xf32>
    %c0_5 = arith.constant 0 : index
    %c0_6 = arith.constant 0 : index
    %c0_7 = arith.constant 0 : index
    %15 = vector.load %arg2[%c0_5, %c0_6, %c0_7] : memref<2x32x192xbf16, #tpu.memory_space<vmem>>, vector<1x32x192xbf16>
    %16 = vector.shape_cast %15 : vector<1x32x192xbf16> to vector<32x192xbf16>
    %17 = vector.extract_strided_slice %0 {offsets = [0, 0], sizes = [1, 32], strides = [1, 1]} : vector<21x96xf32> to vector<1x32xf32>
    %18 = vector.extract_strided_slice %0 {offsets = [1, 0], sizes = [1, 32], strides = [1, 1]} : vector<21x96xf32> to vector<1x32xf32>
    %cst_8 = arith.constant dense<0.000000e+00> : vector<16xf32>
    %19 = vector.multi_reduction <add>, %14, %cst_8 [1] : vector<16x32xf32> to vector<16xf32>
    %20 = vector.shape_cast %19 : vector<16xf32> to vector<16x1xf32>
    %cst_9 = arith.constant 3.200000e+01 : f32
    %21 = vector.broadcast %cst_9 : f32 to vector<16x1xf32>
    %22 = arith.divf %20, %21 : vector<16x1xf32>
    %23 = vector.broadcast %22 : vector<16x1xf32> to vector<16x32xf32>
    %24 = arith.subf %14, %23 : vector<16x32xf32>
    %25 = arith.mulf %24, %24 : vector<16x32xf32>
    %cst_10 = arith.constant dense<0.000000e+00> : vector<16xf32>
    %26 = vector.multi_reduction <add>, %25, %cst_10 [1] : vector<16x32xf32> to vector<16xf32>
    %27 = vector.shape_cast %26 : vector<16xf32> to vector<16x1xf32>
    %cst_11 = arith.constant 3.200000e+01 : f32
    %28 = vector.broadcast %cst_11 : f32 to vector<16x1xf32>
    %29 = arith.divf %27, %28 : vector<16x1xf32>
    %cst_12 = arith.constant 9.99999974E-6 : f32
    %30 = vector.broadcast %cst_12 : f32 to vector<16x1xf32>
    %31 = arith.addf %29, %30 : vector<16x1xf32>
    %32 = math.rsqrt %31 : vector<16x1xf32>
    %33 = vector.broadcast %32 : vector<16x1xf32> to vector<16x32xf32>
    %34 = arith.mulf %24, %33 : vector<16x32xf32>
    %35 = vector.broadcast %17 : vector<1x32xf32> to vector<16x32xf32>
    %36 = arith.mulf %34, %35 : vector<16x32xf32>
    %37 = vector.broadcast %18 : vector<1x32xf32> to vector<16x32xf32>
    %38 = arith.addf %36, %37 : vector<16x32xf32>
    %39 = arith.truncf %38 : vector<16x32xf32> to vector<16x32xbf16>
    %40 = vector.extract_strided_slice %16 {offsets = [0, 0], sizes = [32, 96], strides = [1, 1]} : vector<32x192xbf16> to vector<32x96xbf16>
    %cst_13 = arith.constant dense<0.000000e+00> : vector<16x96xf32>
    %41 = tpu.matmul %39, %40, %cst_13 {dimension_numbers = #tpu.dot_dimension_numbers<[1], [0], [0], [1], [0, 0, 1, 1], [], []>} : vector<16x32xbf16>, vector<32x96xbf16>, vector<16x96xf32> -> vector<16x96xf32>
    %42 = vector.extract_strided_slice %0 {offsets = [2, 0], sizes = [1, 96], strides = [1, 1]} : vector<21x96xf32> to vector<1x96xf32>
    %43 = vector.broadcast %42 : vector<1x96xf32> to vector<16x96xf32>
    %44 = arith.addf %41, %43 : vector<16x96xf32>
    %45 = vector.shape_cast %44 : vector<16x96xf32> to vector<2x8x96xf32>
    %46 = vector.extract_strided_slice %45 {offsets = [0, 0, 0], sizes = [2, 8, 8], strides = [1, 1, 1]} : vector<2x8x96xf32> to vector<2x8x8xf32>
    %47 = vector.extract_strided_slice %45 {offsets = [0, 0, 8], sizes = [2, 8, 8], strides = [1, 1, 1]} : vector<2x8x96xf32> to vector<2x8x8xf32>
    %48 = vector.extract_strided_slice %45 {offsets = [0, 0, 16], sizes = [2, 8, 8], strides = [1, 1, 1]} : vector<2x8x96xf32> to vector<2x8x8xf32>
    %49 = vector.extract_strided_slice %45 {offsets = [0, 0, 24], sizes = [2, 8, 8], strides = [1, 1, 1]} : vector<2x8x96xf32> to vector<2x8x8xf32>
    %50 = vector.shape_cast %46 : vector<2x8x8xf32> to vector<1x2x8x8xf32>
    %51 = vector.shape_cast %47 : vector<2x8x8xf32> to vector<1x2x8x8xf32>
    %52 = vector.shape_cast %48 : vector<2x8x8xf32> to vector<1x2x8x8xf32>
    %53 = vector.shape_cast %49 : vector<2x8x8xf32> to vector<1x2x8x8xf32>
    %54 = tpu.concatenate %50, %51, %52, %53 in 0 : vector<1x2x8x8xf32>, vector<1x2x8x8xf32>, vector<1x2x8x8xf32>, vector<1x2x8x8xf32> -> vector<4x2x8x8xf32>
    %55 = vector.shape_cast %54 : vector<4x2x8x8xf32> to vector<8x8x8xf32>
    %56 = vector.extract_strided_slice %45 {offsets = [0, 0, 32], sizes = [2, 8, 8], strides = [1, 1, 1]} : vector<2x8x96xf32> to vector<2x8x8xf32>
    %57 = vector.extract_strided_slice %45 {offsets = [0, 0, 40], sizes = [2, 8, 8], strides = [1, 1, 1]} : vector<2x8x96xf32> to vector<2x8x8xf32>
    %58 = vector.extract_strided_slice %45 {offsets = [0, 0, 48], sizes = [2, 8, 8], strides = [1, 1, 1]} : vector<2x8x96xf32> to vector<2x8x8xf32>
    %59 = vector.extract_strided_slice %45 {offsets = [0, 0, 56], sizes = [2, 8, 8], strides = [1, 1, 1]} : vector<2x8x96xf32> to vector<2x8x8xf32>
    %60 = vector.shape_cast %56 : vector<2x8x8xf32> to vector<1x2x8x8xf32>
    %61 = vector.shape_cast %57 : vector<2x8x8xf32> to vector<1x2x8x8xf32>
    %62 = vector.shape_cast %58 : vector<2x8x8xf32> to vector<1x2x8x8xf32>
    %63 = vector.shape_cast %59 : vector<2x8x8xf32> to vector<1x2x8x8xf32>
    %64 = tpu.concatenate %60, %61, %62, %63 in 0 : vector<1x2x8x8xf32>, vector<1x2x8x8xf32>, vector<1x2x8x8xf32>, vector<1x2x8x8xf32> -> vector<4x2x8x8xf32>
    %65 = vector.shape_cast %64 : vector<4x2x8x8xf32> to vector<8x8x8xf32>
    %66 = vector.extract_strided_slice %45 {offsets = [0, 0, 64], sizes = [2, 8, 8], strides = [1, 1, 1]} : vector<2x8x96xf32> to vector<2x8x8xf32>
    %67 = vector.extract_strided_slice %45 {offsets = [0, 0, 72], sizes = [2, 8, 8], strides = [1, 1, 1]} : vector<2x8x96xf32> to vector<2x8x8xf32>
    %68 = vector.extract_strided_slice %45 {offsets = [0, 0, 80], sizes = [2, 8, 8], strides = [1, 1, 1]} : vector<2x8x96xf32> to vector<2x8x8xf32>
    %69 = vector.extract_strided_slice %45 {offsets = [0, 0, 88], sizes = [2, 8, 8], strides = [1, 1, 1]} : vector<2x8x96xf32> to vector<2x8x8xf32>
    %70 = vector.shape_cast %66 : vector<2x8x8xf32> to vector<1x2x8x8xf32>
    %71 = vector.shape_cast %67 : vector<2x8x8xf32> to vector<1x2x8x8xf32>
    %72 = vector.shape_cast %68 : vector<2x8x8xf32> to vector<1x2x8x8xf32>
    %73 = vector.shape_cast %69 : vector<2x8x8xf32> to vector<1x2x8x8xf32>
    %74 = tpu.concatenate %70, %71, %72, %73 in 0 : vector<1x2x8x8xf32>, vector<1x2x8x8xf32>, vector<1x2x8x8xf32>, vector<1x2x8x8xf32> -> vector<4x2x8x8xf32>
    %75 = vector.shape_cast %74 : vector<4x2x8x8xf32> to vector<8x8x8xf32>
    %76 = arith.truncf %55 : vector<8x8x8xf32> to vector<8x8x8xbf16>
    %77 = arith.truncf %65 : vector<8x8x8xf32> to vector<8x8x8xbf16>
    %78 = arith.truncf %75 : vector<8x8x8xf32> to vector<8x8x8xbf16>
    "tpu.trace_start"() <{level = 10 : i32, message = "bqd,bkd->bqk"}> : () -> ()
    %cst_14 = arith.constant dense<0.000000e+00> : vector<8x8x8xf32>
    %79 = tpu.matmul %76, %77, %cst_14 {dimension_numbers = #tpu.dot_dimension_numbers<[2], [2], [1], [1], [0, 0, 0, 1, 1, 1], [0], [0]>} : vector<8x8x8xbf16>, vector<8x8x8xbf16>, vector<8x8x8xf32> -> vector<8x8x8xf32>
    "tpu.trace_stop"() : () -> ()
    %cst_15 = arith.constant 0.353553385 : f32
    %80 = vector.broadcast %cst_15 : f32 to vector<8x8x8xf32>
    %81 = arith.mulf %79, %80 : vector<8x8x8xf32>
    %cst_16 = arith.constant dense<0xFF800000> : vector<8x8xf32>
    %82 = vector.multi_reduction <maximumf>, %81, %cst_16 [2] : vector<8x8x8xf32> to vector<8x8xf32>
    %83 = vector.shape_cast %82 : vector<8x8xf32> to vector<8x8x1xf32>
    %84 = vector.broadcast %83 : vector<8x8x1xf32> to vector<8x8x8xf32>
    %85 = arith.subf %81, %84 : vector<8x8x8xf32>
    %86 = math.exp %85 : vector<8x8x8xf32>
    %cst_17 = arith.constant dense<0.000000e+00> : vector<8x8xf32>
    %87 = vector.multi_reduction <add>, %86, %cst_17 [2] : vector<8x8x8xf32> to vector<8x8xf32>
    %88 = vector.shape_cast %87 : vector<8x8xf32> to vector<8x8x1xf32>
    %89 = vector.broadcast %88 : vector<8x8x1xf32> to vector<8x8x8xf32>
    %90 = arith.divf %86, %89 : vector<8x8x8xf32>
    %91 = arith.truncf %90 : vector<8x8x8xf32> to vector<8x8x8xbf16>
    "tpu.trace_start"() <{level = 10 : i32, message = "bqk,bkd->bqd"}> : () -> ()
    %cst_18 = arith.constant dense<0.000000e+00> : vector<8x8x8xf32>
    %92 = tpu.matmul %91, %78, %cst_18 {dimension_numbers = #tpu.dot_dimension_numbers<[2], [1], [1], [2], [0, 0, 0, 1, 1, 2], [0], [0]>} : vector<8x8x8xbf16>, vector<8x8x8xbf16>, vector<8x8x8xf32> -> vector<8x8x8xf32>
    "tpu.trace_stop"() : () -> ()
    %93 = vector.shape_cast %92 : vector<8x8x8xf32> to vector<4x2x8x8xf32>
    %94 = vector.extract_strided_slice %93 {offsets = [0, 0, 0, 0], sizes = [1, 2, 8, 8], strides = [1, 1, 1, 1]} : vector<4x2x8x8xf32> to vector<1x2x8x8xf32>
    %95 = vector.shape_cast %94 : vector<1x2x8x8xf32> to vector<2x8x8xf32>
    %96 = vector.extract_strided_slice %93 {offsets = [1, 0, 0, 0], sizes = [1, 2, 8, 8], strides = [1, 1, 1, 1]} : vector<4x2x8x8xf32> to vector<1x2x8x8xf32>
    %97 = vector.shape_cast %96 : vector<1x2x8x8xf32> to vector<2x8x8xf32>
    %98 = vector.extract_strided_slice %93 {offsets = [2, 0, 0, 0], sizes = [1, 2, 8, 8], strides = [1, 1, 1, 1]} : vector<4x2x8x8xf32> to vector<1x2x8x8xf32>
    %99 = vector.shape_cast %98 : vector<1x2x8x8xf32> to vector<2x8x8xf32>
    %100 = vector.extract_strided_slice %93 {offsets = [3, 0, 0, 0], sizes = [1, 2, 8, 8], strides = [1, 1, 1, 1]} : vector<4x2x8x8xf32> to vector<1x2x8x8xf32>
    %101 = vector.shape_cast %100 : vector<1x2x8x8xf32> to vector<2x8x8xf32>
    %102 = tpu.concatenate %95, %97, %99, %101 in 2 : vector<2x8x8xf32>, vector<2x8x8xf32>, vector<2x8x8xf32>, vector<2x8x8xf32> -> vector<2x8x32xf32>
    %103 = vector.shape_cast %102 : vector<2x8x32xf32> to vector<16x32xf32>
    %104 = arith.truncf %103 : vector<16x32xf32> to vector<16x32xbf16>
    %105 = vector.extract_strided_slice %16 {offsets = [0, 96], sizes = [32, 32], strides = [1, 1]} : vector<32x192xbf16> to vector<32x32xbf16>
    %cst_19 = arith.constant dense<0.000000e+00> : vector<16x32xf32>
    %106 = tpu.matmul %104, %105, %cst_19 {dimension_numbers = #tpu.dot_dimension_numbers<[1], [0], [0], [1], [0, 0, 1, 1], [], []>} : vector<16x32xbf16>, vector<32x32xbf16>, vector<16x32xf32> -> vector<16x32xf32>
    %107 = arith.addf %14, %106 : vector<16x32xf32>
    %108 = vector.extract_strided_slice %0 {offsets = [3, 0], sizes = [1, 32], strides = [1, 1]} : vector<21x96xf32> to vector<1x32xf32>
    %109 = vector.broadcast %108 : vector<1x32xf32> to vector<16x32xf32>
    %110 = arith.addf %107, %109 : vector<16x32xf32>
    %111 = vector.extract_strided_slice %0 {offsets = [4, 0], sizes = [1, 32], strides = [1, 1]} : vector<21x96xf32> to vector<1x32xf32>
    %112 = vector.extract_strided_slice %0 {offsets = [5, 0], sizes = [1, 32], strides = [1, 1]} : vector<21x96xf32> to vector<1x32xf32>
    %cst_20 = arith.constant dense<0.000000e+00> : vector<16xf32>
    %113 = vector.multi_reduction <add>, %110, %cst_20 [1] : vector<16x32xf32> to vector<16xf32>
    %114 = vector.shape_cast %113 : vector<16xf32> to vector<16x1xf32>
    %cst_21 = arith.constant 3.200000e+01 : f32
    %115 = vector.broadcast %cst_21 : f32 to vector<16x1xf32>
    %116 = arith.divf %114, %115 : vector<16x1xf32>
    %117 = vector.broadcast %116 : vector<16x1xf32> to vector<16x32xf32>
    %118 = arith.subf %110, %117 : vector<16x32xf32>
    %119 = arith.mulf %118, %118 : vector<16x32xf32>
    %cst_22 = arith.constant dense<0.000000e+00> : vector<16xf32>
    %120 = vector.multi_reduction <add>, %119, %cst_22 [1] : vector<16x32xf32> to vector<16xf32>
    %121 = vector.shape_cast %120 : vector<16xf32> to vector<16x1xf32>
    %cst_23 = arith.constant 3.200000e+01 : f32
    %122 = vector.broadcast %cst_23 : f32 to vector<16x1xf32>
    %123 = arith.divf %121, %122 : vector<16x1xf32>
    %cst_24 = arith.constant 9.99999974E-6 : f32
    %124 = vector.broadcast %cst_24 : f32 to vector<16x1xf32>
    %125 = arith.addf %123, %124 : vector<16x1xf32>
    %126 = math.rsqrt %125 : vector<16x1xf32>
    %127 = vector.broadcast %126 : vector<16x1xf32> to vector<16x32xf32>
    %128 = arith.mulf %118, %127 : vector<16x32xf32>
    %129 = vector.broadcast %111 : vector<1x32xf32> to vector<16x32xf32>
    %130 = arith.mulf %128, %129 : vector<16x32xf32>
    %131 = vector.broadcast %112 : vector<1x32xf32> to vector<16x32xf32>
    %132 = arith.addf %130, %131 : vector<16x32xf32>
    %133 = arith.truncf %132 : vector<16x32xf32> to vector<16x32xbf16>
    %134 = vector.extract_strided_slice %16 {offsets = [0, 128], sizes = [32, 64], strides = [1, 1]} : vector<32x192xbf16> to vector<32x64xbf16>
    %cst_25 = arith.constant dense<0.000000e+00> : vector<16x64xf32>
    %135 = tpu.matmul %133, %134, %cst_25 {dimension_numbers = #tpu.dot_dimension_numbers<[1], [0], [0], [1], [0, 0, 1, 1], [], []>} : vector<16x32xbf16>, vector<32x64xbf16>, vector<16x64xf32> -> vector<16x64xf32>
    %136 = vector.extract_strided_slice %0 {offsets = [6, 0], sizes = [1, 64], strides = [1, 1]} : vector<21x96xf32> to vector<1x64xf32>
    %137 = vector.broadcast %136 : vector<1x64xf32> to vector<16x64xf32>
    %138 = arith.addf %135, %137 : vector<16x64xf32>
    %cst_26 = arith.constant 0.000000e+00 : f32
    %139 = vector.broadcast %cst_26 : f32 to vector<16x64xf32>
    %140 = arith.maximumf %138, %139 : vector<16x64xf32>
    %141 = arith.truncf %140 : vector<16x64xf32> to vector<16x64xbf16>
    %c0_27 = arith.constant 0 : index
    %c0_28 = arith.constant 0 : index
    %c0_29 = arith.constant 0 : index
    %142 = vector.load %arg3[%c0_27, %c0_28, %c0_29] : memref<2x64x32xbf16, #tpu.memory_space<vmem>>, vector<1x64x32xbf16>
    %143 = vector.shape_cast %142 : vector<1x64x32xbf16> to vector<64x32xbf16>
    %cst_30 = arith.constant dense<0.000000e+00> : vector<16x32xf32>
    %144 = tpu.matmul %141, %143, %cst_30 {dimension_numbers = #tpu.dot_dimension_numbers<[1], [0], [0], [1], [0, 0, 1, 1], [], []>} : vector<16x64xbf16>, vector<64x32xbf16>, vector<16x32xf32> -> vector<16x32xf32>
    %145 = arith.addf %110, %144 : vector<16x32xf32>
    %146 = vector.extract_strided_slice %0 {offsets = [7, 0], sizes = [1, 32], strides = [1, 1]} : vector<21x96xf32> to vector<1x32xf32>
    %147 = vector.broadcast %146 : vector<1x32xf32> to vector<16x32xf32>
    %148 = arith.addf %145, %147 : vector<16x32xf32>
    %c1 = arith.constant 1 : index
    %c0_31 = arith.constant 0 : index
    %c0_32 = arith.constant 0 : index
    %149 = vector.load %arg2[%c1, %c0_31, %c0_32] : memref<2x32x192xbf16, #tpu.memory_space<vmem>>, vector<1x32x192xbf16>
    %150 = vector.shape_cast %149 : vector<1x32x192xbf16> to vector<32x192xbf16>
    %151 = vector.extract_strided_slice %0 {offsets = [8, 0], sizes = [1, 32], strides = [1, 1]} : vector<21x96xf32> to vector<1x32xf32>
    %152 = vector.extract_strided_slice %0 {offsets = [9, 0], sizes = [1, 32], strides = [1, 1]} : vector<21x96xf32> to vector<1x32xf32>
    %cst_33 = arith.constant dense<0.000000e+00> : vector<16xf32>
    %153 = vector.multi_reduction <add>, %148, %cst_33 [1] : vector<16x32xf32> to vector<16xf32>
    %154 = vector.shape_cast %153 : vector<16xf32> to vector<16x1xf32>
    %cst_34 = arith.constant 3.200000e+01 : f32
    %155 = vector.broadcast %cst_34 : f32 to vector<16x1xf32>
    %156 = arith.divf %154, %155 : vector<16x1xf32>
    %157 = vector.broadcast %156 : vector<16x1xf32> to vector<16x32xf32>
    %158 = arith.subf %148, %157 : vector<16x32xf32>
    %159 = arith.mulf %158, %158 : vector<16x32xf32>
    %cst_35 = arith.constant dense<0.000000e+00> : vector<16xf32>
    %160 = vector.multi_reduction <add>, %159, %cst_35 [1] : vector<16x32xf32> to vector<16xf32>
    %161 = vector.shape_cast %160 : vector<16xf32> to vector<16x1xf32>
    %cst_36 = arith.constant 3.200000e+01 : f32
    %162 = vector.broadcast %cst_36 : f32 to vector<16x1xf32>
    %163 = arith.divf %161, %162 : vector<16x1xf32>
    %cst_37 = arith.constant 9.99999974E-6 : f32
    %164 = vector.broadcast %cst_37 : f32 to vector<16x1xf32>
    %165 = arith.addf %163, %164 : vector<16x1xf32>
    %166 = math.rsqrt %165 : vector<16x1xf32>
    %167 = vector.broadcast %166 : vector<16x1xf32> to vector<16x32xf32>
    %168 = arith.mulf %158, %167 : vector<16x32xf32>
    %169 = vector.broadcast %151 : vector<1x32xf32> to vector<16x32xf32>
    %170 = arith.mulf %168, %169 : vector<16x32xf32>
    %171 = vector.broadcast %152 : vector<1x32xf32> to vector<16x32xf32>
    %172 = arith.addf %170, %171 : vector<16x32xf32>
    %173 = arith.truncf %172 : vector<16x32xf32> to vector<16x32xbf16>
    %174 = vector.extract_strided_slice %150 {offsets = [0, 0], sizes = [32, 96], strides = [1, 1]} : vector<32x192xbf16> to vector<32x96xbf16>
    %cst_38 = arith.constant dense<0.000000e+00> : vector<16x96xf32>
    %175 = tpu.matmul %173, %174, %cst_38 {dimension_numbers = #tpu.dot_dimension_numbers<[1], [0], [0], [1], [0, 0, 1, 1], [], []>} : vector<16x32xbf16>, vector<32x96xbf16>, vector<16x96xf32> -> vector<16x96xf32>
    %176 = vector.extract_strided_slice %0 {offsets = [10, 0], sizes = [1, 96], strides = [1, 1]} : vector<21x96xf32> to vector<1x96xf32>
    %177 = vector.broadcast %176 : vector<1x96xf32> to vector<16x96xf32>
    %178 = arith.addf %175, %177 : vector<16x96xf32>
    %179 = vector.shape_cast %178 : vector<16x96xf32> to vector<2x8x96xf32>
    %180 = vector.extract_strided_slice %179 {offsets = [0, 0, 0], sizes = [2, 8, 8], strides = [1, 1, 1]} : vector<2x8x96xf32> to vector<2x8x8xf32>
    %181 = vector.extract_strided_slice %179 {offsets = [0, 0, 8], sizes = [2, 8, 8], strides = [1, 1, 1]} : vector<2x8x96xf32> to vector<2x8x8xf32>
    %182 = vector.extract_strided_slice %179 {offsets = [0, 0, 16], sizes = [2, 8, 8], strides = [1, 1, 1]} : vector<2x8x96xf32> to vector<2x8x8xf32>
    %183 = vector.extract_strided_slice %179 {offsets = [0, 0, 24], sizes = [2, 8, 8], strides = [1, 1, 1]} : vector<2x8x96xf32> to vector<2x8x8xf32>
    %184 = vector.shape_cast %180 : vector<2x8x8xf32> to vector<1x2x8x8xf32>
    %185 = vector.shape_cast %181 : vector<2x8x8xf32> to vector<1x2x8x8xf32>
    %186 = vector.shape_cast %182 : vector<2x8x8xf32> to vector<1x2x8x8xf32>
    %187 = vector.shape_cast %183 : vector<2x8x8xf32> to vector<1x2x8x8xf32>
    %188 = tpu.concatenate %184, %185, %186, %187 in 0 : vector<1x2x8x8xf32>, vector<1x2x8x8xf32>, vector<1x2x8x8xf32>, vector<1x2x8x8xf32> -> vector<4x2x8x8xf32>
    %189 = vector.shape_cast %188 : vector<4x2x8x8xf32> to vector<8x8x8xf32>
    %190 = vector.extract_strided_slice %179 {offsets = [0, 0, 32], sizes = [2, 8, 8], strides = [1, 1, 1]} : vector<2x8x96xf32> to vector<2x8x8xf32>
    %191 = vector.extract_strided_slice %179 {offsets = [0, 0, 40], sizes = [2, 8, 8], strides = [1, 1, 1]} : vector<2x8x96xf32> to vector<2x8x8xf32>
    %192 = vector.extract_strided_slice %179 {offsets = [0, 0, 48], sizes = [2, 8, 8], strides = [1, 1, 1]} : vector<2x8x96xf32> to vector<2x8x8xf32>
    %193 = vector.extract_strided_slice %179 {offsets = [0, 0, 56], sizes = [2, 8, 8], strides = [1, 1, 1]} : vector<2x8x96xf32> to vector<2x8x8xf32>
    %194 = vector.shape_cast %190 : vector<2x8x8xf32> to vector<1x2x8x8xf32>
    %195 = vector.shape_cast %191 : vector<2x8x8xf32> to vector<1x2x8x8xf32>
    %196 = vector.shape_cast %192 : vector<2x8x8xf32> to vector<1x2x8x8xf32>
    %197 = vector.shape_cast %193 : vector<2x8x8xf32> to vector<1x2x8x8xf32>
    %198 = tpu.concatenate %194, %195, %196, %197 in 0 : vector<1x2x8x8xf32>, vector<1x2x8x8xf32>, vector<1x2x8x8xf32>, vector<1x2x8x8xf32> -> vector<4x2x8x8xf32>
    %199 = vector.shape_cast %198 : vector<4x2x8x8xf32> to vector<8x8x8xf32>
    %200 = vector.extract_strided_slice %179 {offsets = [0, 0, 64], sizes = [2, 8, 8], strides = [1, 1, 1]} : vector<2x8x96xf32> to vector<2x8x8xf32>
    %201 = vector.extract_strided_slice %179 {offsets = [0, 0, 72], sizes = [2, 8, 8], strides = [1, 1, 1]} : vector<2x8x96xf32> to vector<2x8x8xf32>
    %202 = vector.extract_strided_slice %179 {offsets = [0, 0, 80], sizes = [2, 8, 8], strides = [1, 1, 1]} : vector<2x8x96xf32> to vector<2x8x8xf32>
    %203 = vector.extract_strided_slice %179 {offsets = [0, 0, 88], sizes = [2, 8, 8], strides = [1, 1, 1]} : vector<2x8x96xf32> to vector<2x8x8xf32>
    %204 = vector.shape_cast %200 : vector<2x8x8xf32> to vector<1x2x8x8xf32>
    %205 = vector.shape_cast %201 : vector<2x8x8xf32> to vector<1x2x8x8xf32>
    %206 = vector.shape_cast %202 : vector<2x8x8xf32> to vector<1x2x8x8xf32>
    %207 = vector.shape_cast %203 : vector<2x8x8xf32> to vector<1x2x8x8xf32>
    %208 = tpu.concatenate %204, %205, %206, %207 in 0 : vector<1x2x8x8xf32>, vector<1x2x8x8xf32>, vector<1x2x8x8xf32>, vector<1x2x8x8xf32> -> vector<4x2x8x8xf32>
    %209 = vector.shape_cast %208 : vector<4x2x8x8xf32> to vector<8x8x8xf32>
    %210 = arith.truncf %189 : vector<8x8x8xf32> to vector<8x8x8xbf16>
    %211 = arith.truncf %199 : vector<8x8x8xf32> to vector<8x8x8xbf16>
    %212 = arith.truncf %209 : vector<8x8x8xf32> to vector<8x8x8xbf16>
    "tpu.trace_start"() <{level = 10 : i32, message = "bqd,bkd->bqk"}> : () -> ()
    %cst_39 = arith.constant dense<0.000000e+00> : vector<8x8x8xf32>
    %213 = tpu.matmul %210, %211, %cst_39 {dimension_numbers = #tpu.dot_dimension_numbers<[2], [2], [1], [1], [0, 0, 0, 1, 1, 1], [0], [0]>} : vector<8x8x8xbf16>, vector<8x8x8xbf16>, vector<8x8x8xf32> -> vector<8x8x8xf32>
    "tpu.trace_stop"() : () -> ()
    %cst_40 = arith.constant 0.353553385 : f32
    %214 = vector.broadcast %cst_40 : f32 to vector<8x8x8xf32>
    %215 = arith.mulf %213, %214 : vector<8x8x8xf32>
    %cst_41 = arith.constant dense<0xFF800000> : vector<8x8xf32>
    %216 = vector.multi_reduction <maximumf>, %215, %cst_41 [2] : vector<8x8x8xf32> to vector<8x8xf32>
    %217 = vector.shape_cast %216 : vector<8x8xf32> to vector<8x8x1xf32>
    %218 = vector.broadcast %217 : vector<8x8x1xf32> to vector<8x8x8xf32>
    %219 = arith.subf %215, %218 : vector<8x8x8xf32>
    %220 = math.exp %219 : vector<8x8x8xf32>
    %cst_42 = arith.constant dense<0.000000e+00> : vector<8x8xf32>
    %221 = vector.multi_reduction <add>, %220, %cst_42 [2] : vector<8x8x8xf32> to vector<8x8xf32>
    %222 = vector.shape_cast %221 : vector<8x8xf32> to vector<8x8x1xf32>
    %223 = vector.broadcast %222 : vector<8x8x1xf32> to vector<8x8x8xf32>
    %224 = arith.divf %220, %223 : vector<8x8x8xf32>
    %225 = arith.truncf %224 : vector<8x8x8xf32> to vector<8x8x8xbf16>
    "tpu.trace_start"() <{level = 10 : i32, message = "bqk,bkd->bqd"}> : () -> ()
    %cst_43 = arith.constant dense<0.000000e+00> : vector<8x8x8xf32>
    %226 = tpu.matmul %225, %212, %cst_43 {dimension_numbers = #tpu.dot_dimension_numbers<[2], [1], [1], [2], [0, 0, 0, 1, 1, 2], [0], [0]>} : vector<8x8x8xbf16>, vector<8x8x8xbf16>, vector<8x8x8xf32> -> vector<8x8x8xf32>
    "tpu.trace_stop"() : () -> ()
    %227 = vector.shape_cast %226 : vector<8x8x8xf32> to vector<4x2x8x8xf32>
    %228 = vector.extract_strided_slice %227 {offsets = [0, 0, 0, 0], sizes = [1, 2, 8, 8], strides = [1, 1, 1, 1]} : vector<4x2x8x8xf32> to vector<1x2x8x8xf32>
    %229 = vector.shape_cast %228 : vector<1x2x8x8xf32> to vector<2x8x8xf32>
    %230 = vector.extract_strided_slice %227 {offsets = [1, 0, 0, 0], sizes = [1, 2, 8, 8], strides = [1, 1, 1, 1]} : vector<4x2x8x8xf32> to vector<1x2x8x8xf32>
    %231 = vector.shape_cast %230 : vector<1x2x8x8xf32> to vector<2x8x8xf32>
    %232 = vector.extract_strided_slice %227 {offsets = [2, 0, 0, 0], sizes = [1, 2, 8, 8], strides = [1, 1, 1, 1]} : vector<4x2x8x8xf32> to vector<1x2x8x8xf32>
    %233 = vector.shape_cast %232 : vector<1x2x8x8xf32> to vector<2x8x8xf32>
    %234 = vector.extract_strided_slice %227 {offsets = [3, 0, 0, 0], sizes = [1, 2, 8, 8], strides = [1, 1, 1, 1]} : vector<4x2x8x8xf32> to vector<1x2x8x8xf32>
    %235 = vector.shape_cast %234 : vector<1x2x8x8xf32> to vector<2x8x8xf32>
    %236 = tpu.concatenate %229, %231, %233, %235 in 2 : vector<2x8x8xf32>, vector<2x8x8xf32>, vector<2x8x8xf32>, vector<2x8x8xf32> -> vector<2x8x32xf32>
    %237 = vector.shape_cast %236 : vector<2x8x32xf32> to vector<16x32xf32>
    %238 = arith.truncf %237 : vector<16x32xf32> to vector<16x32xbf16>
    %239 = vector.extract_strided_slice %150 {offsets = [0, 96], sizes = [32, 32], strides = [1, 1]} : vector<32x192xbf16> to vector<32x32xbf16>
    %cst_44 = arith.constant dense<0.000000e+00> : vector<16x32xf32>
    %240 = tpu.matmul %238, %239, %cst_44 {dimension_numbers = #tpu.dot_dimension_numbers<[1], [0], [0], [1], [0, 0, 1, 1], [], []>} : vector<16x32xbf16>, vector<32x32xbf16>, vector<16x32xf32> -> vector<16x32xf32>
    %241 = arith.addf %148, %240 : vector<16x32xf32>
    %242 = vector.extract_strided_slice %0 {offsets = [11, 0], sizes = [1, 32], strides = [1, 1]} : vector<21x96xf32> to vector<1x32xf32>
    %243 = vector.broadcast %242 : vector<1x32xf32> to vector<16x32xf32>
    %244 = arith.addf %241, %243 : vector<16x32xf32>
    %245 = vector.extract_strided_slice %0 {offsets = [12, 0], sizes = [1, 32], strides = [1, 1]} : vector<21x96xf32> to vector<1x32xf32>
    %246 = vector.extract_strided_slice %0 {offsets = [13, 0], sizes = [1, 32], strides = [1, 1]} : vector<21x96xf32> to vector<1x32xf32>
    %cst_45 = arith.constant dense<0.000000e+00> : vector<16xf32>
    %247 = vector.multi_reduction <add>, %244, %cst_45 [1] : vector<16x32xf32> to vector<16xf32>
    %248 = vector.shape_cast %247 : vector<16xf32> to vector<16x1xf32>
    %cst_46 = arith.constant 3.200000e+01 : f32
    %249 = vector.broadcast %cst_46 : f32 to vector<16x1xf32>
    %250 = arith.divf %248, %249 : vector<16x1xf32>
    %251 = vector.broadcast %250 : vector<16x1xf32> to vector<16x32xf32>
    %252 = arith.subf %244, %251 : vector<16x32xf32>
    %253 = arith.mulf %252, %252 : vector<16x32xf32>
    %cst_47 = arith.constant dense<0.000000e+00> : vector<16xf32>
    %254 = vector.multi_reduction <add>, %253, %cst_47 [1] : vector<16x32xf32> to vector<16xf32>
    %255 = vector.shape_cast %254 : vector<16xf32> to vector<16x1xf32>
    %cst_48 = arith.constant 3.200000e+01 : f32
    %256 = vector.broadcast %cst_48 : f32 to vector<16x1xf32>
    %257 = arith.divf %255, %256 : vector<16x1xf32>
    %cst_49 = arith.constant 9.99999974E-6 : f32
    %258 = vector.broadcast %cst_49 : f32 to vector<16x1xf32>
    %259 = arith.addf %257, %258 : vector<16x1xf32>
    %260 = math.rsqrt %259 : vector<16x1xf32>
    %261 = vector.broadcast %260 : vector<16x1xf32> to vector<16x32xf32>
    %262 = arith.mulf %252, %261 : vector<16x32xf32>
    %263 = vector.broadcast %245 : vector<1x32xf32> to vector<16x32xf32>
    %264 = arith.mulf %262, %263 : vector<16x32xf32>
    %265 = vector.broadcast %246 : vector<1x32xf32> to vector<16x32xf32>
    %266 = arith.addf %264, %265 : vector<16x32xf32>
    %267 = arith.truncf %266 : vector<16x32xf32> to vector<16x32xbf16>
    %268 = vector.extract_strided_slice %150 {offsets = [0, 128], sizes = [32, 64], strides = [1, 1]} : vector<32x192xbf16> to vector<32x64xbf16>
    %cst_50 = arith.constant dense<0.000000e+00> : vector<16x64xf32>
    %269 = tpu.matmul %267, %268, %cst_50 {dimension_numbers = #tpu.dot_dimension_numbers<[1], [0], [0], [1], [0, 0, 1, 1], [], []>} : vector<16x32xbf16>, vector<32x64xbf16>, vector<16x64xf32> -> vector<16x64xf32>
    %270 = vector.extract_strided_slice %0 {offsets = [14, 0], sizes = [1, 64], strides = [1, 1]} : vector<21x96xf32> to vector<1x64xf32>
    %271 = vector.broadcast %270 : vector<1x64xf32> to vector<16x64xf32>
    %272 = arith.addf %269, %271 : vector<16x64xf32>
    %cst_51 = arith.constant 0.000000e+00 : f32
    %273 = vector.broadcast %cst_51 : f32 to vector<16x64xf32>
    %274 = arith.maximumf %272, %273 : vector<16x64xf32>
    %275 = arith.truncf %274 : vector<16x64xf32> to vector<16x64xbf16>
    %c1_52 = arith.constant 1 : index
    %c0_53 = arith.constant 0 : index
    %c0_54 = arith.constant 0 : index
    %276 = vector.load %arg3[%c1_52, %c0_53, %c0_54] : memref<2x64x32xbf16, #tpu.memory_space<vmem>>, vector<1x64x32xbf16>
    %277 = vector.shape_cast %276 : vector<1x64x32xbf16> to vector<64x32xbf16>
    %cst_55 = arith.constant dense<0.000000e+00> : vector<16x32xf32>
    %278 = tpu.matmul %275, %277, %cst_55 {dimension_numbers = #tpu.dot_dimension_numbers<[1], [0], [0], [1], [0, 0, 1, 1], [], []>} : vector<16x64xbf16>, vector<64x32xbf16>, vector<16x32xf32> -> vector<16x32xf32>
    %279 = arith.addf %244, %278 : vector<16x32xf32>
    %280 = vector.extract_strided_slice %0 {offsets = [15, 0], sizes = [1, 32], strides = [1, 1]} : vector<21x96xf32> to vector<1x32xf32>
    %281 = vector.broadcast %280 : vector<1x32xf32> to vector<16x32xf32>
    %282 = arith.addf %279, %281 : vector<16x32xf32>
    %283 = vector.shape_cast %282 : vector<16x32xf32> to vector<2x8x32xf32>
    %cst_56 = arith.constant dense<0.000000e+00> : vector<2x32xf32>
    %284 = vector.multi_reduction <add>, %283, %cst_56 [1] : vector<2x8x32xf32> to vector<2x32xf32>
    %cst_57 = arith.constant 8.000000e+00 : f32
    %285 = vector.broadcast %cst_57 : f32 to vector<2x32xf32>
    %286 = arith.divf %284, %285 : vector<2x32xf32>
    %287 = arith.truncf %286 : vector<2x32xf32> to vector<2x32xbf16>
    %c0_58 = arith.constant 0 : index
    %c0_59 = arith.constant 0 : index
    %288 = vector.load %arg4[%c0_58, %c0_59] : memref<32x16xbf16, #tpu.memory_space<vmem>>, vector<32x16xbf16>
    %cst_60 = arith.constant dense<0.000000e+00> : vector<2x16xf32>
    %289 = tpu.matmul %287, %288, %cst_60 {dimension_numbers = #tpu.dot_dimension_numbers<[1], [0], [0], [1], [0, 0, 1, 1], [], []>} : vector<2x32xbf16>, vector<32x16xbf16>, vector<2x16xf32> -> vector<2x16xf32>
    %290 = vector.extract_strided_slice %0 {offsets = [16, 0], sizes = [1, 16], strides = [1, 1]} : vector<21x96xf32> to vector<1x16xf32>
    %291 = vector.broadcast %290 : vector<1x16xf32> to vector<2x16xf32>
    %292 = arith.addf %289, %291 : vector<2x16xf32>
    %293 = vector.extract_strided_slice %0 {offsets = [17, 0], sizes = [1, 16], strides = [1, 1]} : vector<21x96xf32> to vector<1x16xf32>
    %294 = vector.extract_strided_slice %0 {offsets = [18, 0], sizes = [1, 16], strides = [1, 1]} : vector<21x96xf32> to vector<1x16xf32>
    %cst_61 = arith.constant dense<0.000000e+00> : vector<2xf32>
    %295 = vector.multi_reduction <add>, %292, %cst_61 [1] : vector<2x16xf32> to vector<2xf32>
    %296 = vector.shape_cast %295 : vector<2xf32> to vector<2x1xf32>
    %cst_62 = arith.constant 1.600000e+01 : f32
    %297 = vector.broadcast %cst_62 : f32 to vector<2x1xf32>
    %298 = arith.divf %296, %297 : vector<2x1xf32>
    %299 = vector.broadcast %298 : vector<2x1xf32> to vector<2x16xf32>
    %300 = arith.subf %292, %299 : vector<2x16xf32>
    %301 = arith.mulf %300, %300 : vector<2x16xf32>
    %cst_63 = arith.constant dense<0.000000e+00> : vector<2xf32>
    %302 = vector.multi_reduction <add>, %301, %cst_63 [1] : vector<2x16xf32> to vector<2xf32>
    %303 = vector.shape_cast %302 : vector<2xf32> to vector<2x1xf32>
    %cst_64 = arith.constant 1.600000e+01 : f32
    %304 = vector.broadcast %cst_64 : f32 to vector<2x1xf32>
    %305 = arith.divf %303, %304 : vector<2x1xf32>
    %cst_65 = arith.constant 9.99999974E-6 : f32
    %306 = vector.broadcast %cst_65 : f32 to vector<2x1xf32>
    %307 = arith.addf %305, %306 : vector<2x1xf32>
    %308 = math.rsqrt %307 : vector<2x1xf32>
    %309 = vector.broadcast %308 : vector<2x1xf32> to vector<2x16xf32>
    %310 = arith.mulf %300, %309 : vector<2x16xf32>
    %311 = vector.broadcast %293 : vector<1x16xf32> to vector<2x16xf32>
    %312 = arith.mulf %310, %311 : vector<2x16xf32>
    %313 = vector.broadcast %294 : vector<1x16xf32> to vector<2x16xf32>
    %314 = arith.addf %312, %313 : vector<2x16xf32>
    %315 = vector.extract_strided_slice %0 {offsets = [19, 0], sizes = [1, 16], strides = [1, 1]} : vector<21x96xf32> to vector<1x16xf32>
    %316 = vector.extract_strided_slice %0 {offsets = [20, 0], sizes = [1, 16], strides = [1, 1]} : vector<21x96xf32> to vector<1x16xf32>
    %cst_66 = arith.constant dense<0.000000e+00> : vector<2xf32>
    %317 = vector.multi_reduction <add>, %314, %cst_66 [1] : vector<2x16xf32> to vector<2xf32>
    %318 = vector.shape_cast %317 : vector<2xf32> to vector<2x1xf32>
    %cst_67 = arith.constant 1.600000e+01 : f32
    %319 = vector.broadcast %cst_67 : f32 to vector<2x1xf32>
    %320 = arith.divf %318, %319 : vector<2x1xf32>
    %321 = vector.broadcast %320 : vector<2x1xf32> to vector<2x16xf32>
    %322 = arith.subf %314, %321 : vector<2x16xf32>
    %323 = arith.mulf %322, %322 : vector<2x16xf32>
    %cst_68 = arith.constant dense<0.000000e+00> : vector<2xf32>
    %324 = vector.multi_reduction <add>, %323, %cst_68 [1] : vector<2x16xf32> to vector<2xf32>
    %325 = vector.shape_cast %324 : vector<2xf32> to vector<2x1xf32>
    %cst_69 = arith.constant 1.600000e+01 : f32
    %326 = vector.broadcast %cst_69 : f32 to vector<2x1xf32>
    %327 = arith.divf %325, %326 : vector<2x1xf32>
    %cst_70 = arith.constant 9.99999974E-6 : f32
    %328 = vector.broadcast %cst_70 : f32 to vector<2x1xf32>
    %329 = arith.addf %327, %328 : vector<2x1xf32>
    %330 = math.rsqrt %329 : vector<2x1xf32>
    %331 = vector.broadcast %330 : vector<2x1xf32> to vector<2x16xf32>
    %332 = arith.mulf %322, %331 : vector<2x16xf32>
    %333 = vector.broadcast %315 : vector<1x16xf32> to vector<2x16xf32>
    %334 = arith.mulf %332, %333 : vector<2x16xf32>
    %335 = vector.broadcast %316 : vector<1x16xf32> to vector<2x16xf32>
    %336 = arith.addf %334, %335 : vector<2x16xf32>
    %337 = arith.truncf %336 : vector<2x16xf32> to vector<2x16xbf16>
    %c0_71 = arith.constant 0 : index
    %c0_72 = arith.constant 0 : index
    %338 = vector.load %arg6[%c0_71, %c0_72] : memref<2x16xbf16, #tpu.memory_space<vmem>>, vector<2x16xbf16>
    tpu.vector_store %arg6[%c0_71, %c0_72], %337 {strides = array<i32>} : memref<2x16xbf16, #tpu.memory_space<vmem>>, vector<2x16xbf16>,
    return
  }
}

</mosaic_0001>

<llo_original>
// kernel: tile.8
$region0: #{tile.8}
  #allocation0 [shape = 's32[1]{0}', space=sflag, size = 0x4, scoped, tag = 'scoped memory for tile.8']
  %s0 = inlined_call_operand.vmem [shape: s32[8], index: 0, kind: input, shape index: {}]
  %s1 = inlined_call_operand.vmem [shape: s32[2,8], index: 1, kind: output, shape index: {}]
  // Predicated region
  $region2: #{tile.8} parent=0 // pred_check
    _
  $region3: #{tile.8} parent=0 // pred_check_branch
    %3 = sbr.rel (0) target = $region5
  $region4: #{tile.8} parent=0 // pred_region
    _
  $region5: #{tile.8} parent=0 // pred_fallthru
    _
  %v4 = vld [vmem:[%s0] ss:$0 sm:$0xff]
  %5 = vst [vmem:[%s1] sm:$0x3] %v4

// kernel: tile.9
$region0: #{tile.9}
  %s0 = inlined_call_operand.vmem [shape: s32[2,8], index: 0, kind: input, shape index: {}]
  %s1 = inlined_call_operand.vmem [shape: s32[16,1], index: 1, kind: output, shape index: {}]
  $region1: #{tile.9} parent=0
    #allocation0 [shape = 'u8[4096]{0}', space=vmem, size = 0x1000, scoped, tag = 'scoped mem for output reshape']
    #allocation1 [shape = 'u8[4096]{0}', space=vmem, size = 0x1000, scoped, tag = 'scoped mem for input reshape']
    %s3 = sshllo.u32 0, 2
    %v4 = vld [vmem:[%s0] sm:%s3]
    %5 = vst [vmem:[#allocation1] sm:%s3] %v4
    %v6 = vld [vmem:[#allocation1] sm:$0x1]
    %vm7 = vcmask 64512
    %8 = vst.msk [vmem:[#allocation0] sm:$0x1] %vm7, %v6
    %s9 = scalar_lea.vmem [#allocation1], 1
    %v10 = vld [vmem:[%s9] sm:$0x1]
    %11 = vrot.lane.b32.xlu0 %v10, 8
    %v12 = vpop.permute.xlu0 %11
    %vm13 = vcmask 130112
    %14 = vst.msk [vmem:[#allocation0] sm:$0x1] %vm13, %v12
    %s16 = sshllo.u32 0, 1
    %v18 = vld [vmem:[#allocation0] sm:%s16]
    %s19 = sshllo.u32 0, 1
    %20 = vst [vmem:[%s1] sm:%s19] %v18

// kernel: hyper_token_encoder.1
$region0: #{hyper_token_encoder.1}
  #allocation0 [shape = 'u32[]', space=smem, size = 0x4, offset = 0x4, fixed_abs, tag = 'smem constant byte address 0x4 - core index']
  #allocation1 [shape = 'u32[144,128]{1,0:T(1,128)}', space=vmem, size = 0x12000, scoped, tag = 'internal scratch']
  %s0 = inlined_call_operand.vmem [shape: s32[16,2], index: 0, kind: input, shape index: {}]
  %s1 = inlined_call_operand.vmem [shape: bf16[72,32], index: 1, kind: input, shape index: {}]
  %s2 = inlined_call_operand.vmem [shape: bf16[2,32,192], index: 2, kind: input, shape index: {}]
  %s3 = inlined_call_operand.vmem [shape: bf16[2,64,32], index: 3, kind: input, shape index: {}]
  %s4 = inlined_call_operand.vmem [shape: bf16[32,16], index: 4, kind: input, shape index: {}]
  %s5 = inlined_call_operand.vmem [shape: f32[21,96], index: 5, kind: input, shape index: {}]
  %s6 = inlined_call_operand.hbm [shape: bf16[2,16], index: 6, kind: output, shape index: {}]
  %s7 = sld [smem:[#allocation0]]
  $region34: #{hyper_token_encoder.1} parent=0
    _
  %s9 = ssub.s32 1, %s7
  %s10 = scalar_select 0, %s9, %s7
  $region1: #{hyper_token_encoder.1} parent=0
    #allocation2 [shape = 'u8[512]{0}', space=vmem, size = 0x400, scoped, tag = 'output window, operand 0, single buffered']
    #allocation3 [shape = 's32[1]{0}', space=sflag, size = 0x4, scoped, tag = 'scoped memory for hyper_token_encoder.1']
    %11 = vsyncpa [#allocation3], 0
    // Predicated region
    $region2: #{hyper_token_encoder.1} parent=1 // pred_check
      _
    $region3: #{hyper_token_encoder.1} parent=1 // pred_check_branch
      %13 = sbr.rel (0) target = $region5
    $region4: #{hyper_token_encoder.1} parent=1 // pred_region
      _
    $region5: #{hyper_token_encoder.1} parent=1 // pred_fallthru
      _
    // Predicated region
    $region6: #{hyper_token_encoder.1} parent=1 // pred_check
      _
    $region7: #{hyper_token_encoder.1} parent=1 // pred_check_branch
      %15 = sbr.rel (0) target = $region9
    $region8: #{hyper_token_encoder.1} parent=1 // pred_region
      _
    $region9: #{hyper_token_encoder.1} parent=1 // pred_fallthru
      _
    // Predicated region
    $region10: #{hyper_token_encoder.1} parent=1 // pred_check
      _
    $region11: #{hyper_token_encoder.1} parent=1 // pred_check_branch
      %17 = sbr.rel (0) target = $region13
    $region12: #{hyper_token_encoder.1} parent=1 // pred_region
      _
    $region13: #{hyper_token_encoder.1} parent=1 // pred_fallthru
      _
    // Predicated region
    $region14: #{hyper_token_encoder.1} parent=1 // pred_check
      _
    $region15: #{hyper_token_encoder.1} parent=1 // pred_check_branch
      %19 = sbr.rel (0) target = $region17
    $region16: #{hyper_token_encoder.1} parent=1 // pred_region
      _
    $region17: #{hyper_token_encoder.1} parent=1 // pred_fallthru
      _
    // Predicated region
    $region18: #{hyper_token_encoder.1} parent=1 // pred_check
      _
    $region19: #{hyper_token_encoder.1} parent=1 // pred_check_branch
      %21 = sbr.rel (0) target = $region21
    $region20: #{hyper_token_encoder.1} parent=1 // pred_region
      _
    $region21: #{hyper_token_encoder.1} parent=1 // pred_fallthru
      _
    // Predicated region
    $region22: #{hyper_token_encoder.1} parent=1 // pred_check
      _
    $region23: #{hyper_token_encoder.1} parent=1 // pred_check_branch
      %23 = sbr.rel (0) target = $region25
    $region24: #{hyper_token_encoder.1} parent=1 // pred_region
      _
    $region25: #{hyper_token_encoder.1} parent=1 // pred_fallthru
      _
    %v25 = vld [vmem:[%s5] sm:$0xff]
    %v26 = vld [vmem:[%s5 + $0x8] sm:$0xff]
    %v27 = vld [vmem:[%s5 + $0x10] sm:$0x1f]
    %v28 = vld [vmem:[%s0] sm:$0xff]
    %v29 = vld [vmem:[%s0 + $0x8] sm:$0xff]
    %v30 = vlaneseq
    %v31 = vand.u32 %v30, 127
    %32 = vset.pattern.permute.xlu0 0
    %33 = vperm.xlu0 %32, %v28
    %v34 = vpop.permute.xlu0 %33
    %35 = vset.pattern.permute.xlu0 0
    %36 = vperm.xlu0 %35, %v29
    %v37 = vpop.permute.xlu0 %36
    %vm38 = vcmp.eq.s32.totalorder %v31, %v34
    %vm39 = vcmp.eq.s32.totalorder %v31, %v37
    %40 = vset.pattern.permute.xlu0 1
    %41 = vperm.xlu0 %40, %v28
    %v42 = vpop.permute.xlu0 %41
    %43 = vset.pattern.permute.xlu0 1
    %44 = vperm.xlu0 %43, %v29
    %v45 = vpop.permute.xlu0 %44
    %vm46 = vcmp.eq.s32.totalorder %v31, %v42
    %vm47 = vcmp.eq.s32.totalorder %v31, %v45
    %vm48 = vmor %vm38, %vm46
    %vm49 = vmor %vm39, %vm47
    %v50 = vsel %vm48, 1, 0
    %v51 = vsel %vm49, 1, 0
    %v52 = vcvt.s32.f32 %v50
    %v53 = vcvt.s32.f32 %v51
    %v54 = vpack.c.bf16 %v53, %v52
    %v55 = vld [vmem:[%s1] sm:$0xf]
    %v56 = vld [vmem:[%s1 + $0x4] sm:$0xf]
    %v57 = vld [vmem:[%s1 + $0x8] sm:$0xf]
    %v58 = vld [vmem:[%s1 + $0xc] sm:$0xf]
    %v59 = vld [vmem:[%s1 + $0x10] sm:$0xf]
    %v60 = vld [vmem:[%s1 + $0x14] sm:$0xf]
    %v61 = vld [vmem:[%s1 + $0x18] sm:$0xf]
    %v62 = vld [vmem:[%s1 + $0x1c] sm:$0xf]
    %v63 = vld [vmem:[%s1 + $0x20] sm:$0xf]
    %v73 = vunpack.c.l.b16 %v55
    %v74 = vunpack.c.l.b16 %v56
    %v75 = vunpack.c.l.b16 %v57
    %v76 = vunpack.c.l.b16 %v58
    %v77 = vunpack.c.l.b16 %v59
    %v78 = vunpack.c.l.b16 %v60
    %v79 = vunpack.c.l.b16 %v61
    %v80 = vunpack.c.l.b16 %v62
    %v81 = vunpack.c.l.b16 %v63
    %v82 = vpack.c.b16 %v74, %v73
    %v83 = vpack.c.b16 %v76, %v75
    %v84 = vpack.c.b16 %v78, %v77
    %v85 = vpack.c.b16 %v80, %v79
    %v86 = vpack.c.b16 %v81, %v81
    %vm91 = vcmask 588800
    %v93 = vsel %vm91, %v54, 0
    %vm95 = vcmask 1043456
    %v97 = vsel %vm95, %v86, 0
    %99 = vmatprep.subr.bf16.mxu0 0
    %100 = vmatpush1.bf16.msra.mxu0 %v82
    %101 = vmatprep.subr.bf16.mxu0 0
    %102 = vmatpush1.bf16.msra.mxu0 %v83
    %103 = vmatprep.subr.bf16.mxu0 0
    %104 = vmatpush1.bf16.msra.mxu0 %v84
    %105 = vmatprep.subr.bf16.mxu0 0
    %106 = vmatpush1.bf16.msra.mxu0 %v85
    %107 = vmatprep.subr.bf16.mxu0 0
    %108 = vmatpush1.bf16.msra.mxu0 %v97
    %109 = vmatprep.subr.bf16.mxu0 0
    %110 = vmatpush1.bf16.msra.mxu0 0
    %111 = vmatprep.subr.bf16.mxu0 0
    %112 = vmatpush1.bf16.msra.mxu0 0
    %113 = vmatprep.subr.bf16.mxu0 0
    %114 = vmatpush1.bf16.msra.mxu0 0
    %115 = vmatprep.subr.bf16.mxu0 0
    %116 = vmatpush1.bf16.msra.mxu0 0
    %117 = vmatprep.subr.bf16.mxu0 0
    %118 = vmatpush1.bf16.msra.mxu0 0
    %119 = vmatprep.subr.bf16.mxu0 0
    %120 = vmatpush1.bf16.msra.mxu0 0
    %121 = vmatprep.subr.bf16.mxu0 0
    %122 = vmatpush1.bf16.msra.mxu0 0
    %123 = vmatprep.subr.bf16.mxu0 0
    %124 = vmatpush1.bf16.msra.mxu0 0
    %125 = vmatprep.subr.bf16.mxu0 0
    %126 = vmatpush1.bf16.msra.mxu0 0
    %127 = vmatprep.subr.bf16.mxu0 0
    %128 = vmatpush1.bf16.msra.mxu0 0
    %129 = vmatprep.subr.bf16.mxu0 0
    %130 = vmatpush1.bf16.msra.mxu0 0
    %131 = vmatprep.mubr.bf16.mxu0 0
    %132 = vmatmul.mubr.bf16.gmra.mrb[0].mxu0 %v93
    %v133 = vpop.f32.mrb[0].mxu0
    %v134 = vadd.f32 0.0, %v133
    %v135 = vpop.f32.mrb[0].mxu0
    %v136 = vpop.f32.mrb[0].mxu0
    %v137 = vadd.f32 0.0, %v136
    %v138 = vpop.f32.mrb[0].mxu0
    %139 = vdwg.mxu0
    %v140 = vld [vmem:[%s2] sm:$0xff]
    %v141 = vld [vmem:[%s2 + $0x8] sm:$0xff]
    %v142 = vld [vmem:[%s2 + $0x10] sm:$0xff]
    %v143 = vld [vmem:[%s2 + $0x18] sm:$0xff]
    %vm144 = vcmask 261120
    %v145 = vsel %vm144, %v134, 0.0
    %146 = vadd.xlane.f32.xlu0 %v145
    %v147 = vpop.xlane.xlu0 %146
    %v148 = vsel %vm144, %v137, 0.0
    %149 = vadd.xlane.f32.xlu0 %v148
    %v150 = vpop.xlane.xlu0 %149
    %v151 = vrcp.pop 32.0
    %v152 = vmul.f32 %v147, %v151
    %v153 = vmul.f32 %v150, %v151
    %v154 = vsub.f32 %v134, %v152
    %v155 = vsub.f32 %v137, %v153
    %v156 = vmul.f32 %v154, %v154
    %v157 = vmul.f32 %v155, %v155
    %v158 = vsel %vm144, %v156, 0.0
    %159 = vadd.xlane.f32.xlu0 %v158
    %v160 = vpop.xlane.xlu0 %159
    %v161 = vsel %vm144, %v157, 0.0
    %162 = vadd.xlane.f32.xlu0 %v161
    %v163 = vpop.xlane.xlu0 %162
    %v164 = vmul.f32 %v160, %v151
    %v165 = vmul.f32 %v163, %v151
    %v166 = vadd.f32 %v164, 1e-05
    %v167 = vadd.f32 %v165, 1e-05
    %v168 = vrsqrt.pop %v166
    %v169 = vrsqrt.pop %v167
    %v170 = vmul.f32 %v154, %v168
    %v171 = vmul.f32 %v155, %v169
    %v172 = vlaneseq
    %v173 = vshrl.u32 %v172, 7
    %v174 = vsub.s32 0, %v173
    %v175 = vrot.slane %v25, %v174
    %v176 = vmul.f32 %v170, %v175
    %v177 = vmul.f32 %v171, %v175
    %v178 = vlaneseq
    %v179 = vshrl.u32 %v178, 7
    %v180 = vsub.s32 1, %v179
    %v181 = vrot.slane %v25, %v180
    %v182 = vadd.f32 %v176, %v181
    %v183 = vadd.f32 %v177, %v181
    %v184 = vpack.c.bf16 %v183, %v182
    %v185 = vlaneseq
    %v186 = vshrl.u32 %v185, 7
    %v187 = vsub.s32 2, %v186
    %v188 = vrot.slane %v25, %v187
    %v193 = vunpack.c.l.b16 %v140
    %v194 = vunpack.c.l.b16 %v141
    %v195 = vunpack.c.l.b16 %v142
    %v196 = vunpack.c.l.b16 %v143
    %v197 = vpack.c.b16 %v194, %v193
    %v198 = vpack.c.b16 %v196, %v195
    %v202 = vsel %vm144, %v184, 0
    %204 = vmatprep.subr.bf16.mxu0 0
    %205 = vmatpush1.bf16.msra.mxu0 %v197
    %206 = vmatprep.subr.bf16.mxu0 0
    %207 = vmatpush1.bf16.msra.mxu0 %v198
    %208 = vmatprep.subr.bf16.mxu0 0
    %209 = vmatpush1.bf16.msra.mxu0 0
    %210 = vmatprep.subr.bf16.mxu0 0
    %211 = vmatpush1.bf16.msra.mxu0 0
    %212 = vmatprep.subr.bf16.mxu0 0
    %213 = vmatpush1.bf16.msra.mxu0 0
    %214 = vmatprep.subr.bf16.mxu0 0
    %215 = vmatpush1.bf16.msra.mxu0 0
    %216 = vmatprep.subr.bf16.mxu0 0
    %217 = vmatpush1.bf16.msra.mxu0 0
    %218 = vmatprep.subr.bf16.mxu0 0
    %219 = vmatpush1.bf16.msra.mxu0 0
    %220 = vmatprep.subr.bf16.mxu0 0
    %221 = vmatpush1.bf16.msra.mxu0 0
    %222 = vmatprep.subr.bf16.mxu0 0
    %223 = vmatpush1.bf16.msra.mxu0 0
    %224 = vmatprep.subr.bf16.mxu0 0
    %225 = vmatpush1.bf16.msra.mxu0 0
    %226 = vmatprep.subr.bf16.mxu0 0
    %227 = vmatpush1.bf16.msra.mxu0 0
    %228 = vmatprep.subr.bf16.mxu0 0
    %229 = vmatpush1.bf16.msra.mxu0 0
    %230 = vmatprep.subr.bf16.mxu0 0
    %231 = vmatpush1.bf16.msra.mxu0 0
    %232 = vmatprep.subr.bf16.mxu0 0
    %233 = vmatpush1.bf16.msra.mxu0 0
    %234 = vmatprep.subr.bf16.mxu0 0
    %235 = vmatpush1.bf16.msra.mxu0 0
    %236 = vmatprep.mubr.bf16.mxu0 0
    %237 = vmatmul.mubr.bf16.gmra.mrb[0].mxu0 %v202
    %v238 = vpop.f32.mrb[0].mxu0
    %v239 = vadd.f32 %v188, %v238
    %v240 = vpop.f32.mrb[0].mxu0
    %v241 = vpop.f32.mrb[0].mxu0
    %v242 = vadd.f32 %v188, %v241
    %v243 = vpop.f32.mrb[0].mxu0
    %244 = vdwg.mxu0
    %247 = vrot.lane.b32.xlu0 %v239, 120
    %v248 = vpop.permute.xlu0 %247
    %249 = vrot.lane.b32.xlu0 %v242, 120
    %v250 = vpop.permute.xlu0 %249
    %253 = vrot.lane.b32.xlu0 %v239, 112
    %v254 = vpop.permute.xlu0 %253
    %255 = vrot.lane.b32.xlu0 %v242, 112
    %v256 = vpop.permute.xlu0 %255
    %259 = vrot.lane.b32.xlu0 %v239, 104
    %v260 = vpop.permute.xlu0 %259
    %261 = vrot.lane.b32.xlu0 %v242, 104
    %v262 = vpop.permute.xlu0 %261
    %v265 = vpack.c.bf16 %v239, %v239
    %v266 = vpack.c.bf16 %v242, %v242
    %v267 = vpack.c.bf16 %v248, %v248
    %v268 = vpack.c.bf16 %v250, %v250
    %v269 = vpack.c.bf16 %v254, %v254
    %v270 = vpack.c.bf16 %v256, %v256
    %v271 = vpack.c.bf16 %v260, %v260
    %v272 = vpack.c.bf16 %v262, %v262
    %274 = vrot.lane.b32.xlu0 %v265, 96
    %v275 = vpop.permute.xlu0 %274
    %vm276 = vcmask 64512
    %v278 = vsel %vm276, %v265, 0
    %v281 = vsel %vm276, %v275, 0
    %283 = vmatprep.subr.bf16.mxu0 0
    %284 = vmatpush1.bf16.xpose.msra.mxu0 %v281
    %285 = vmatprep.subr.bf16.mxu0 0
    %286 = vmatpush1.bf16.xpose.msra.mxu0 0
    %287 = vmatprep.subr.bf16.mxu0 0
    %288 = vmatpush1.bf16.xpose.msra.mxu0 0
    %289 = vmatprep.subr.bf16.mxu0 0
    %290 = vmatpush1.bf16.xpose.msra.mxu0 0
    %291 = vmatprep.subr.bf16.mxu0 0
    %292 = vmatpush1.bf16.xpose.msra.mxu0 0
    %293 = vmatprep.subr.bf16.mxu0 0
    %294 = vmatpush1.bf16.xpose.msra.mxu0 0
    %295 = vmatprep.subr.bf16.mxu0 0
    %296 = vmatpush1.bf16.xpose.msra.mxu0 0
    %297 = vmatprep.subr.bf16.mxu0 0
    %298 = vmatpush1.bf16.xpose.msra.mxu0 0
    %299 = vmatprep.subr.bf16.mxu0 0
    %300 = vmatpush1.bf16.xpose.msra.mxu0 0
    %301 = vmatprep.subr.bf16.mxu0 0
    %302 = vmatpush1.bf16.xpose.msra.mxu0 0
    %303 = vmatprep.subr.bf16.mxu0 0
    %304 = vmatpush1.bf16.xpose.msra.mxu0 0
    %305 = vmatprep.subr.bf16.mxu0 0
    %306 = vmatpush1.bf16.xpose.msra.mxu0 0
    %307 = vmatprep.subr.bf16.mxu0 0
    %308 = vmatpush1.bf16.xpose.msra.mxu0 0
    %309 = vmatprep.subr.bf16.mxu0 0
    %310 = vmatpush1.bf16.xpose.msra.mxu0 0
    %311 = vmatprep.subr.bf16.mxu0 0
    %312 = vmatpush1.bf16.xpose.msra.mxu0 0
    %313 = vmatprep.subr.bf16.mxu0 0
    %314 = vmatpush1.bf16.xpose.msra.mxu0 0
    %315 = vmatprep.mubr.bf16.mxu0 0
    %316 = vmatmul.mubr.bf16.gmra.mrb[0].mxu0 %v278
    %v317 = vpop.f32.mrb[0].mxu0
    %v318 = vadd.f32 0.0, %v317
    %v319 = vpop.f32.mrb[0].mxu0
    %v320 = vpop.f32.mrb[0].mxu0
    %v321 = vpop.f32.mrb[0].mxu0
    %322 = vdwg.mxu0
    %324 = vrot.lane.b32.xlu0 %v266, 96
    %v325 = vpop.permute.xlu0 %324
    %v327 = vsel %vm276, %v266, 0
    %v330 = vsel %vm276, %v325, 0
    %332 = vmatprep.subr.bf16.mxu0 0
    %333 = vmatpush1.bf16.xpose.msra.mxu0 %v330
    %334 = vmatprep.subr.bf16.mxu0 0
    %335 = vmatpush1.bf16.xpose.msra.mxu0 0
    %336 = vmatprep.subr.bf16.mxu0 0
    %337 = vmatpush1.bf16.xpose.msra.mxu0 0
    %338 = vmatprep.subr.bf16.mxu0 0
    %339 = vmatpush1.bf16.xpose.msra.mxu0 0
    %340 = vmatprep.subr.bf16.mxu0 0
    %341 = vmatpush1.bf16.xpose.msra.mxu0 0
    %342 = vmatprep.subr.bf16.mxu0 0
    %343 = vmatpush1.bf16.xpose.msra.mxu0 0
    %344 = vmatprep.subr.bf16.mxu0 0
    %345 = vmatpush1.bf16.xpose.msra.mxu0 0
    %346 = vmatprep.subr.bf16.mxu0 0
    %347 = vmatpush1.bf16.xpose.msra.mxu0 0
    %348 = vmatprep.subr.bf16.mxu0 0
    %349 = vmatpush1.bf16.xpose.msra.mxu0 0
    %350 = vmatprep.subr.bf16.mxu0 0
    %351 = vmatpush1.bf16.xpose.msra.mxu0 0
    %352 = vmatprep.subr.bf16.mxu0 0
    %353 = vmatpush1.bf16.xpose.msra.mxu0 0
    %354 = vmatprep.subr.bf16.mxu0 0
    %355 = vmatpush1.bf16.xpose.msra.mxu0 0
    %356 = vmatprep.subr.bf16.mxu0 0
    %357 = vmatpush1.bf16.xpose.msra.mxu0 0
    %358 = vmatprep.subr.bf16.mxu0 0
    %359 = vmatpush1.bf16.xpose.msra.mxu0 0
    %360 = vmatprep.subr.bf16.mxu0 0
    %361 = vmatpush1.bf16.xpose.msra.mxu0 0
    %362 = vmatprep.subr.bf16.mxu0 0
    %363 = vmatpush1.bf16.xpose.msra.mxu0 0
    %364 = vmatprep.mubr.bf16.mxu0 0
    %365 = vmatmul.mubr.bf16.gmra.mrb[0].mxu0 %v327
    %v366 = vpop.f32.mrb[0].mxu0
    %v367 = vadd.f32 0.0, %v366
    %v368 = vpop.f32.mrb[0].mxu0
    %v369 = vpop.f32.mrb[0].mxu0
    %v370 = vpop.f32.mrb[0].mxu0
    %371 = vdwg.mxu0
    %373 = vrot.lane.b32.xlu0 %v267, 96
    %v374 = vpop.permute.xlu0 %373
    %v376 = vsel %vm276, %v267, 0
    %v379 = vsel %vm276, %v374, 0
    %381 = vmatprep.subr.bf16.mxu0 0
    %382 = vmatpush1.bf16.xpose.msra.mxu0 %v379
    %383 = vmatprep.subr.bf16.mxu0 0
    %384 = vmatpush1.bf16.xpose.msra.mxu0 0
    %385 = vmatprep.subr.bf16.mxu0 0
    %386 = vmatpush1.bf16.xpose.msra.mxu0 0
    %387 = vmatprep.subr.bf16.mxu0 0
    %388 = vmatpush1.bf16.xpose.msra.mxu0 0
    %389 = vmatprep.subr.bf16.mxu0 0
    %390 = vmatpush1.bf16.xpose.msra.mxu0 0
    %391 = vmatprep.subr.bf16.mxu0 0
    %392 = vmatpush1.bf16.xpose.msra.mxu0 0
    %393 = vmatprep.subr.bf16.mxu0 0
    %394 = vmatpush1.bf16.xpose.msra.mxu0 0
    %395 = vmatprep.subr.bf16.mxu0 0
    %396 = vmatpush1.bf16.xpose.msra.mxu0 0
    %397 = vmatprep.subr.bf16.mxu0 0
    %398 = vmatpush1.bf16.xpose.msra.mxu0 0
    %399 = vmatprep.subr.bf16.mxu0 0
    %400 = vmatpush1.bf16.xpose.msra.mxu0 0
    %401 = vmatprep.subr.bf16.mxu0 0
    %402 = vmatpush1.bf16.xpose.msra.mxu0 0
    %403 = vmatprep.subr.bf16.mxu0 0
    %404 = vmatpush1.bf16.xpose.msra.mxu0 0
    %405 = vmatprep.subr.bf16.mxu0 0
    %406 = vmatpush1.bf16.xpose.msra.mxu0 0
    %407 = vmatprep.subr.bf16.mxu0 0
    %408 = vmatpush1.bf16.xpose.msra.mxu0 0
    %409 = vmatprep.subr.bf16.mxu0 0
    %410 = vmatpush1.bf16.xpose.msra.mxu0 0
    %411 = vmatprep.subr.bf16.mxu0 0
    %412 = vmatpush1.bf16.xpose.msra.mxu0 0
    %413 = vmatprep.mubr.bf16.mxu0 0
    %414 = vmatmul.mubr.bf16.gmra.mrb[0].mxu0 %v376
    %v415 = vpop.f32.mrb[0].mxu0
    %v416 = vadd.f32 0.0, %v415
    %v417 = vpop.f32.mrb[0].mxu0
    %v418 = vpop.f32.mrb[0].mxu0
    %v419 = vpop.f32.mrb[0].mxu0
    %420 = vdwg.mxu0
    %422 = vrot.lane.b32.xlu0 %v268, 96
    %v423 = vpop.permute.xlu0 %422
    %v425 = vsel %vm276, %v268, 0
    %v428 = vsel %vm276, %v423, 0
    %430 = vmatprep.subr.bf16.mxu0 0
    %431 = vmatpush1.bf16.xpose.msra.mxu0 %v428
    %432 = vmatprep.subr.bf16.mxu0 0
    %433 = vmatpush1.bf16.xpose.msra.mxu0 0
    %434 = vmatprep.subr.bf16.mxu0 0
    %435 = vmatpush1.bf16.xpose.msra.mxu0 0
    %436 = vmatprep.subr.bf16.mxu0 0
    %437 = vmatpush1.bf16.xpose.msra.mxu0 0
    %438 = vmatprep.subr.bf16.mxu0 0
    %439 = vmatpush1.bf16.xpose.msra.mxu0 0
    %440 = vmatprep.subr.bf16.mxu0 0
    %441 = vmatpush1.bf16.xpose.msra.mxu0 0
    %442 = vmatprep.subr.bf16.mxu0 0
    %443 = vmatpush1.bf16.xpose.msra.mxu0 0
    %444 = vmatprep.subr.bf16.mxu0 0
    %445 = vmatpush1.bf16.xpose.msra.mxu0 0
    %446 = vmatprep.subr.bf16.mxu0 0
    %447 = vmatpush1.bf16.xpose.msra.mxu0 0
    %448 = vmatprep.subr.bf16.mxu0 0
    %449 = vmatpush1.bf16.xpose.msra.mxu0 0
    %450 = vmatprep.subr.bf16.mxu0 0
    %451 = vmatpush1.bf16.xpose.msra.mxu0 0
    %452 = vmatprep.subr.bf16.mxu0 0
    %453 = vmatpush1.bf16.xpose.msra.mxu0 0
    %454 = vmatprep.subr.bf16.mxu0 0
    %455 = vmatpush1.bf16.xpose.msra.mxu0 0
    %456 = vmatprep.subr.bf16.mxu0 0
    %457 = vmatpush1.bf16.xpose.msra.mxu0 0
    %458 = vmatprep.subr.bf16.mxu0 0
    %459 = vmatpush1.bf16.xpose.msra.mxu0 0
    %460 = vmatprep.subr.bf16.mxu0 0
    %461 = vmatpush1.bf16.xpose.msra.mxu0 0
    %462 = vmatprep.mubr.bf16.mxu0 0
    %463 = vmatmul.mubr.bf16.gmra.mrb[0].mxu0 %v425
    %v464 = vpop.f32.mrb[0].mxu0
    %v465 = vadd.f32 0.0, %v464
    %v466 = vpop.f32.mrb[0].mxu0
    %v467 = vpop.f32.mrb[0].mxu0
    %v468 = vpop.f32.mrb[0].mxu0
    %469 = vdwg.mxu0
    %471 = vrot.lane.b32.xlu0 %v269, 96
    %v472 = vpop.permute.xlu0 %471
    %v474 = vsel %vm276, %v269, 0
    %v477 = vsel %vm276, %v472, 0
    %479 = vmatprep.subr.bf16.mxu0 0
    %480 = vmatpush1.bf16.xpose.msra.mxu0 %v477
    %481 = vmatprep.subr.bf16.mxu0 0
    %482 = vmatpush1.bf16.xpose.msra.mxu0 0
    %483 = vmatprep.subr.bf16.mxu0 0
    %484 = vmatpush1.bf16.xpose.msra.mxu0 0
    %485 = vmatprep.subr.bf16.mxu0 0
    %486 = vmatpush1.bf16.xpose.msra.mxu0 0
    %487 = vmatprep.subr.bf16.mxu0 0
    %488 = vmatpush1.bf16.xpose.msra.mxu0 0
    %489 = vmatprep.subr.bf16.mxu0 0
    %490 = vmatpush1.bf16.xpose.msra.mxu0 0
    %491 = vmatprep.subr.bf16.mxu0 0
    %492 = vmatpush1.bf16.xpose.msra.mxu0 0
    %493 = vmatprep.subr.bf16.mxu0 0
    %494 = vmatpush1.bf16.xpose.msra.mxu0 0
    %495 = vmatprep.subr.bf16.mxu0 0
    %496 = vmatpush1.bf16.xpose.msra.mxu0 0
    %497 = vmatprep.subr.bf16.mxu0 0
    %498 = vmatpush1.bf16.xpose.msra.mxu0 0
    %499 = vmatprep.subr.bf16.mxu0 0
    %500 = vmatpush1.bf16.xpose.msra.mxu0 0
    %501 = vmatprep.subr.bf16.mxu0 0
    %502 = vmatpush1.bf16.xpose.msra.mxu0 0
    %503 = vmatprep.subr.bf16.mxu0 0
    %504 = vmatpush1.bf16.xpose.msra.mxu0 0
    %505 = vmatprep.subr.bf16.mxu0 0
    %506 = vmatpush1.bf16.xpose.msra.mxu0 0
    %507 = vmatprep.subr.bf16.mxu0 0
    %508 = vmatpush1.bf16.xpose.msra.mxu0 0
    %509 = vmatprep.subr.bf16.mxu0 0
    %510 = vmatpush1.bf16.xpose.msra.mxu0 0
    %511 = vmatprep.mubr.bf16.mxu0 0
    %512 = vmatmul.mubr.bf16.gmra.mrb[0].mxu0 %v474
    %v513 = vpop.f32.mrb[0].mxu0
    %v514 = vadd.f32 0.0, %v513
    %v515 = vpop.f32.mrb[0].mxu0
    %v516 = vpop.f32.mrb[0].mxu0
    %v517 = vpop.f32.mrb[0].mxu0
    %518 = vdwg.mxu0
    %520 = vrot.lane.b32.xlu0 %v270, 96
    %v521 = vpop.permute.xlu0 %520
    %v523 = vsel %vm276, %v270, 0
    %v526 = vsel %vm276, %v521, 0
    %528 = vmatprep.subr.bf16.mxu0 0
    %529 = vmatpush1.bf16.xpose.msra.mxu0 %v526
    %530 = vmatprep.subr.bf16.mxu0 0
    %531 = vmatpush1.bf16.xpose.msra.mxu0 0
    %532 = vmatprep.subr.bf16.mxu0 0
    %533 = vmatpush1.bf16.xpose.msra.mxu0 0
    %534 = vmatprep.subr.bf16.mxu0 0
    %535 = vmatpush1.bf16.xpose.msra.mxu0 0
    %536 = vmatprep.subr.bf16.mxu0 0
    %537 = vmatpush1.bf16.xpose.msra.mxu0 0
    %538 = vmatprep.subr.bf16.mxu0 0
    %539 = vmatpush1.bf16.xpose.msra.mxu0 0
    %540 = vmatprep.subr.bf16.mxu0 0
    %541 = vmatpush1.bf16.xpose.msra.mxu0 0
    %542 = vmatprep.subr.bf16.mxu0 0
    %543 = vmatpush1.bf16.xpose.msra.mxu0 0
    %544 = vmatprep.subr.bf16.mxu0 0
    %545 = vmatpush1.bf16.xpose.msra.mxu0 0
    %546 = vmatprep.subr.bf16.mxu0 0
    %547 = vmatpush1.bf16.xpose.msra.mxu0 0
    %548 = vmatprep.subr.bf16.mxu0 0
    %549 = vmatpush1.bf16.xpose.msra.mxu0 0
    %550 = vmatprep.subr.bf16.mxu0 0
    %551 = vmatpush1.bf16.xpose.msra.mxu0 0
    %552 = vmatprep.subr.bf16.mxu0 0
    %553 = vmatpush1.bf16.xpose.msra.mxu0 0
    %554 = vmatprep.subr.bf16.mxu0 0
    %555 = vmatpush1.bf16.xpose.msra.mxu0 0
    %556 = vmatprep.subr.bf16.mxu0 0
    %557 = vmatpush1.bf16.xpose.msra.mxu0 0
    %558 = vmatprep.subr.bf16.mxu0 0
    %559 = vmatpush1.bf16.xpose.msra.mxu0 0
    %560 = vmatprep.mubr.bf16.mxu0 0
    %561 = vmatmul.mubr.bf16.gmra.mrb[0].mxu0 %v523
    %v562 = vpop.f32.mrb[0].mxu0
    %v563 = vadd.f32 0.0, %v562
    %v564 = vpop.f32.mrb[0].mxu0
    %v565 = vpop.f32.mrb[0].mxu0
    %v566 = vpop.f32.mrb[0].mxu0
    %567 = vdwg.mxu0
    %569 = vrot.lane.b32.xlu0 %v271, 96
    %v570 = vpop.permute.xlu0 %569
    %v572 = vsel %vm276, %v271, 0
    %v575 = vsel %vm276, %v570, 0
    %577 = vmatprep.subr.bf16.mxu0 0
    %578 = vmatpush1.bf16.xpose.msra.mxu0 %v575
    %579 = vmatprep.subr.bf16.mxu0 0
    %580 = vmatpush1.bf16.xpose.msra.mxu0 0
    %581 = vmatprep.subr.bf16.mxu0 0
    %582 = vmatpush1.bf16.xpose.msra.mxu0 0
    %583 = vmatprep.subr.bf16.mxu0 0
    %584 = vmatpush1.bf16.xpose.msra.mxu0 0
    %585 = vmatprep.subr.bf16.mxu0 0
    %586 = vmatpush1.bf16.xpose.msra.mxu0 0
    %587 = vmatprep.subr.bf16.mxu0 0
    %588 = vmatpush1.bf16.xpose.msra.mxu0 0
    %589 = vmatprep.subr.bf16.mxu0 0
    %590 = vmatpush1.bf16.xpose.msra.mxu0 0
    %591 = vmatprep.subr.bf16.mxu0 0
    %592 = vmatpush1.bf16.xpose.msra.mxu0 0
    %593 = vmatprep.subr.bf16.mxu0 0
    %594 = vmatpush1.bf16.xpose.msra.mxu0 0
    %595 = vmatprep.subr.bf16.mxu0 0
    %596 = vmatpush1.bf16.xpose.msra.mxu0 0
    %597 = vmatprep.subr.bf16.mxu0 0
    %598 = vmatpush1.bf16.xpose.msra.mxu0 0
    %599 = vmatprep.subr.bf16.mxu0 0
    %600 = vmatpush1.bf16.xpose.msra.mxu0 0
    %601 = vmatprep.subr.bf16.mxu0 0
    %602 = vmatpush1.bf16.xpose.msra.mxu0 0
    %603 = vmatprep.subr.bf16.mxu0 0
    %604 = vmatpush1.bf16.xpose.msra.mxu0 0
    %605 = vmatprep.subr.bf16.mxu0 0
    %606 = vmatpush1.bf16.xpose.msra.mxu0 0
    %607 = vmatprep.subr.bf16.mxu0 0
    %608 = vmatpush1.bf16.xpose.msra.mxu0 0
    %609 = vmatprep.mubr.bf16.mxu0 0
    %610 = vmatmul.mubr.bf16.gmra.mrb[0].mxu0 %v572
    %v611 = vpop.f32.mrb[0].mxu0
    %v612 = vadd.f32 0.0, %v611
    %v613 = vpop.f32.mrb[0].mxu0
    %v614 = vpop.f32.mrb[0].mxu0
    %v615 = vpop.f32.mrb[0].mxu0
    %616 = vdwg.mxu0
    %618 = vrot.lane.b32.xlu0 %v272, 96
    %v619 = vpop.permute.xlu0 %618
    %v621 = vsel %vm276, %v272, 0
    %v624 = vsel %vm276, %v619, 0
    %626 = vmatprep.subr.bf16.mxu0 0
    %627 = vmatpush1.bf16.xpose.msra.mxu0 %v624
    %628 = vmatprep.subr.bf16.mxu0 0
    %629 = vmatpush1.bf16.xpose.msra.mxu0 0
    %630 = vmatprep.subr.bf16.mxu0 0
    %631 = vmatpush1.bf16.xpose.msra.mxu0 0
    %632 = vmatprep.subr.bf16.mxu0 0
    %633 = vmatpush1.bf16.xpose.msra.mxu0 0
    %634 = vmatprep.subr.bf16.mxu0 0
    %635 = vmatpush1.bf16.xpose.msra.mxu0 0
    %636 = vmatprep.subr.bf16.mxu0 0
    %637 = vmatpush1.bf16.xpose.msra.mxu0 0
    %638 = vmatprep.subr.bf16.mxu0 0
    %639 = vmatpush1.bf16.xpose.msra.mxu0 0
    %640 = vmatprep.subr.bf16.mxu0 0
    %641 = vmatpush1.bf16.xpose.msra.mxu0 0
    %642 = vmatprep.subr.bf16.mxu0 0
    %643 = vmatpush1.bf16.xpose.msra.mxu0 0
    %644 = vmatprep.subr.bf16.mxu0 0
    %645 = vmatpush1.bf16.xpose.msra.mxu0 0
    %646 = vmatprep.subr.bf16.mxu0 0
    %647 = vmatpush1.bf16.xpose.msra.mxu0 0
    %648 = vmatprep.subr.bf16.mxu0 0
    %649 = vmatpush1.bf16.xpose.msra.mxu0 0
    %650 = vmatprep.subr.bf16.mxu0 0
    %651 = vmatpush1.bf16.xpose.msra.mxu0 0
    %652 = vmatprep.subr.bf16.mxu0 0
    %653 = vmatpush1.bf16.xpose.msra.mxu0 0
    %654 = vmatprep.subr.bf16.mxu0 0
    %655 = vmatpush1.bf16.xpose.msra.mxu0 0
    %656 = vmatprep.subr.bf16.mxu0 0
    %657 = vmatpush1.bf16.xpose.msra.mxu0 0
    %658 = vmatprep.mubr.bf16.mxu0 0
    %659 = vmatmul.mubr.bf16.gmra.mrb[0].mxu0 %v621
    %v660 = vpop.f32.mrb[0].mxu0
    %v661 = vadd.f32 0.0, %v660
    %v662 = vpop.f32.mrb[0].mxu0
    %v663 = vpop.f32.mrb[0].mxu0
    %v664 = vpop.f32.mrb[0].mxu0
    %665 = vdwg.mxu0
    %v666 = vmul.f32 %v318, 0.35355338
    %v667 = vmul.f32 %v367, 0.35355338
    %v668 = vmul.f32 %v416, 0.35355338
    %v669 = vmul.f32 %v465, 0.35355338
    %v670 = vmul.f32 %v514, 0.35355338
    %v671 = vmul.f32 %v563, 0.35355338
    %v672 = vmul.f32 %v612, 0.35355338
    %v673 = vmul.f32 %v661, 0.35355338
    %v674 = vsel %vm276, %v666, -inf
    %675 = vmax.xlane.f32.xlu0 %v674
    %v676 = vpop.xlane.xlu0 %675
    %v677 = vsel %vm276, %v667, -inf
    %678 = vmax.xlane.f32.xlu0 %v677
    %v679 = vpop.xlane.xlu0 %678
    %v680 = vsel %vm276, %v668, -inf
    %681 = vmax.xlane.f32.xlu0 %v680
    %v682 = vpop.xlane.xlu0 %681
    %v683 = vsel %vm276, %v669, -inf
    %684 = vmax.xlane.f32.xlu0 %v683
    %v685 = vpop.xlane.xlu0 %684
    %v686 = vsel %vm276, %v670, -inf
    %687 = vmax.xlane.f32.xlu0 %v686
    %v688 = vpop.xlane.xlu0 %687
    %v689 = vsel %vm276, %v671, -inf
    %690 = vmax.xlane.f32.xlu0 %v689
    %v691 = vpop.xlane.xlu0 %690
    %v692 = vsel %vm276, %v672, -inf
    %693 = vmax.xlane.f32.xlu0 %v692
    %v694 = vpop.xlane.xlu0 %693
    %v695 = vsel %vm276, %v673, -inf
    %696 = vmax.xlane.f32.xlu0 %v695
    %v697 = vpop.xlane.xlu0 %696
    %v698 = vsub.f32 %v666, %v676
    %v699 = vsub.f32 %v667, %v679
    %v700 = vsub.f32 %v668, %v682
    %v701 = vsub.f32 %v669, %v685
    %v702 = vsub.f32 %v670, %v688
    %v703 = vsub.f32 %v671, %v691
    %v704 = vsub.f32 %v672, %v694
    %v705 = vsub.f32 %v673, %v697
    %v706 = vmul.f32 %v698, 1.442695
    %v707 = vpow.pop %v706
    %v708 = vmul.f32 %v699, 1.442695
    %v709 = vpow.pop %v708
    %v710 = vmul.f32 %v700, 1.442695
    %v711 = vpow.pop %v710
    %v712 = vmul.f32 %v701, 1.442695
    %v713 = vpow.pop %v712
    %v714 = vmul.f32 %v702, 1.442695
    %v715 = vpow.pop %v714
    %v716 = vmul.f32 %v703, 1.442695
    %v717 = vpow.pop %v716
    %v718 = vmul.f32 %v704, 1.442695
    %v719 = vpow.pop %v718
    %v720 = vmul.f32 %v705, 1.442695
    %v721 = vpow.pop %v720
    %v722 = vsel %vm276, %v707, 0.0
    %723 = vadd.xlane.f32.xlu0 %v722
    %v724 = vpop.xlane.xlu0 %723
    %v725 = vsel %vm276, %v709, 0.0
    %726 = vadd.xlane.f32.xlu0 %v725
    %v727 = vpop.xlane.xlu0 %726
    %v728 = vsel %vm276, %v711, 0.0
    %729 = vadd.xlane.f32.xlu0 %v728
    %v730 = vpop.xlane.xlu0 %729
    %v731 = vsel %vm276, %v713, 0.0
    %732 = vadd.xlane.f32.xlu0 %v731
    %v733 = vpop.xlane.xlu0 %732
    %v734 = vsel %vm276, %v715, 0.0
    %735 = vadd.xlane.f32.xlu0 %v734
    %v736 = vpop.xlane.xlu0 %735
    %v737 = vsel %vm276, %v717, 0.0
    %738 = vadd.xlane.f32.xlu0 %v737
    %v739 = vpop.xlane.xlu0 %738
    %v740 = vsel %vm276, %v719, 0.0
    %741 = vadd.xlane.f32.xlu0 %v740
    %v742 = vpop.xlane.xlu0 %741
    %v743 = vsel %vm276, %v721, 0.0
    %744 = vadd.xlane.f32.xlu0 %v743
    %v745 = vpop.xlane.xlu0 %744
    %v746 = vrcp.pop %v724
    %v747 = vmul.f32 %v707, %v746
    %v748 = vrcp.pop %v727
    %v749 = vmul.f32 %v709, %v748
    %v750 = vrcp.pop %v730
    %v751 = vmul.f32 %v711, %v750
    %v752 = vrcp.pop %v733
    %v753 = vmul.f32 %v713, %v752
    %v754 = vrcp.pop %v736
    %v755 = vmul.f32 %v715, %v754
    %v756 = vrcp.pop %v739
    %v757 = vmul.f32 %v717, %v756
    %v758 = vrcp.pop %v742
    %v759 = vmul.f32 %v719, %v758
    %v760 = vrcp.pop %v745
    %v761 = vmul.f32 %v721, %v760
    %v762 = vpack.c.bf16 %v747, %v747
    %v763 = vpack.c.bf16 %v749, %v749
    %v764 = vpack.c.bf16 %v751, %v751
    %v765 = vpack.c.bf16 %v753, %v753
    %v766 = vpack.c.bf16 %v755, %v755
    %v767 = vpack.c.bf16 %v757, %v757
    %v768 = vpack.c.bf16 %v759, %v759
    %v769 = vpack.c.bf16 %v761, %v761
    %770 = vrot.lane.b32.xlu0 %v265, 64
    %v771 = vpop.permute.xlu0 %770
    %v773 = vsel %vm276, %v762, 0
    %v776 = vsel %vm95, %v771, 0
    %778 = vmatprep.subr.bf16.mxu0 0
    %779 = vmatpush1.bf16.msra.mxu0 %v776
    %780 = vmatprep.subr.bf16.mxu0 0
    %781 = vmatpush1.bf16.msra.mxu0 0
    %782 = vmatprep.subr.bf16.mxu0 0
    %783 = vmatpush1.bf16.msra.mxu0 0
    %784 = vmatprep.subr.bf16.mxu0 0
    %785 = vmatpush1.bf16.msra.mxu0 0
    %786 = vmatprep.subr.bf16.mxu0 0
    %787 = vmatpush1.bf16.msra.mxu0 0
    %788 = vmatprep.subr.bf16.mxu0 0
    %789 = vmatpush1.bf16.msra.mxu0 0
    %790 = vmatprep.subr.bf16.mxu0 0
    %791 = vmatpush1.bf16.msra.mxu0 0
    %792 = vmatprep.subr.bf16.mxu0 0
    %793 = vmatpush1.bf16.msra.mxu0 0
    %794 = vmatprep.subr.bf16.mxu0 0
    %795 = vmatpush1.bf16.msra.mxu0 0
    %796 = vmatprep.subr.bf16.mxu0 0
    %797 = vmatpush1.bf16.msra.mxu0 0
    %798 = vmatprep.subr.bf16.mxu0 0
    %799 = vmatpush1.bf16.msra.mxu0 0
    %800 = vmatprep.subr.bf16.mxu0 0
    %801 = vmatpush1.bf16.msra.mxu0 0
    %802 = vmatprep.subr.bf16.mxu0 0
    %803 = vmatpush1.bf16.msra.mxu0 0
    %804 = vmatprep.subr.bf16.mxu0 0
    %805 = vmatpush1.bf16.msra.mxu0 0
    %806 = vmatprep.subr.bf16.mxu0 0
    %807 = vmatpush1.bf16.msra.mxu0 0
    %808 = vmatprep.subr.bf16.mxu0 0
    %809 = vmatpush1.bf16.msra.mxu0 0
    %810 = vmatprep.mubr.bf16.mxu0 0
    %811 = vmatmul.mubr.bf16.gmra.mrb[0].mxu0 %v773
    %v812 = vpop.f32.mrb[0].mxu0
    %v813 = vadd.f32 0.0, %v812
    %v814 = vpop.f32.mrb[0].mxu0
    %v815 = vpop.f32.mrb[0].mxu0
    %v816 = vpop.f32.mrb[0].mxu0
    %817 = vdwg.mxu0
    %818 = vrot.lane.b32.xlu0 %v266, 64
    %v819 = vpop.permute.xlu0 %818
    %v821 = vsel %vm276, %v763, 0
    %v824 = vsel %vm95, %v819, 0
    %826 = vmatprep.subr.bf16.mxu0 0
    %827 = vmatpush1.bf16.msra.mxu0 %v824
    %828 = vmatprep.subr.bf16.mxu0 0
    %829 = vmatpush1.bf16.msra.mxu0 0
    %830 = vmatprep.subr.bf16.mxu0 0
    %831 = vmatpush1.bf16.msra.mxu0 0
    %832 = vmatprep.subr.bf16.mxu0 0
    %833 = vmatpush1.bf16.msra.mxu0 0
    %834 = vmatprep.subr.bf16.mxu0 0
    %835 = vmatpush1.bf16.msra.mxu0 0
    %836 = vmatprep.subr.bf16.mxu0 0
    %837 = vmatpush1.bf16.msra.mxu0 0
    %838 = vmatprep.subr.bf16.mxu0 0
    %839 = vmatpush1.bf16.msra.mxu0 0
    %840 = vmatprep.subr.bf16.mxu0 0
    %841 = vmatpush1.bf16.msra.mxu0 0
    %842 = vmatprep.subr.bf16.mxu0 0
    %843 = vmatpush1.bf16.msra.mxu0 0
    %844 = vmatprep.subr.bf16.mxu0 0
    %845 = vmatpush1.bf16.msra.mxu0 0
    %846 = vmatprep.subr.bf16.mxu0 0
    %847 = vmatpush1.bf16.msra.mxu0 0
    %848 = vmatprep.subr.bf16.mxu0 0
    %849 = vmatpush1.bf16.msra.mxu0 0
    %850 = vmatprep.subr.bf16.mxu0 0
    %851 = vmatpush1.bf16.msra.mxu0 0
    %852 = vmatprep.subr.bf16.mxu0 0
    %853 = vmatpush1.bf16.msra.mxu0 0
    %854 = vmatprep.subr.bf16.mxu0 0
    %855 = vmatpush1.bf16.msra.mxu0 0
    %856 = vmatprep.subr.bf16.mxu0 0
    %857 = vmatpush1.bf16.msra.mxu0 0
    %858 = vmatprep.mubr.bf16.mxu0 0
    %859 = vmatmul.mubr.bf16.gmra.mrb[0].mxu0 %v821
    %v860 = vpop.f32.mrb[0].mxu0
    %v861 = vadd.f32 0.0, %v860
    %v862 = vpop.f32.mrb[0].mxu0
    %v863 = vpop.f32.mrb[0].mxu0
    %v864 = vpop.f32.mrb[0].mxu0
    %865 = vdwg.mxu0
    %866 = vrot.lane.b32.xlu0 %v267, 64
    %v867 = vpop.permute.xlu0 %866
    %v869 = vsel %vm276, %v764, 0
    %v872 = vsel %vm95, %v867, 0
    %874 = vmatprep.subr.bf16.mxu0 0
    %875 = vmatpush1.bf16.msra.mxu0 %v872
    %876 = vmatprep.subr.bf16.mxu0 0
    %877 = vmatpush1.bf16.msra.mxu0 0
    %878 = vmatprep.subr.bf16.mxu0 0
    %879 = vmatpush1.bf16.msra.mxu0 0
    %880 = vmatprep.subr.bf16.mxu0 0
    %881 = vmatpush1.bf16.msra.mxu0 0
    %882 = vmatprep.subr.bf16.mxu0 0
    %883 = vmatpush1.bf16.msra.mxu0 0
    %884 = vmatprep.subr.bf16.mxu0 0
    %885 = vmatpush1.bf16.msra.mxu0 0
    %886 = vmatprep.subr.bf16.mxu0 0
    %887 = vmatpush1.bf16.msra.mxu0 0
    %888 = vmatprep.subr.bf16.mxu0 0
    %889 = vmatpush1.bf16.msra.mxu0 0
    %890 = vmatprep.subr.bf16.mxu0 0
    %891 = vmatpush1.bf16.msra.mxu0 0
    %892 = vmatprep.subr.bf16.mxu0 0
    %893 = vmatpush1.bf16.msra.mxu0 0
    %894 = vmatprep.subr.bf16.mxu0 0
    %895 = vmatpush1.bf16.msra.mxu0 0
    %896 = vmatprep.subr.bf16.mxu0 0
    %897 = vmatpush1.bf16.msra.mxu0 0
    %898 = vmatprep.subr.bf16.mxu0 0
    %899 = vmatpush1.bf16.msra.mxu0 0
    %900 = vmatprep.subr.bf16.mxu0 0
    %901 = vmatpush1.bf16.msra.mxu0 0
    %902 = vmatprep.subr.bf16.mxu0 0
    %903 = vmatpush1.bf16.msra.mxu0 0
    %904 = vmatprep.subr.bf16.mxu0 0
    %905 = vmatpush1.bf16.msra.mxu0 0
    %906 = vmatprep.mubr.bf16.mxu0 0
    %907 = vmatmul.mubr.bf16.gmra.mrb[0].mxu0 %v869
    %v908 = vpop.f32.mrb[0].mxu0
    %v909 = vadd.f32 0.0, %v908
    %v910 = vpop.f32.mrb[0].mxu0
    %v911 = vpop.f32.mrb[0].mxu0
    %v912 = vpop.f32.mrb[0].mxu0
    %913 = vdwg.mxu0
    %914 = vrot.lane.b32.xlu0 %v268, 64
    %v915 = vpop.permute.xlu0 %914
    %v917 = vsel %vm276, %v765, 0
    %v920 = vsel %vm95, %v915, 0
    %922 = vmatprep.subr.bf16.mxu0 0
    %923 = vmatpush1.bf16.msra.mxu0 %v920
    %924 = vmatprep.subr.bf16.mxu0 0
    %925 = vmatpush1.bf16.msra.mxu0 0
    %926 = vmatprep.subr.bf16.mxu0 0
    %927 = vmatpush1.bf16.msra.mxu0 0
    %928 = vmatprep.subr.bf16.mxu0 0
    %929 = vmatpush1.bf16.msra.mxu0 0
    %930 = vmatprep.subr.bf16.mxu0 0
    %931 = vmatpush1.bf16.msra.mxu0 0
    %932 = vmatprep.subr.bf16.mxu0 0
    %933 = vmatpush1.bf16.msra.mxu0 0
    %934 = vmatprep.subr.bf16.mxu0 0
    %935 = vmatpush1.bf16.msra.mxu0 0
    %936 = vmatprep.subr.bf16.mxu0 0
    %937 = vmatpush1.bf16.msra.mxu0 0
    %938 = vmatprep.subr.bf16.mxu0 0
    %939 = vmatpush1.bf16.msra.mxu0 0
    %940 = vmatprep.subr.bf16.mxu0 0
    %941 = vmatpush1.bf16.msra.mxu0 0
    %942 = vmatprep.subr.bf16.mxu0 0
    %943 = vmatpush1.bf16.msra.mxu0 0
    %944 = vmatprep.subr.bf16.mxu0 0
    %945 = vmatpush1.bf16.msra.mxu0 0
    %946 = vmatprep.subr.bf16.mxu0 0
    %947 = vmatpush1.bf16.msra.mxu0 0
    %948 = vmatprep.subr.bf16.mxu0 0
    %949 = vmatpush1.bf16.msra.mxu0 0
    %950 = vmatprep.subr.bf16.mxu0 0
    %951 = vmatpush1.bf16.msra.mxu0 0
    %952 = vmatprep.subr.bf16.mxu0 0
    %953 = vmatpush1.bf16.msra.mxu0 0
    %954 = vmatprep.mubr.bf16.mxu0 0
    %955 = vmatmul.mubr.bf16.gmra.mrb[0].mxu0 %v917
    %v956 = vpop.f32.mrb[0].mxu0
    %v957 = vadd.f32 0.0, %v956
    %v958 = vpop.f32.mrb[0].mxu0
    %v959 = vpop.f32.mrb[0].mxu0
    %v960 = vpop.f32.mrb[0].mxu0
    %961 = vdwg.mxu0
    %962 = vrot.lane.b32.xlu0 %v269, 64
    %v963 = vpop.permute.xlu0 %962
    %v965 = vsel %vm276, %v766, 0
    %v968 = vsel %vm95, %v963, 0
    %970 = vmatprep.subr.bf16.mxu0 0
    %971 = vmatpush1.bf16.msra.mxu0 %v968
    %972 = vmatprep.subr.bf16.mxu0 0
    %973 = vmatpush1.bf16.msra.mxu0 0
    %974 = vmatprep.subr.bf16.mxu0 0
    %975 = vmatpush1.bf16.msra.mxu0 0
    %976 = vmatprep.subr.bf16.mxu0 0
    %977 = vmatpush1.bf16.msra.mxu0 0
    %978 = vmatprep.subr.bf16.mxu0 0
    %979 = vmatpush1.bf16.msra.mxu0 0
    %980 = vmatprep.subr.bf16.mxu0 0
    %981 = vmatpush1.bf16.msra.mxu0 0
    %982 = vmatprep.subr.bf16.mxu0 0
    %983 = vmatpush1.bf16.msra.mxu0 0
    %984 = vmatprep.subr.bf16.mxu0 0
    %985 = vmatpush1.bf16.msra.mxu0 0
    %986 = vmatprep.subr.bf16.mxu0 0
    %987 = vmatpush1.bf16.msra.mxu0 0
    %988 = vmatprep.subr.bf16.mxu0 0
    %989 = vmatpush1.bf16.msra.mxu0 0
    %990 = vmatprep.subr.bf16.mxu0 0
    %991 = vmatpush1.bf16.msra.mxu0 0
    %992 = vmatprep.subr.bf16.mxu0 0
    %993 = vmatpush1.bf16.msra.mxu0 0
    %994 = vmatprep.subr.bf16.mxu0 0
    %995 = vmatpush1.bf16.msra.mxu0 0
    %996 = vmatprep.subr.bf16.mxu0 0
    %997 = vmatpush1.bf16.msra.mxu0 0
    %998 = vmatprep.subr.bf16.mxu0 0
    %999 = vmatpush1.bf16.msra.mxu0 0
    %1000 = vmatprep.subr.bf16.mxu0 0
    %1001 = vmatpush1.bf16.msra.mxu0 0
    %1002 = vmatprep.mubr.bf16.mxu0 0
    %1003 = vmatmul.mubr.bf16.gmra.mrb[0].mxu0 %v965
    %v1004 = vpop.f32.mrb[0].mxu0
    %v1005 = vadd.f32 0.0, %v1004
    %v1006 = vpop.f32.mrb[0].mxu0
    %v1007 = vpop.f32.mrb[0].mxu0
    %v1008 = vpop.f32.mrb[0].mxu0
    %1009 = vdwg.mxu0
    %1010 = vrot.lane.b32.xlu0 %v270, 64
    %v1011 = vpop.permute.xlu0 %1010
    %v1013 = vsel %vm276, %v767, 0
    %v1016 = vsel %vm95, %v1011, 0
    %1018 = vmatprep.subr.bf16.mxu0 0
    %1019 = vmatpush1.bf16.msra.mxu0 %v1016
    %1020 = vmatprep.subr.bf16.mxu0 0
    %1021 = vmatpush1.bf16.msra.mxu0 0
    %1022 = vmatprep.subr.bf16.mxu0 0
    %1023 = vmatpush1.bf16.msra.mxu0 0
    %1024 = vmatprep.subr.bf16.mxu0 0
    %1025 = vmatpush1.bf16.msra.mxu0 0
    %1026 = vmatprep.subr.bf16.mxu0 0
    %1027 = vmatpush1.bf16.msra.mxu0 0
    %1028 = vmatprep.subr.bf16.mxu0 0
    %1029 = vmatpush1.bf16.msra.mxu0 0
    %1030 = vmatprep.subr.bf16.mxu0 0
    %1031 = vmatpush1.bf16.msra.mxu0 0
    %1032 = vmatprep.subr.bf16.mxu0 0
    %1033 = vmatpush1.bf16.msra.mxu0 0
    %1034 = vmatprep.subr.bf16.mxu0 0
    %1035 = vmatpush1.bf16.msra.mxu0 0
    %1036 = vmatprep.subr.bf16.mxu0 0
    %1037 = vmatpush1.bf16.msra.mxu0 0
    %1038 = vmatprep.subr.bf16.mxu0 0
    %1039 = vmatpush1.bf16.msra.mxu0 0
    %1040 = vmatprep.subr.bf16.mxu0 0
    %1041 = vmatpush1.bf16.msra.mxu0 0
    %1042 = vmatprep.subr.bf16.mxu0 0
    %1043 = vmatpush1.bf16.msra.mxu0 0
    %1044 = vmatprep.subr.bf16.mxu0 0
    %1045 = vmatpush1.bf16.msra.mxu0 0
    %1046 = vmatprep.subr.bf16.mxu0 0
    %1047 = vmatpush1.bf16.msra.mxu0 0
    %1048 = vmatprep.subr.bf16.mxu0 0
    %1049 = vmatpush1.bf16.msra.mxu0 0
    %1050 = vmatprep.mubr.bf16.mxu0 0
    %1051 = vmatmul.mubr.bf16.gmra.mrb[0].mxu0 %v1013
    %v1052 = vpop.f32.mrb[0].mxu0
    %v1053 = vadd.f32 0.0, %v1052
    %v1054 = vpop.f32.mrb[0].mxu0
    %v1055 = vpop.f32.mrb[0].mxu0
    %v1056 = vpop.f32.mrb[0].mxu0
    %1057 = vdwg.mxu0
    %1058 = vrot.lane.b32.xlu0 %v271, 64
    %v1059 = vpop.permute.xlu0 %1058
    %v1061 = vsel %vm276, %v768, 0
    %v1064 = vsel %vm95, %v1059, 0
    %1066 = vmatprep.subr.bf16.mxu0 0
    %1067 = vmatpush1.bf16.msra.mxu0 %v1064
    %1068 = vmatprep.subr.bf16.mxu0 0
    %1069 = vmatpush1.bf16.msra.mxu0 0
    %1070 = vmatprep.subr.bf16.mxu0 0
    %1071 = vmatpush1.bf16.msra.mxu0 0
    %1072 = vmatprep.subr.bf16.mxu0 0
    %1073 = vmatpush1.bf16.msra.mxu0 0
    %1074 = vmatprep.subr.bf16.mxu0 0
    %1075 = vmatpush1.bf16.msra.mxu0 0
    %1076 = vmatprep.subr.bf16.mxu0 0
    %1077 = vmatpush1.bf16.msra.mxu0 0
    %1078 = vmatprep.subr.bf16.mxu0 0
    %1079 = vmatpush1.bf16.msra.mxu0 0
    %1080 = vmatprep.subr.bf16.mxu0 0
    %1081 = vmatpush1.bf16.msra.mxu0 0
    %1082 = vmatprep.subr.bf16.mxu0 0
    %1083 = vmatpush1.bf16.msra.mxu0 0
    %1084 = vmatprep.subr.bf16.mxu0 0
    %1085 = vmatpush1.bf16.msra.mxu0 0
    %1086 = vmatprep.subr.bf16.mxu0 0
    %1087 = vmatpush1.bf16.msra.mxu0 0
    %1088 = vmatprep.subr.bf16.mxu0 0
    %1089 = vmatpush1.bf16.msra.mxu0 0
    %1090 = vmatprep.subr.bf16.mxu0 0
    %1091 = vmatpush1.bf16.msra.mxu0 0
    %1092 = vmatprep.subr.bf16.mxu0 0
    %1093 = vmatpush1.bf16.msra.mxu0 0
    %1094 = vmatprep.subr.bf16.mxu0 0
    %1095 = vmatpush1.bf16.msra.mxu0 0
    %1096 = vmatprep.subr.bf16.mxu0 0
    %1097 = vmatpush1.bf16.msra.mxu0 0
    %1098 = vmatprep.mubr.bf16.mxu0 0
    %1099 = vmatmul.mubr.bf16.gmra.mrb[0].mxu0 %v1061
    %v1100 = vpop.f32.mrb[0].mxu0
    %v1101 = vadd.f32 0.0, %v1100
    %v1102 = vpop.f32.mrb[0].mxu0
    %v1103 = vpop.f32.mrb[0].mxu0
    %v1104 = vpop.f32.mrb[0].mxu0
    %1105 = vdwg.mxu0
    %1106 = vrot.lane.b32.xlu0 %v272, 64
    %v1107 = vpop.permute.xlu0 %1106
    %v1109 = vsel %vm276, %v769, 0
    %v1112 = vsel %vm95, %v1107, 0
    %1114 = vmatprep.subr.bf16.mxu0 0
    %1115 = vmatpush1.bf16.msra.mxu0 %v1112
    %1116 = vmatprep.subr.bf16.mxu0 0
    %1117 = vmatpush1.bf16.msra.mxu0 0
    %1118 = vmatprep.subr.bf16.mxu0 0
    %1119 = vmatpush1.bf16.msra.mxu0 0
    %1120 = vmatprep.subr.bf16.mxu0 0
    %1121 = vmatpush1.bf16.msra.mxu0 0
    %1122 = vmatprep.subr.bf16.mxu0 0
    %1123 = vmatpush1.bf16.msra.mxu0 0
    %1124 = vmatprep.subr.bf16.mxu0 0
    %1125 = vmatpush1.bf16.msra.mxu0 0
    %1126 = vmatprep.subr.bf16.mxu0 0
    %1127 = vmatpush1.bf16.msra.mxu0 0
    %1128 = vmatprep.subr.bf16.mxu0 0
    %1129 = vmatpush1.bf16.msra.mxu0 0
    %1130 = vmatprep.subr.bf16.mxu0 0
    %1131 = vmatpush1.bf16.msra.mxu0 0
    %1132 = vmatprep.subr.bf16.mxu0 0
    %1133 = vmatpush1.bf16.msra.mxu0 0
    %1134 = vmatprep.subr.bf16.mxu0 0
    %1135 = vmatpush1.bf16.msra.mxu0 0
    %1136 = vmatprep.subr.bf16.mxu0 0
    %1137 = vmatpush1.bf16.msra.mxu0 0
    %1138 = vmatprep.subr.bf16.mxu0 0
    %1139 = vmatpush1.bf16.msra.mxu0 0
    %1140 = vmatprep.subr.bf16.mxu0 0
    %1141 = vmatpush1.bf16.msra.mxu0 0
    %1142 = vmatprep.subr.bf16.mxu0 0
    %1143 = vmatpush1.bf16.msra.mxu0 0
    %1144 = vmatprep.subr.bf16.mxu0 0
    %1145 = vmatpush1.bf16.msra.mxu0 0
    %1146 = vmatprep.mubr.bf16.mxu0 0
    %1147 = vmatmul.mubr.bf16.gmra.mrb[0].mxu0 %v1109
    %v1148 = vpop.f32.mrb[0].mxu0
    %v1149 = vadd.f32 0.0, %v1148
    %v1150 = vpop.f32.mrb[0].mxu0
    %v1151 = vpop.f32.mrb[0].mxu0
    %v1152 = vpop.f32.mrb[0].mxu0
    %1153 = vdwg.mxu0
    %1156 = vrot.lane.b32.xlu0 %v909, 8
    %v1157 = vpop.permute.xlu0 %1156
    %1158 = vrot.lane.b32.xlu0 %v957, 8
    %v1159 = vpop.permute.xlu0 %1158
    %1164 = vrot.lane.b32.xlu0 %v1005, 16
    %v1165 = vpop.permute.xlu0 %1164
    %1166 = vrot.lane.b32.xlu0 %v1053, 16
    %v1167 = vpop.permute.xlu0 %1166
    %1172 = vrot.lane.b32.xlu0 %v1101, 24
    %v1173 = vpop.permute.xlu0 %1172
    %1174 = vrot.lane.b32.xlu0 %v1149, 24
    %v1175 = vpop.permute.xlu0 %1174
    %v1178 = vsel %vm276, %v813, %v1157
    %v1179 = vsel %vm276, %v861, %v1159
    %vm1180 = vcmask 130048
    %v1181 = vsel %vm1180, %v1178, %v1165
    %v1182 = vsel %vm1180, %v1179, %v1167
    %vm1183 = vcmask 195584
    %v1184 = vsel %vm1183, %v1181, %v1173
    %v1185 = vsel %vm1183, %v1182, %v1175
    %v1186 = vpack.c.bf16 %v1185, %v1184
    %1187 = vrot.lane.b32.xlu0 %v197, 32
    %v1188 = vpop.permute.xlu0 %1187
    %1189 = vrot.lane.b32.xlu0 %v198, 32
    %v1190 = vpop.permute.xlu0 %1189
    %v1194 = vsel %vm144, %v1186, 0
    %1196 = vmatprep.subr.bf16.mxu0 0
    %1197 = vmatpush1.bf16.msra.mxu0 %v1188
    %1198 = vmatprep.subr.bf16.mxu0 0
    %1199 = vmatpush1.bf16.msra.mxu0 %v1190
    %1200 = vmatprep.subr.bf16.mxu0 0
    %1201 = vmatpush1.bf16.msra.mxu0 0
    %1202 = vmatprep.subr.bf16.mxu0 0
    %1203 = vmatpush1.bf16.msra.mxu0 0
    %1204 = vmatprep.subr.bf16.mxu0 0
    %1205 = vmatpush1.bf16.msra.mxu0 0
    %1206 = vmatprep.subr.bf16.mxu0 0
    %1207 = vmatpush1.bf16.msra.mxu0 0
    %1208 = vmatprep.subr.bf16.mxu0 0
    %1209 = vmatpush1.bf16.msra.mxu0 0
    %1210 = vmatprep.subr.bf16.mxu0 0
    %1211 = vmatpush1.bf16.msra.mxu0 0
    %1212 = vmatprep.subr.bf16.mxu0 0
    %1213 = vmatpush1.bf16.msra.mxu0 0
    %1214 = vmatprep.subr.bf16.mxu0 0
    %1215 = vmatpush1.bf16.msra.mxu0 0
    %1216 = vmatprep.subr.bf16.mxu0 0
    %1217 = vmatpush1.bf16.msra.mxu0 0
    %1218 = vmatprep.subr.bf16.mxu0 0
    %1219 = vmatpush1.bf16.msra.mxu0 0
    %1220 = vmatprep.subr.bf16.mxu0 0
    %1221 = vmatpush1.bf16.msra.mxu0 0
    %1222 = vmatprep.subr.bf16.mxu0 0
    %1223 = vmatpush1.bf16.msra.mxu0 0
    %1224 = vmatprep.subr.bf16.mxu0 0
    %1225 = vmatpush1.bf16.msra.mxu0 0
    %1226 = vmatprep.subr.bf16.mxu0 0
    %1227 = vmatpush1.bf16.msra.mxu0 0
    %1228 = vmatprep.mubr.bf16.mxu0 0
    %1229 = vmatmul.mubr.bf16.gmra.mrb[0].mxu0 %v1194
    %v1230 = vpop.f32.mrb[0].mxu0
    %v1231 = vadd.f32 0.0, %v1230
    %v1232 = vpop.f32.mrb[0].mxu0
    %v1233 = vpop.f32.mrb[0].mxu0
    %v1234 = vadd.f32 0.0, %v1233
    %v1235 = vpop.f32.mrb[0].mxu0
    %1236 = vdwg.mxu0
    %v1237 = vadd.f32 %v134, %v1231
    %v1238 = vadd.f32 %v137, %v1234
    %v1239 = vlaneseq
    %v1240 = vshrl.u32 %v1239, 7
    %v1241 = vsub.s32 3, %v1240
    %v1242 = vrot.slane %v25, %v1241
    %v1243 = vadd.f32 %v1237, %v1242
    %v1244 = vadd.f32 %v1238, %v1242
    %v1245 = vsel %vm144, %v1243, 0.0
    %1246 = vadd.xlane.f32.xlu0 %v1245
    %v1247 = vpop.xlane.xlu0 %1246
    %v1248 = vsel %vm144, %v1244, 0.0
    %1249 = vadd.xlane.f32.xlu0 %v1248
    %v1250 = vpop.xlane.xlu0 %1249
    %v1251 = vmul.f32 %v1247, %v151
    %v1252 = vmul.f32 %v1250, %v151
    %v1253 = vsub.f32 %v1243, %v1251
    %v1254 = vsub.f32 %v1244, %v1252
    %v1255 = vmul.f32 %v1253, %v1253
    %v1256 = vmul.f32 %v1254, %v1254
    %v1257 = vsel %vm144, %v1255, 0.0
    %1258 = vadd.xlane.f32.xlu0 %v1257
    %v1259 = vpop.xlane.xlu0 %1258
    %v1260 = vsel %vm144, %v1256, 0.0
    %1261 = vadd.xlane.f32.xlu0 %v1260
    %v1262 = vpop.xlane.xlu0 %1261
    %v1263 = vmul.f32 %v1259, %v151
    %v1264 = vmul.f32 %v1262, %v151
    %v1265 = vadd.f32 %v1263, 1e-05
    %v1266 = vadd.f32 %v1264, 1e-05
    %v1267 = vrsqrt.pop %v1265
    %v1268 = vrsqrt.pop %v1266
    %v1269 = vmul.f32 %v1253, %v1267
    %v1270 = vmul.f32 %v1254, %v1268
    %v1271 = vlaneseq
    %v1272 = vshrl.u32 %v1271, 7
    %v1273 = vsub.s32 4, %v1272
    %v1274 = vrot.slane %v25, %v1273
    %v1275 = vmul.f32 %v1269, %v1274
    %v1276 = vmul.f32 %v1270, %v1274
    %v1277 = vlaneseq
    %v1278 = vshrl.u32 %v1277, 7
    %v1279 = vsub.s32 5, %v1278
    %v1280 = vrot.slane %v25, %v1279
    %v1281 = vadd.f32 %v1275, %v1280
    %v1282 = vadd.f32 %v1276, %v1280
    %v1283 = vpack.c.bf16 %v1282, %v1281
    %v1284 = vlaneseq
    %v1285 = vshrl.u32 %v1284, 7
    %v1286 = vsub.s32 6, %v1285
    %v1287 = vrot.slane %v25, %v1286
    %v1288 = vunpack.c.h.b16 %v140
    %v1289 = vunpack.c.h.b16 %v141
    %v1290 = vunpack.c.h.b16 %v142
    %v1291 = vunpack.c.h.b16 %v143
    %v1292 = vpack.c.b16 %v1289, %v1288
    %v1293 = vpack.c.b16 %v1291, %v1290
    %v1297 = vsel %vm144, %v1283, 0
    %1299 = vmatprep.subr.bf16.mxu0 0
    %1300 = vmatpush1.bf16.msra.mxu0 %v1292
    %1301 = vmatprep.subr.bf16.mxu0 0
    %1302 = vmatpush1.bf16.msra.mxu0 %v1293
    %1303 = vmatprep.subr.bf16.mxu0 0
    %1304 = vmatpush1.bf16.msra.mxu0 0
    %1305 = vmatprep.subr.bf16.mxu0 0
    %1306 = vmatpush1.bf16.msra.mxu0 0
    %1307 = vmatprep.subr.bf16.mxu0 0
    %1308 = vmatpush1.bf16.msra.mxu0 0
    %1309 = vmatprep.subr.bf16.mxu0 0
    %1310 = vmatpush1.bf16.msra.mxu0 0
    %1311 = vmatprep.subr.bf16.mxu0 0
    %1312 = vmatpush1.bf16.msra.mxu0 0
    %1313 = vmatprep.subr.bf16.mxu0 0
    %1314 = vmatpush1.bf16.msra.mxu0 0
    %1315 = vmatprep.subr.bf16.mxu0 0
    %1316 = vmatpush1.bf16.msra.mxu0 0
    %1317 = vmatprep.subr.bf16.mxu0 0
    %1318 = vmatpush1.bf16.msra.mxu0 0
    %1319 = vmatprep.subr.bf16.mxu0 0
    %1320 = vmatpush1.bf16.msra.mxu0 0
    %1321 = vmatprep.subr.bf16.mxu0 0
    %1322 = vmatpush1.bf16.msra.mxu0 0
    %1323 = vmatprep.subr.bf16.mxu0 0
    %1324 = vmatpush1.bf16.msra.mxu0 0
    %1325 = vmatprep.subr.bf16.mxu0 0
    %1326 = vmatpush1.bf16.msra.mxu0 0
    %1327 = vmatprep.subr.bf16.mxu0 0
    %1328 = vmatpush1.bf16.msra.mxu0 0
    %1329 = vmatprep.subr.bf16.mxu0 0
    %1330 = vmatpush1.bf16.msra.mxu0 0
    %1331 = vmatprep.mubr.bf16.mxu0 0
    %1332 = vmatmul.mubr.bf16.gmra.mrb[0].mxu0 %v1297
    %v1333 = vpop.f32.mrb[0].mxu0
    %v1334 = vadd.f32 %v1287, %v1333
    %v1335 = vpop.f32.mrb[0].mxu0
    %v1336 = vpop.f32.mrb[0].mxu0
    %v1337 = vadd.f32 %v1287, %v1336
    %v1338 = vpop.f32.mrb[0].mxu0
    %1339 = vdwg.mxu0
    %v1340 = vmax.f32 %v1334, 0.0
    %v1341 = vmax.f32 %v1337, 0.0
    %v1342 = vpack.c.bf16 %v1341, %v1340
    %v1343 = vld [vmem:[%s3] sm:$0xf]
    %v1344 = vld [vmem:[%s3 + $0x4] sm:$0xf]
    %v1345 = vld [vmem:[%s3 + $0x8] sm:$0xf]
    %v1346 = vld [vmem:[%s3 + $0xc] sm:$0xf]
    %v1347 = vld [vmem:[%s3 + $0x10] sm:$0xf]
    %v1348 = vld [vmem:[%s3 + $0x14] sm:$0xf]
    %v1349 = vld [vmem:[%s3 + $0x18] sm:$0xf]
    %v1350 = vld [vmem:[%s3 + $0x1c] sm:$0xf]
    %v1359 = vunpack.c.l.b16 %v1343
    %v1360 = vunpack.c.l.b16 %v1344
    %v1361 = vunpack.c.l.b16 %v1345
    %v1362 = vunpack.c.l.b16 %v1346
    %v1363 = vunpack.c.l.b16 %v1347
    %v1364 = vunpack.c.l.b16 %v1348
    %v1365 = vunpack.c.l.b16 %v1349
    %v1366 = vunpack.c.l.b16 %v1350
    %v1367 = vpack.c.b16 %v1360, %v1359
    %v1368 = vpack.c.b16 %v1362, %v1361
    %v1369 = vpack.c.b16 %v1364, %v1363
    %v1370 = vpack.c.b16 %v1366, %v1365
    %vm1375 = vcmask 523264
    %v1377 = vsel %vm1375, %v1342, 0
    %1379 = vmatprep.subr.bf16.mxu0 0
    %1380 = vmatpush1.bf16.msra.mxu0 %v1367
    %1381 = vmatprep.subr.bf16.mxu0 0
    %1382 = vmatpush1.bf16.msra.mxu0 %v1368
    %1383 = vmatprep.subr.bf16.mxu0 0
    %1384 = vmatpush1.bf16.msra.mxu0 %v1369
    %1385 = vmatprep.subr.bf16.mxu0 0
    %1386 = vmatpush1.bf16.msra.mxu0 %v1370
    %1387 = vmatprep.subr.bf16.mxu0 0
    %1388 = vmatpush1.bf16.msra.mxu0 0
    %1389 = vmatprep.subr.bf16.mxu0 0
    %1390 = vmatpush1.bf16.msra.mxu0 0
    %1391 = vmatprep.subr.bf16.mxu0 0
    %1392 = vmatpush1.bf16.msra.mxu0 0
    %1393 = vmatprep.subr.bf16.mxu0 0
    %1394 = vmatpush1.bf16.msra.mxu0 0
    %1395 = vmatprep.subr.bf16.mxu0 0
    %1396 = vmatpush1.bf16.msra.mxu0 0
    %1397 = vmatprep.subr.bf16.mxu0 0
    %1398 = vmatpush1.bf16.msra.mxu0 0
    %1399 = vmatprep.subr.bf16.mxu0 0
    %1400 = vmatpush1.bf16.msra.mxu0 0
    %1401 = vmatprep.subr.bf16.mxu0 0
    %1402 = vmatpush1.bf16.msra.mxu0 0
    %1403 = vmatprep.subr.bf16.mxu0 0
    %1404 = vmatpush1.bf16.msra.mxu0 0
    %1405 = vmatprep.subr.bf16.mxu0 0
    %1406 = vmatpush1.bf16.msra.mxu0 0
    %1407 = vmatprep.subr.bf16.mxu0 0
    %1408 = vmatpush1.bf16.msra.mxu0 0
    %1409 = vmatprep.subr.bf16.mxu0 0
    %1410 = vmatpush1.bf16.msra.mxu0 0
    %1411 = vmatprep.mubr.bf16.mxu0 0
    %1412 = vmatmul.mubr.bf16.gmra.mrb[0].mxu0 %v1377
    %v1413 = vpop.f32.mrb[0].mxu0
    %v1414 = vadd.f32 0.0, %v1413
    %v1415 = vpop.f32.mrb[0].mxu0
    %v1416 = vpop.f32.mrb[0].mxu0
    %v1417 = vadd.f32 0.0, %v1416
    %v1418 = vpop.f32.mrb[0].mxu0
    %1419 = vdwg.mxu0
    %v1420 = vadd.f32 %v1243, %v1414
    %v1421 = vadd.f32 %v1244, %v1417
    %v1422 = vlaneseq
    %v1423 = vshrl.u32 %v1422, 7
    %v1424 = vsub.s32 7, %v1423
    %v1425 = vrot.slane %v25, %v1424
    %v1426 = vadd.f32 %v1420, %v1425
    %v1427 = vadd.f32 %v1421, %v1425
    %s1428 = scalar_lea.vmem %s2, 32
    %v1429 = vld [vmem:[%s1428] sm:$0xff]
    %v1430 = vld [vmem:[%s1428 + $0x8] sm:$0xff]
    %v1431 = vld [vmem:[%s1428 + $0x10] sm:$0xff]
    %v1432 = vld [vmem:[%s1428 + $0x18] sm:$0xff]
    %v1433 = vsel %vm144, %v1426, 0.0
    %1434 = vadd.xlane.f32.xlu0 %v1433
    %v1435 = vpop.xlane.xlu0 %1434
    %v1436 = vsel %vm144, %v1427, 0.0
    %1437 = vadd.xlane.f32.xlu0 %v1436
    %v1438 = vpop.xlane.xlu0 %1437
    %v1439 = vmul.f32 %v1435, %v151
    %v1440 = vmul.f32 %v1438, %v151
    %v1441 = vsub.f32 %v1426, %v1439
    %v1442 = vsub.f32 %v1427, %v1440
    %v1443 = vmul.f32 %v1441, %v1441
    %v1444 = vmul.f32 %v1442, %v1442
    %v1445 = vsel %vm144, %v1443, 0.0
    %1446 = vadd.xlane.f32.xlu0 %v1445
    %v1447 = vpop.xlane.xlu0 %1446
    %v1448 = vsel %vm144, %v1444, 0.0
    %1449 = vadd.xlane.f32.xlu0 %v1448
    %v1450 = vpop.xlane.xlu0 %1449
    %v1451 = vmul.f32 %v1447, %v151
    %v1452 = vmul.f32 %v1450, %v151
    %v1453 = vadd.f32 %v1451, 1e-05
    %v1454 = vadd.f32 %v1452, 1e-05
    %v1455 = vrsqrt.pop %v1453
    %v1456 = vrsqrt.pop %v1454
    %v1457 = vmul.f32 %v1441, %v1455
    %v1458 = vmul.f32 %v1442, %v1456
    %v1459 = vlaneseq
    %v1460 = vshrl.u32 %v1459, 7
    %v1461 = vsub.s32 0, %v1460
    %v1462 = vrot.slane %v26, %v1461
    %v1463 = vmul.f32 %v1457, %v1462
    %v1464 = vmul.f32 %v1458, %v1462
    %v1465 = vlaneseq
    %v1466 = vshrl.u32 %v1465, 7
    %v1467 = vsub.s32 1, %v1466
    %v1468 = vrot.slane %v26, %v1467
    %v1469 = vadd.f32 %v1463, %v1468
    %v1470 = vadd.f32 %v1464, %v1468
    %v1471 = vpack.c.bf16 %v1470, %v1469
    %v1472 = vlaneseq
    %v1473 = vshrl.u32 %v1472, 7
    %v1474 = vsub.s32 2, %v1473
    %v1475 = vrot.slane %v26, %v1474
    %v1480 = vunpack.c.l.b16 %v1429
    %v1481 = vunpack.c.l.b16 %v1430
    %v1482 = vunpack.c.l.b16 %v1431
    %v1483 = vunpack.c.l.b16 %v1432
    %v1484 = vpack.c.b16 %v1481, %v1480
    %v1485 = vpack.c.b16 %v1483, %v1482
    %v1489 = vsel %vm144, %v1471, 0
    %1491 = vmatprep.subr.bf16.mxu0 0
    %1492 = vmatpush1.bf16.msra.mxu0 %v1484
    %1493 = vmatprep.subr.bf16.mxu0 0
    %1494 = vmatpush1.bf16.msra.mxu0 %v1485
    %1495 = vmatprep.subr.bf16.mxu0 0
    %1496 = vmatpush1.bf16.msra.mxu0 0
    %1497 = vmatprep.subr.bf16.mxu0 0
    %1498 = vmatpush1.bf16.msra.mxu0 0
    %1499 = vmatprep.subr.bf16.mxu0 0
    %1500 = vmatpush1.bf16.msra.mxu0 0
    %1501 = vmatprep.subr.bf16.mxu0 0
    %1502 = vmatpush1.bf16.msra.mxu0 0
    %1503 = vmatprep.subr.bf16.mxu0 0
    %1504 = vmatpush1.bf16.msra.mxu0 0
    %1505 = vmatprep.subr.bf16.mxu0 0
    %1506 = vmatpush1.bf16.msra.mxu0 0
    %1507 = vmatprep.subr.bf16.mxu0 0
    %1508 = vmatpush1.bf16.msra.mxu0 0
    %1509 = vmatprep.subr.bf16.mxu0 0
    %1510 = vmatpush1.bf16.msra.mxu0 0
    %1511 = vmatprep.subr.bf16.mxu0 0
    %1512 = vmatpush1.bf16.msra.mxu0 0
    %1513 = vmatprep.subr.bf16.mxu0 0
    %1514 = vmatpush1.bf16.msra.mxu0 0
    %1515 = vmatprep.subr.bf16.mxu0 0
    %1516 = vmatpush1.bf16.msra.mxu0 0
    %1517 = vmatprep.subr.bf16.mxu0 0
    %1518 = vmatpush1.bf16.msra.mxu0 0
    %1519 = vmatprep.subr.bf16.mxu0 0
    %1520 = vmatpush1.bf16.msra.mxu0 0
    %1521 = vmatprep.subr.bf16.mxu0 0
    %1522 = vmatpush1.bf16.msra.mxu0 0
    %1523 = vmatprep.mubr.bf16.mxu0 0
    %1524 = vmatmul.mubr.bf16.gmra.mrb[0].mxu0 %v1489
    %v1525 = vpop.f32.mrb[0].mxu0
    %v1526 = vadd.f32 %v1475, %v1525
    %v1527 = vpop.f32.mrb[0].mxu0
    %v1528 = vpop.f32.mrb[0].mxu0
    %v1529 = vadd.f32 %v1475, %v1528
    %v1530 = vpop.f32.mrb[0].mxu0
    %1531 = vdwg.mxu0
    %1534 = vrot.lane.b32.xlu0 %v1526, 120
    %v1535 = vpop.permute.xlu0 %1534
    %1536 = vrot.lane.b32.xlu0 %v1529, 120
    %v1537 = vpop.permute.xlu0 %1536
    %1540 = vrot.lane.b32.xlu0 %v1526, 112
    %v1541 = vpop.permute.xlu0 %1540
    %1542 = vrot.lane.b32.xlu0 %v1529, 112
    %v1543 = vpop.permute.xlu0 %1542
    %1546 = vrot.lane.b32.xlu0 %v1526, 104
    %v1547 = vpop.permute.xlu0 %1546
    %1548 = vrot.lane.b32.xlu0 %v1529, 104
    %v1549 = vpop.permute.xlu0 %1548
    %v1552 = vpack.c.bf16 %v1526, %v1526
    %v1553 = vpack.c.bf16 %v1529, %v1529
    %v1554 = vpack.c.bf16 %v1535, %v1535
    %v1555 = vpack.c.bf16 %v1537, %v1537
    %v1556 = vpack.c.bf16 %v1541, %v1541
    %v1557 = vpack.c.bf16 %v1543, %v1543
    %v1558 = vpack.c.bf16 %v1547, %v1547
    %v1559 = vpack.c.bf16 %v1549, %v1549
    %1561 = vrot.lane.b32.xlu0 %v1552, 96
    %v1562 = vpop.permute.xlu0 %1561
    %v1564 = vsel %vm276, %v1552, 0
    %v1567 = vsel %vm276, %v1562, 0
    %1569 = vmatprep.subr.bf16.mxu0 0
    %1570 = vmatpush1.bf16.xpose.msra.mxu0 %v1567
    %1571 = vmatprep.subr.bf16.mxu0 0
    %1572 = vmatpush1.bf16.xpose.msra.mxu0 0
    %1573 = vmatprep.subr.bf16.mxu0 0
    %1574 = vmatpush1.bf16.xpose.msra.mxu0 0
    %1575 = vmatprep.subr.bf16.mxu0 0
    %1576 = vmatpush1.bf16.xpose.msra.mxu0 0
    %1577 = vmatprep.subr.bf16.mxu0 0
    %1578 = vmatpush1.bf16.xpose.msra.mxu0 0
    %1579 = vmatprep.subr.bf16.mxu0 0
    %1580 = vmatpush1.bf16.xpose.msra.mxu0 0
    %1581 = vmatprep.subr.bf16.mxu0 0
    %1582 = vmatpush1.bf16.xpose.msra.mxu0 0
    %1583 = vmatprep.subr.bf16.mxu0 0
    %1584 = vmatpush1.bf16.xpose.msra.mxu0 0
    %1585 = vmatprep.subr.bf16.mxu0 0
    %1586 = vmatpush1.bf16.xpose.msra.mxu0 0
    %1587 = vmatprep.subr.bf16.mxu0 0
    %1588 = vmatpush1.bf16.xpose.msra.mxu0 0
    %1589 = vmatprep.subr.bf16.mxu0 0
    %1590 = vmatpush1.bf16.xpose.msra.mxu0 0
    %1591 = vmatprep.subr.bf16.mxu0 0
    %1592 = vmatpush1.bf16.xpose.msra.mxu0 0
    %1593 = vmatprep.subr.bf16.mxu0 0
    %1594 = vmatpush1.bf16.xpose.msra.mxu0 0
    %1595 = vmatprep.subr.bf16.mxu0 0
    %1596 = vmatpush1.bf16.xpose.msra.mxu0 0
    %1597 = vmatprep.subr.bf16.mxu0 0
    %1598 = vmatpush1.bf16.xpose.msra.mxu0 0
    %1599 = vmatprep.subr.bf16.mxu0 0
    %1600 = vmatpush1.bf16.xpose.msra.mxu0 0
    %1601 = vmatprep.mubr.bf16.mxu0 0
    %1602 = vmatmul.mubr.bf16.gmra.mrb[0].mxu0 %v1564
    %v1603 = vpop.f32.mrb[0].mxu0
    %v1604 = vadd.f32 0.0, %v1603
    %v1605 = vpop.f32.mrb[0].mxu0
    %v1606 = vpop.f32.mrb[0].mxu0
    %v1607 = vpop.f32.mrb[0].mxu0
    %1608 = vdwg.mxu0
    %1610 = vrot.lane.b32.xlu0 %v1553, 96
    %v1611 = vpop.permute.xlu0 %1610
    %v1613 = vsel %vm276, %v1553, 0
    %v1616 = vsel %vm276, %v1611, 0
    %1618 = vmatprep.subr.bf16.mxu0 0
    %1619 = vmatpush1.bf16.xpose.msra.mxu0 %v1616
    %1620 = vmatprep.subr.bf16.mxu0 0
    %1621 = vmatpush1.bf16.xpose.msra.mxu0 0
    %1622 = vmatprep.subr.bf16.mxu0 0
    %1623 = vmatpush1.bf16.xpose.msra.mxu0 0
    %1624 = vmatprep.subr.bf16.mxu0 0
    %1625 = vmatpush1.bf16.xpose.msra.mxu0 0
    %1626 = vmatprep.subr.bf16.mxu0 0
    %1627 = vmatpush1.bf16.xpose.msra.mxu0 0
    %1628 = vmatprep.subr.bf16.mxu0 0
    %1629 = vmatpush1.bf16.xpose.msra.mxu0 0
    %1630 = vmatprep.subr.bf16.mxu0 0
    %1631 = vmatpush1.bf16.xpose.msra.mxu0 0
    %1632 = vmatprep.subr.bf16.mxu0 0
    %1633 = vmatpush1.bf16.xpose.msra.mxu0 0
    %1634 = vmatprep.subr.bf16.mxu0 0
    %1635 = vmatpush1.bf16.xpose.msra.mxu0 0
    %1636 = vmatprep.subr.bf16.mxu0 0
    %1637 = vmatpush1.bf16.xpose.msra.mxu0 0
    %1638 = vmatprep.subr.bf16.mxu0 0
    %1639 = vmatpush1.bf16.xpose.msra.mxu0 0
    %1640 = vmatprep.subr.bf16.mxu0 0
    %1641 = vmatpush1.bf16.xpose.msra.mxu0 0
    %1642 = vmatprep.subr.bf16.mxu0 0
    %1643 = vmatpush1.bf16.xpose.msra.mxu0 0
    %1644 = vmatprep.subr.bf16.mxu0 0
    %1645 = vmatpush1.bf16.xpose.msra.mxu0 0
    %1646 = vmatprep.subr.bf16.mxu0 0
    %1647 = vmatpush1.bf16.xpose.msra.mxu0 0
    %1648 = vmatprep.subr.bf16.mxu0 0
    %1649 = vmatpush1.bf16.xpose.msra.mxu0 0
    %1650 = vmatprep.mubr.bf16.mxu0 0
    %1651 = vmatmul.mubr.bf16.gmra.mrb[0].mxu0 %v1613
    %v1652 = vpop.f32.mrb[0].mxu0
    %v1653 = vadd.f32 0.0, %v1652
    %v1654 = vpop.f32.mrb[0].mxu0
    %v1655 = vpop.f32.mrb[0].mxu0
    %v1656 = vpop.f32.mrb[0].mxu0
    %1657 = vdwg.mxu0
    %1659 = vrot.lane.b32.xlu0 %v1554, 96
    %v1660 = vpop.permute.xlu0 %1659
    %v1662 = vsel %vm276, %v1554, 0
    %v1665 = vsel %vm276, %v1660, 0
    %1667 = vmatprep.subr.bf16.mxu0 0
    %1668 = vmatpush1.bf16.xpose.msra.mxu0 %v1665
    %1669 = vmatprep.subr.bf16.mxu0 0
    %1670 = vmatpush1.bf16.xpose.msra.mxu0 0
    %1671 = vmatprep.subr.bf16.mxu0 0
    %1672 = vmatpush1.bf16.xpose.msra.mxu0 0
    %1673 = vmatprep.subr.bf16.mxu0 0
    %1674 = vmatpush1.bf16.xpose.msra.mxu0 0
    %1675 = vmatprep.subr.bf16.mxu0 0
    %1676 = vmatpush1.bf16.xpose.msra.mxu0 0
    %1677 = vmatprep.subr.bf16.mxu0 0
    %1678 = vmatpush1.bf16.xpose.msra.mxu0 0
    %1679 = vmatprep.subr.bf16.mxu0 0
    %1680 = vmatpush1.bf16.xpose.msra.mxu0 0
    %1681 = vmatprep.subr.bf16.mxu0 0
    %1682 = vmatpush1.bf16.xpose.msra.mxu0 0
    %1683 = vmatprep.subr.bf16.mxu0 0
    %1684 = vmatpush1.bf16.xpose.msra.mxu0 0
    %1685 = vmatprep.subr.bf16.mxu0 0
    %1686 = vmatpush1.bf16.xpose.msra.mxu0 0
    %1687 = vmatprep.subr.bf16.mxu0 0
    %1688 = vmatpush1.bf16.xpose.msra.mxu0 0
    %1689 = vmatprep.subr.bf16.mxu0 0
    %1690 = vmatpush1.bf16.xpose.msra.mxu0 0
    %1691 = vmatprep.subr.bf16.mxu0 0
    %1692 = vmatpush1.bf16.xpose.msra.mxu0 0
    %1693 = vmatprep.subr.bf16.mxu0 0
    %1694 = vmatpush1.bf16.xpose.msra.mxu0 0
    %1695 = vmatprep.subr.bf16.mxu0 0
    %1696 = vmatpush1.bf16.xpose.msra.mxu0 0
    %1697 = vmatprep.subr.bf16.mxu0 0
    %1698 = vmatpush1.bf16.xpose.msra.mxu0 0
    %1699 = vmatprep.mubr.bf16.mxu0 0
    %1700 = vmatmul.mubr.bf16.gmra.mrb[0].mxu0 %v1662
    %v1701 = vpop.f32.mrb[0].mxu0
    %v1702 = vadd.f32 0.0, %v1701
    %v1703 = vpop.f32.mrb[0].mxu0
    %v1704 = vpop.f32.mrb[0].mxu0
    %v1705 = vpop.f32.mrb[0].mxu0
    %1706 = vdwg.mxu0
    %1708 = vrot.lane.b32.xlu0 %v1555, 96
    %v1709 = vpop.permute.xlu0 %1708
    %v1711 = vsel %vm276, %v1555, 0
    %v1714 = vsel %vm276, %v1709, 0
    %1716 = vmatprep.subr.bf16.mxu0 0
    %1717 = vmatpush1.bf16.xpose.msra.mxu0 %v1714
    %1718 = vmatprep.subr.bf16.mxu0 0
    %1719 = vmatpush1.bf16.xpose.msra.mxu0 0
    %1720 = vmatprep.subr.bf16.mxu0 0
    %1721 = vmatpush1.bf16.xpose.msra.mxu0 0
    %1722 = vmatprep.subr.bf16.mxu0 0
    %1723 = vmatpush1.bf16.xpose.msra.mxu0 0
    %1724 = vmatprep.subr.bf16.mxu0 0
    %1725 = vmatpush1.bf16.xpose.msra.mxu0 0
    %1726 = vmatprep.subr.bf16.mxu0 0
    %1727 = vmatpush1.bf16.xpose.msra.mxu0 0
    %1728 = vmatprep.subr.bf16.mxu0 0
    %1729 = vmatpush1.bf16.xpose.msra.mxu0 0
    %1730 = vmatprep.subr.bf16.mxu0 0
    %1731 = vmatpush1.bf16.xpose.msra.mxu0 0
    %1732 = vmatprep.subr.bf16.mxu0 0
    %1733 = vmatpush1.bf16.xpose.msra.mxu0 0
    %1734 = vmatprep.subr.bf16.mxu0 0
    %1735 = vmatpush1.bf16.xpose.msra.mxu0 0
    %1736 = vmatprep.subr.bf16.mxu0 0
    %1737 = vmatpush1.bf16.xpose.msra.mxu0 0
    %1738 = vmatprep.subr.bf16.mxu0 0
    %1739 = vmatpush1.bf16.xpose.msra.mxu0 0
    %1740 = vmatprep.subr.bf16.mxu0 0
    %1741 = vmatpush1.bf16.xpose.msra.mxu0 0
    %1742 = vmatprep.subr.bf16.mxu0 0
    %1743 = vmatpush1.bf16.xpose.msra.mxu0 0
    %1744 = vmatprep.subr.bf16.mxu0 0
    %1745 = vmatpush1.bf16.xpose.msra.mxu0 0
    %1746 = vmatprep.subr.bf16.mxu0 0
    %1747 = vmatpush1.bf16.xpose.msra.mxu0 0
    %1748 = vmatprep.mubr.bf16.mxu0 0
    %1749 = vmatmul.mubr.bf16.gmra.mrb[0].mxu0 %v1711
    %v1750 = vpop.f32.mrb[0].mxu0
    %v1751 = vadd.f32 0.0, %v1750
    %v1752 = vpop.f32.mrb[0].mxu0
    %v1753 = vpop.f32.mrb[0].mxu0
    %v1754 = vpop.f32.mrb[0].mxu0
    %1755 = vdwg.mxu0
    %1757 = vrot.lane.b32.xlu0 %v1556, 96
    %v1758 = vpop.permute.xlu0 %1757
    %v1760 = vsel %vm276, %v1556, 0
    %v1763 = vsel %vm276, %v1758, 0
    %1765 = vmatprep.subr.bf16.mxu0 0
    %1766 = vmatpush1.bf16.xpose.msra.mxu0 %v1763
    %1767 = vmatprep.subr.bf16.mxu0 0
    %1768 = vmatpush1.bf16.xpose.msra.mxu0 0
    %1769 = vmatprep.subr.bf16.mxu0 0
    %1770 = vmatpush1.bf16.xpose.msra.mxu0 0
    %1771 = vmatprep.subr.bf16.mxu0 0
    %1772 = vmatpush1.bf16.xpose.msra.mxu0 0
    %1773 = vmatprep.subr.bf16.mxu0 0
    %1774 = vmatpush1.bf16.xpose.msra.mxu0 0
    %1775 = vmatprep.subr.bf16.mxu0 0
    %1776 = vmatpush1.bf16.xpose.msra.mxu0 0
    %1777 = vmatprep.subr.bf16.mxu0 0
    %1778 = vmatpush1.bf16.xpose.msra.mxu0 0
    %1779 = vmatprep.subr.bf16.mxu0 0
    %1780 = vmatpush1.bf16.xpose.msra.mxu0 0
    %1781 = vmatprep.subr.bf16.mxu0 0
    %1782 = vmatpush1.bf16.xpose.msra.mxu0 0
    %1783 = vmatprep.subr.bf16.mxu0 0
    %1784 = vmatpush1.bf16.xpose.msra.mxu0 0
    %1785 = vmatprep.subr.bf16.mxu0 0
    %1786 = vmatpush1.bf16.xpose.msra.mxu0 0
    %1787 = vmatprep.subr.bf16.mxu0 0
    %1788 = vmatpush1.bf16.xpose.msra.mxu0 0
    %1789 = vmatprep.subr.bf16.mxu0 0
    %1790 = vmatpush1.bf16.xpose.msra.mxu0 0
    %1791 = vmatprep.subr.bf16.mxu0 0
    %1792 = vmatpush1.bf16.xpose.msra.mxu0 0
    %1793 = vmatprep.subr.bf16.mxu0 0
    %1794 = vmatpush1.bf16.xpose.msra.mxu0 0
    %1795 = vmatprep.subr.bf16.mxu0 0
    %1796 = vmatpush1.bf16.xpose.msra.mxu0 0
    %1797 = vmatprep.mubr.bf16.mxu0 0
    %1798 = vmatmul.mubr.bf16.gmra.mrb[0].mxu0 %v1760
    %v1799 = vpop.f32.mrb[0].mxu0
    %v1800 = vadd.f32 0.0, %v1799
    %v1801 = vpop.f32.mrb[0].mxu0
    %v1802 = vpop.f32.mrb[0].mxu0
    %v1803 = vpop.f32.mrb[0].mxu0
    %1804 = vdwg.mxu0
    %1806 = vrot.lane.b32.xlu0 %v1557, 96
    %v1807 = vpop.permute.xlu0 %1806
    %v1809 = vsel %vm276, %v1557, 0
    %v1812 = vsel %vm276, %v1807, 0
    %1814 = vmatprep.subr.bf16.mxu0 0
    %1815 = vmatpush1.bf16.xpose.msra.mxu0 %v1812
    %1816 = vmatprep.subr.bf16.mxu0 0
    %1817 = vmatpush1.bf16.xpose.msra.mxu0 0
    %1818 = vmatprep.subr.bf16.mxu0 0
    %1819 = vmatpush1.bf16.xpose.msra.mxu0 0
    %1820 = vmatprep.subr.bf16.mxu0 0
    %1821 = vmatpush1.bf16.xpose.msra.mxu0 0
    %1822 = vmatprep.subr.bf16.mxu0 0
    %1823 = vmatpush1.bf16.xpose.msra.mxu0 0
    %1824 = vmatprep.subr.bf16.mxu0 0
    %1825 = vmatpush1.bf16.xpose.msra.mxu0 0
    %1826 = vmatprep.subr.bf16.mxu0 0
    %1827 = vmatpush1.bf16.xpose.msra.mxu0 0
    %1828 = vmatprep.subr.bf16.mxu0 0
    %1829 = vmatpush1.bf16.xpose.msra.mxu0 0
    %1830 = vmatprep.subr.bf16.mxu0 0
    %1831 = vmatpush1.bf16.xpose.msra.mxu0 0
    %1832 = vmatprep.subr.bf16.mxu0 0
    %1833 = vmatpush1.bf16.xpose.msra.mxu0 0
    %1834 = vmatprep.subr.bf16.mxu0 0
    %1835 = vmatpush1.bf16.xpose.msra.mxu0 0
    %1836 = vmatprep.subr.bf16.mxu0 0
    %1837 = vmatpush1.bf16.xpose.msra.mxu0 0
    %1838 = vmatprep.subr.bf16.mxu0 0
    %1839 = vmatpush1.bf16.xpose.msra.mxu0 0
    %1840 = vmatprep.subr.bf16.mxu0 0
    %1841 = vmatpush1.bf16.xpose.msra.mxu0 0
    %1842 = vmatprep.subr.bf16.mxu0 0
    %1843 = vmatpush1.bf16.xpose.msra.mxu0 0
    %1844 = vmatprep.subr.bf16.mxu0 0
    %1845 = vmatpush1.bf16.xpose.msra.mxu0 0
    %1846 = vmatprep.mubr.bf16.mxu0 0
    %1847 = vmatmul.mubr.bf16.gmra.mrb[0].mxu0 %v1809
    %v1848 = vpop.f32.mrb[0].mxu0
    %v1849 = vadd.f32 0.0, %v1848
    %v1850 = vpop.f32.mrb[0].mxu0
    %v1851 = vpop.f32.mrb[0].mxu0
    %v1852 = vpop.f32.mrb[0].mxu0
    %1853 = vdwg.mxu0
    %1855 = vrot.lane.b32.xlu0 %v1558, 96
    %v1856 = vpop.permute.xlu0 %1855
    %v1858 = vsel %vm276, %v1558, 0
    %v1861 = vsel %vm276, %v1856, 0
    %1863 = vmatprep.subr.bf16.mxu0 0
    %1864 = vmatpush1.bf16.xpose.msra.mxu0 %v1861
    %1865 = vmatprep.subr.bf16.mxu0 0
    %1866 = vmatpush1.bf16.xpose.msra.mxu0 0
    %1867 = vmatprep.subr.bf16.mxu0 0
    %1868 = vmatpush1.bf16.xpose.msra.mxu0 0
    %1869 = vmatprep.subr.bf16.mxu0 0
    %1870 = vmatpush1.bf16.xpose.msra.mxu0 0
    %1871 = vmatprep.subr.bf16.mxu0 0
    %1872 = vmatpush1.bf16.xpose.msra.mxu0 0
    %1873 = vmatprep.subr.bf16.mxu0 0
    %1874 = vmatpush1.bf16.xpose.msra.mxu0 0
    %1875 = vmatprep.subr.bf16.mxu0 0
    %1876 = vmatpush1.bf16.xpose.msra.mxu0 0
    %1877 = vmatprep.subr.bf16.mxu0 0
    %1878 = vmatpush1.bf16.xpose.msra.mxu0 0
    %1879 = vmatprep.subr.bf16.mxu0 0
    %1880 = vmatpush1.bf16.xpose.msra.mxu0 0
    %1881 = vmatprep.subr.bf16.mxu0 0
    %1882 = vmatpush1.bf16.xpose.msra.mxu0 0
    %1883 = vmatprep.subr.bf16.mxu0 0
    %1884 = vmatpush1.bf16.xpose.msra.mxu0 0
    %1885 = vmatprep.subr.bf16.mxu0 0
    %1886 = vmatpush1.bf16.xpose.msra.mxu0 0
    %1887 = vmatprep.subr.bf16.mxu0 0
    %1888 = vmatpush1.bf16.xpose.msra.mxu0 0
    %1889 = vmatprep.subr.bf16.mxu0 0
    %1890 = vmatpush1.bf16.xpose.msra.mxu0 0
    %1891 = vmatprep.subr.bf16.mxu0 0
    %1892 = vmatpush1.bf16.xpose.msra.mxu0 0
    %1893 = vmatprep.subr.bf16.mxu0 0
    %1894 = vmatpush1.bf16.xpose.msra.mxu0 0
    %1895 = vmatprep.mubr.bf16.mxu0 0
    %1896 = vmatmul.mubr.bf16.gmra.mrb[0].mxu0 %v1858
    %v1897 = vpop.f32.mrb[0].mxu0
    %v1898 = vadd.f32 0.0, %v1897
    %v1899 = vpop.f32.mrb[0].mxu0
    %v1900 = vpop.f32.mrb[0].mxu0
    %v1901 = vpop.f32.mrb[0].mxu0
    %1902 = vdwg.mxu0
    %1904 = vrot.lane.b32.xlu0 %v1559, 96
    %v1905 = vpop.permute.xlu0 %1904
    %v1907 = vsel %vm276, %v1559, 0
    %v1910 = vsel %vm276, %v1905, 0
    %1912 = vmatprep.subr.bf16.mxu0 0
    %1913 = vmatpush1.bf16.xpose.msra.mxu0 %v1910
    %1914 = vmatprep.subr.bf16.mxu0 0
    %1915 = vmatpush1.bf16.xpose.msra.mxu0 0
    %1916 = vmatprep.subr.bf16.mxu0 0
    %1917 = vmatpush1.bf16.xpose.msra.mxu0 0
    %1918 = vmatprep.subr.bf16.mxu0 0
    %1919 = vmatpush1.bf16.xpose.msra.mxu0 0
    %1920 = vmatprep.subr.bf16.mxu0 0
    %1921 = vmatpush1.bf16.xpose.msra.mxu0 0
    %1922 = vmatprep.subr.bf16.mxu0 0
    %1923 = vmatpush1.bf16.xpose.msra.mxu0 0
    %1924 = vmatprep.subr.bf16.mxu0 0
    %1925 = vmatpush1.bf16.xpose.msra.mxu0 0
    %1926 = vmatprep.subr.bf16.mxu0 0
    %1927 = vmatpush1.bf16.xpose.msra.mxu0 0
    %1928 = vmatprep.subr.bf16.mxu0 0
    %1929 = vmatpush1.bf16.xpose.msra.mxu0 0
    %1930 = vmatprep.subr.bf16.mxu0 0
    %1931 = vmatpush1.bf16.xpose.msra.mxu0 0
    %1932 = vmatprep.subr.bf16.mxu0 0
    %1933 = vmatpush1.bf16.xpose.msra.mxu0 0
    %1934 = vmatprep.subr.bf16.mxu0 0
    %1935 = vmatpush1.bf16.xpose.msra.mxu0 0
    %1936 = vmatprep.subr.bf16.mxu0 0
    %1937 = vmatpush1.bf16.xpose.msra.mxu0 0
    %1938 = vmatprep.subr.bf16.mxu0 0
    %1939 = vmatpush1.bf16.xpose.msra.mxu0 0
    %1940 = vmatprep.subr.bf16.mxu0 0
    %1941 = vmatpush1.bf16.xpose.msra.mxu0 0
    %1942 = vmatprep.subr.bf16.mxu0 0
    %1943 = vmatpush1.bf16.xpose.msra.mxu0 0
    %1944 = vmatprep.mubr.bf16.mxu0 0
    %1945 = vmatmul.mubr.bf16.gmra.mrb[0].mxu0 %v1907
    %v1946 = vpop.f32.mrb[0].mxu0
    %v1947 = vadd.f32 0.0, %v1946
    %v1948 = vpop.f32.mrb[0].mxu0
    %v1949 = vpop.f32.mrb[0].mxu0
    %v1950 = vpop.f32.mrb[0].mxu0
    %1951 = vdwg.mxu0
    %v1952 = vmul.f32 %v1604, 0.35355338
    %v1953 = vmul.f32 %v1653, 0.35355338
    %v1954 = vmul.f32 %v1702, 0.35355338
    %v1955 = vmul.f32 %v1751, 0.35355338
    %v1956 = vmul.f32 %v1800, 0.35355338
    %v1957 = vmul.f32 %v1849, 0.35355338
    %v1958 = vmul.f32 %v1898, 0.35355338
    %v1959 = vmul.f32 %v1947, 0.35355338
    %v1960 = vsel %vm276, %v1952, -inf
    %1961 = vmax.xlane.f32.xlu0 %v1960
    %v1962 = vpop.xlane.xlu0 %1961
    %v1963 = vsel %vm276, %v1953, -inf
    %1964 = vmax.xlane.f32.xlu0 %v1963
    %v1965 = vpop.xlane.xlu0 %1964
    %v1966 = vsel %vm276, %v1954, -inf
    %1967 = vmax.xlane.f32.xlu0 %v1966
    %v1968 = vpop.xlane.xlu0 %1967
    %v1969 = vsel %vm276, %v1955, -inf
    %1970 = vmax.xlane.f32.xlu0 %v1969
    %v1971 = vpop.xlane.xlu0 %1970
    %v1972 = vsel %vm276, %v1956, -inf
    %1973 = vmax.xlane.f32.xlu0 %v1972
    %v1974 = vpop.xlane.xlu0 %1973
    %v1975 = vsel %vm276, %v1957, -inf
    %1976 = vmax.xlane.f32.xlu0 %v1975
    %v1977 = vpop.xlane.xlu0 %1976
    %v1978 = vsel %vm276, %v1958, -inf
    %1979 = vmax.xlane.f32.xlu0 %v1978
    %v1980 = vpop.xlane.xlu0 %1979
    %v1981 = vsel %vm276, %v1959, -inf
    %1982 = vmax.xlane.f32.xlu0 %v1981
    %v1983 = vpop.xlane.xlu0 %1982
    %v1984 = vsub.f32 %v1952, %v1962
    %v1985 = vsub.f32 %v1953, %v1965
    %v1986 = vsub.f32 %v1954, %v1968
    %v1987 = vsub.f32 %v1955, %v1971
    %v1988 = vsub.f32 %v1956, %v1974
    %v1989 = vsub.f32 %v1957, %v1977
    %v1990 = vsub.f32 %v1958, %v1980
    %v1991 = vsub.f32 %v1959, %v1983
    %v1992 = vmul.f32 %v1984, 1.442695
    %v1993 = vpow.pop %v1992
    %v1994 = vmul.f32 %v1985, 1.442695
    %v1995 = vpow.pop %v1994
    %v1996 = vmul.f32 %v1986, 1.442695
    %v1997 = vpow.pop %v1996
    %v1998 = vmul.f32 %v1987, 1.442695
    %v1999 = vpow.pop %v1998
    %v2000 = vmul.f32 %v1988, 1.442695
    %v2001 = vpow.pop %v2000
    %v2002 = vmul.f32 %v1989, 1.442695
    %v2003 = vpow.pop %v2002
    %v2004 = vmul.f32 %v1990, 1.442695
    %v2005 = vpow.pop %v2004
    %v2006 = vmul.f32 %v1991, 1.442695
    %v2007 = vpow.pop %v2006
    %v2008 = vsel %vm276, %v1993, 0.0
    %2009 = vadd.xlane.f32.xlu0 %v2008
    %v2010 = vpop.xlane.xlu0 %2009
    %v2011 = vsel %vm276, %v1995, 0.0
    %2012 = vadd.xlane.f32.xlu0 %v2011
    %v2013 = vpop.xlane.xlu0 %2012
    %v2014 = vsel %vm276, %v1997, 0.0
    %2015 = vadd.xlane.f32.xlu0 %v2014
    %v2016 = vpop.xlane.xlu0 %2015
    %v2017 = vsel %vm276, %v1999, 0.0
    %2018 = vadd.xlane.f32.xlu0 %v2017
    %v2019 = vpop.xlane.xlu0 %2018
    %v2020 = vsel %vm276, %v2001, 0.0
    %2021 = vadd.xlane.f32.xlu0 %v2020
    %v2022 = vpop.xlane.xlu0 %2021
    %v2023 = vsel %vm276, %v2003, 0.0
    %2024 = vadd.xlane.f32.xlu0 %v2023
    %v2025 = vpop.xlane.xlu0 %2024
    %v2026 = vsel %vm276, %v2005, 0.0
    %2027 = vadd.xlane.f32.xlu0 %v2026
    %v2028 = vpop.xlane.xlu0 %2027
    %v2029 = vsel %vm276, %v2007, 0.0
    %2030 = vadd.xlane.f32.xlu0 %v2029
    %v2031 = vpop.xlane.xlu0 %2030
    %v2032 = vrcp.pop %v2010
    %v2033 = vmul.f32 %v1993, %v2032
    %v2034 = vrcp.pop %v2013
    %v2035 = vmul.f32 %v1995, %v2034
    %v2036 = vrcp.pop %v2016
    %v2037 = vmul.f32 %v1997, %v2036
    %v2038 = vrcp.pop %v2019
    %v2039 = vmul.f32 %v1999, %v2038
    %v2040 = vrcp.pop %v2022
    %v2041 = vmul.f32 %v2001, %v2040
    %v2042 = vrcp.pop %v2025
    %v2043 = vmul.f32 %v2003, %v2042
    %v2044 = vrcp.pop %v2028
    %v2045 = vmul.f32 %v2005, %v2044
    %v2046 = vrcp.pop %v2031
    %v2047 = vmul.f32 %v2007, %v2046
    %v2048 = vpack.c.bf16 %v2033, %v2033
    %v2049 = vpack.c.bf16 %v2035, %v2035
    %v2050 = vpack.c.bf16 %v2037, %v2037
    %v2051 = vpack.c.bf16 %v2039, %v2039
    %v2052 = vpack.c.bf16 %v2041, %v2041
    %v2053 = vpack.c.bf16 %v2043, %v2043
    %v2054 = vpack.c.bf16 %v2045, %v2045
    %v2055 = vpack.c.bf16 %v2047, %v2047
    %2056 = vrot.lane.b32.xlu0 %v1552, 64
    %v2057 = vpop.permute.xlu0 %2056
    %v2059 = vsel %vm276, %v2048, 0
    %v2062 = vsel %vm95, %v2057, 0
    %2064 = vmatprep.subr.bf16.mxu0 0
    %2065 = vmatpush1.bf16.msra.mxu0 %v2062
    %2066 = vmatprep.subr.bf16.mxu0 0
    %2067 = vmatpush1.bf16.msra.mxu0 0
    %2068 = vmatprep.subr.bf16.mxu0 0
    %2069 = vmatpush1.bf16.msra.mxu0 0
    %2070 = vmatprep.subr.bf16.mxu0 0
    %2071 = vmatpush1.bf16.msra.mxu0 0
    %2072 = vmatprep.subr.bf16.mxu0 0
    %2073 = vmatpush1.bf16.msra.mxu0 0
    %2074 = vmatprep.subr.bf16.mxu0 0
    %2075 = vmatpush1.bf16.msra.mxu0 0
    %2076 = vmatprep.subr.bf16.mxu0 0
    %2077 = vmatpush1.bf16.msra.mxu0 0
    %2078 = vmatprep.subr.bf16.mxu0 0
    %2079 = vmatpush1.bf16.msra.mxu0 0
    %2080 = vmatprep.subr.bf16.mxu0 0
    %2081 = vmatpush1.bf16.msra.mxu0 0
    %2082 = vmatprep.subr.bf16.mxu0 0
    %2083 = vmatpush1.bf16.msra.mxu0 0
    %2084 = vmatprep.subr.bf16.mxu0 0
    %2085 = vmatpush1.bf16.msra.mxu0 0
    %2086 = vmatprep.subr.bf16.mxu0 0
    %2087 = vmatpush1.bf16.msra.mxu0 0
    %2088 = vmatprep.subr.bf16.mxu0 0
    %2089 = vmatpush1.bf16.msra.mxu0 0
    %2090 = vmatprep.subr.bf16.mxu0 0
    %2091 = vmatpush1.bf16.msra.mxu0 0
    %2092 = vmatprep.subr.bf16.mxu0 0
    %2093 = vmatpush1.bf16.msra.mxu0 0
    %2094 = vmatprep.subr.bf16.mxu0 0
    %2095 = vmatpush1.bf16.msra.mxu0 0
    %2096 = vmatprep.mubr.bf16.mxu0 0
    %2097 = vmatmul.mubr.bf16.gmra.mrb[0].mxu0 %v2059
    %v2098 = vpop.f32.mrb[0].mxu0
    %v2099 = vadd.f32 0.0, %v2098
    %v2100 = vpop.f32.mrb[0].mxu0
    %v2101 = vpop.f32.mrb[0].mxu0
    %v2102 = vpop.f32.mrb[0].mxu0
    %2103 = vdwg.mxu0
    %2104 = vrot.lane.b32.xlu0 %v1553, 64
    %v2105 = vpop.permute.xlu0 %2104
    %v2107 = vsel %vm276, %v2049, 0
    %v2110 = vsel %vm95, %v2105, 0
    %2112 = vmatprep.subr.bf16.mxu0 0
    %2113 = vmatpush1.bf16.msra.mxu0 %v2110
    %2114 = vmatprep.subr.bf16.mxu0 0
    %2115 = vmatpush1.bf16.msra.mxu0 0
    %2116 = vmatprep.subr.bf16.mxu0 0
    %2117 = vmatpush1.bf16.msra.mxu0 0
    %2118 = vmatprep.subr.bf16.mxu0 0
    %2119 = vmatpush1.bf16.msra.mxu0 0
    %2120 = vmatprep.subr.bf16.mxu0 0
    %2121 = vmatpush1.bf16.msra.mxu0 0
    %2122 = vmatprep.subr.bf16.mxu0 0
    %2123 = vmatpush1.bf16.msra.mxu0 0
    %2124 = vmatprep.subr.bf16.mxu0 0
    %2125 = vmatpush1.bf16.msra.mxu0 0
    %2126 = vmatprep.subr.bf16.mxu0 0
    %2127 = vmatpush1.bf16.msra.mxu0 0
    %2128 = vmatprep.subr.bf16.mxu0 0
    %2129 = vmatpush1.bf16.msra.mxu0 0
    %2130 = vmatprep.subr.bf16.mxu0 0
    %2131 = vmatpush1.bf16.msra.mxu0 0
    %2132 = vmatprep.subr.bf16.mxu0 0
    %2133 = vmatpush1.bf16.msra.mxu0 0
    %2134 = vmatprep.subr.bf16.mxu0 0
    %2135 = vmatpush1.bf16.msra.mxu0 0
    %2136 = vmatprep.subr.bf16.mxu0 0
    %2137 = vmatpush1.bf16.msra.mxu0 0
    %2138 = vmatprep.subr.bf16.mxu0 0
    %2139 = vmatpush1.bf16.msra.mxu0 0
    %2140 = vmatprep.subr.bf16.mxu0 0
    %2141 = vmatpush1.bf16.msra.mxu0 0
    %2142 = vmatprep.subr.bf16.mxu0 0
    %2143 = vmatpush1.bf16.msra.mxu0 0
    %2144 = vmatprep.mubr.bf16.mxu0 0
    %2145 = vmatmul.mubr.bf16.gmra.mrb[0].mxu0 %v2107
    %v2146 = vpop.f32.mrb[0].mxu0
    %v2147 = vadd.f32 0.0, %v2146
    %v2148 = vpop.f32.mrb[0].mxu0
    %v2149 = vpop.f32.mrb[0].mxu0
    %v2150 = vpop.f32.mrb[0].mxu0
    %2151 = vdwg.mxu0
    %2152 = vrot.lane.b32.xlu0 %v1554, 64
    %v2153 = vpop.permute.xlu0 %2152
    %v2155 = vsel %vm276, %v2050, 0
    %v2158 = vsel %vm95, %v2153, 0
    %2160 = vmatprep.subr.bf16.mxu0 0
    %2161 = vmatpush1.bf16.msra.mxu0 %v2158
    %2162 = vmatprep.subr.bf16.mxu0 0
    %2163 = vmatpush1.bf16.msra.mxu0 0
    %2164 = vmatprep.subr.bf16.mxu0 0
    %2165 = vmatpush1.bf16.msra.mxu0 0
    %2166 = vmatprep.subr.bf16.mxu0 0
    %2167 = vmatpush1.bf16.msra.mxu0 0
    %2168 = vmatprep.subr.bf16.mxu0 0
    %2169 = vmatpush1.bf16.msra.mxu0 0
    %2170 = vmatprep.subr.bf16.mxu0 0
    %2171 = vmatpush1.bf16.msra.mxu0 0
    %2172 = vmatprep.subr.bf16.mxu0 0
    %2173 = vmatpush1.bf16.msra.mxu0 0
    %2174 = vmatprep.subr.bf16.mxu0 0
    %2175 = vmatpush1.bf16.msra.mxu0 0
    %2176 = vmatprep.subr.bf16.mxu0 0
    %2177 = vmatpush1.bf16.msra.mxu0 0
    %2178 = vmatprep.subr.bf16.mxu0 0
    %2179 = vmatpush1.bf16.msra.mxu0 0
    %2180 = vmatprep.subr.bf16.mxu0 0
    %2181 = vmatpush1.bf16.msra.mxu0 0
    %2182 = vmatprep.subr.bf16.mxu0 0
    %2183 = vmatpush1.bf16.msra.mxu0 0
    %2184 = vmatprep.subr.bf16.mxu0 0
    %2185 = vmatpush1.bf16.msra.mxu0 0
    %2186 = vmatprep.subr.bf16.mxu0 0
    %2187 = vmatpush1.bf16.msra.mxu0 0
    %2188 = vmatprep.subr.bf16.mxu0 0
    %2189 = vmatpush1.bf16.msra.mxu0 0
    %2190 = vmatprep.subr.bf16.mxu0 0
    %2191 = vmatpush1.bf16.msra.mxu0 0
    %2192 = vmatprep.mubr.bf16.mxu0 0
    %2193 = vmatmul.mubr.bf16.gmra.mrb[0].mxu0 %v2155
    %v2194 = vpop.f32.mrb[0].mxu0
    %v2195 = vadd.f32 0.0, %v2194
    %v2196 = vpop.f32.mrb[0].mxu0
    %v2197 = vpop.f32.mrb[0].mxu0
    %v2198 = vpop.f32.mrb[0].mxu0
    %2199 = vdwg.mxu0
    %2200 = vrot.lane.b32.xlu0 %v1555, 64
    %v2201 = vpop.permute.xlu0 %2200
    %v2203 = vsel %vm276, %v2051, 0
    %v2206 = vsel %vm95, %v2201, 0
    %2208 = vmatprep.subr.bf16.mxu0 0
    %2209 = vmatpush1.bf16.msra.mxu0 %v2206
    %2210 = vmatprep.subr.bf16.mxu0 0
    %2211 = vmatpush1.bf16.msra.mxu0 0
    %2212 = vmatprep.subr.bf16.mxu0 0
    %2213 = vmatpush1.bf16.msra.mxu0 0
    %2214 = vmatprep.subr.bf16.mxu0 0
    %2215 = vmatpush1.bf16.msra.mxu0 0
    %2216 = vmatprep.subr.bf16.mxu0 0
    %2217 = vmatpush1.bf16.msra.mxu0 0
    %2218 = vmatprep.subr.bf16.mxu0 0
    %2219 = vmatpush1.bf16.msra.mxu0 0
    %2220 = vmatprep.subr.bf16.mxu0 0
    %2221 = vmatpush1.bf16.msra.mxu0 0
    %2222 = vmatprep.subr.bf16.mxu0 0
    %2223 = vmatpush1.bf16.msra.mxu0 0
    %2224 = vmatprep.subr.bf16.mxu0 0
    %2225 = vmatpush1.bf16.msra.mxu0 0
    %2226 = vmatprep.subr.bf16.mxu0 0
    %2227 = vmatpush1.bf16.msra.mxu0 0
    %2228 = vmatprep.subr.bf16.mxu0 0
    %2229 = vmatpush1.bf16.msra.mxu0 0
    %2230 = vmatprep.subr.bf16.mxu0 0
    %2231 = vmatpush1.bf16.msra.mxu0 0
    %2232 = vmatprep.subr.bf16.mxu0 0
    %2233 = vmatpush1.bf16.msra.mxu0 0
    %2234 = vmatprep.subr.bf16.mxu0 0
    %2235 = vmatpush1.bf16.msra.mxu0 0
    %2236 = vmatprep.subr.bf16.mxu0 0
    %2237 = vmatpush1.bf16.msra.mxu0 0
    %2238 = vmatprep.subr.bf16.mxu0 0
    %2239 = vmatpush1.bf16.msra.mxu0 0
    %2240 = vmatprep.mubr.bf16.mxu0 0
    %2241 = vmatmul.mubr.bf16.gmra.mrb[0].mxu0 %v2203
    %v2242 = vpop.f32.mrb[0].mxu0
    %v2243 = vadd.f32 0.0, %v2242
    %v2244 = vpop.f32.mrb[0].mxu0
    %v2245 = vpop.f32.mrb[0].mxu0
    %v2246 = vpop.f32.mrb[0].mxu0
    %2247 = vdwg.mxu0
    %2248 = vrot.lane.b32.xlu0 %v1556, 64
    %v2249 = vpop.permute.xlu0 %2248
    %v2251 = vsel %vm276, %v2052, 0
    %v2254 = vsel %vm95, %v2249, 0
    %2256 = vmatprep.subr.bf16.mxu0 0
    %2257 = vmatpush1.bf16.msra.mxu0 %v2254
    %2258 = vmatprep.subr.bf16.mxu0 0
    %2259 = vmatpush1.bf16.msra.mxu0 0
    %2260 = vmatprep.subr.bf16.mxu0 0
    %2261 = vmatpush1.bf16.msra.mxu0 0
    %2262 = vmatprep.subr.bf16.mxu0 0
    %2263 = vmatpush1.bf16.msra.mxu0 0
    %2264 = vmatprep.subr.bf16.mxu0 0
    %2265 = vmatpush1.bf16.msra.mxu0 0
    %2266 = vmatprep.subr.bf16.mxu0 0
    %2267 = vmatpush1.bf16.msra.mxu0 0
    %2268 = vmatprep.subr.bf16.mxu0 0
    %2269 = vmatpush1.bf16.msra.mxu0 0
    %2270 = vmatprep.subr.bf16.mxu0 0
    %2271 = vmatpush1.bf16.msra.mxu0 0
    %2272 = vmatprep.subr.bf16.mxu0 0
    %2273 = vmatpush1.bf16.msra.mxu0 0
    %2274 = vmatprep.subr.bf16.mxu0 0
    %2275 = vmatpush1.bf16.msra.mxu0 0
    %2276 = vmatprep.subr.bf16.mxu0 0
    %2277 = vmatpush1.bf16.msra.mxu0 0
    %2278 = vmatprep.subr.bf16.mxu0 0
    %2279 = vmatpush1.bf16.msra.mxu0 0
    %2280 = vmatprep.subr.bf16.mxu0 0
    %2281 = vmatpush1.bf16.msra.mxu0 0
    %2282 = vmatprep.subr.bf16.mxu0 0
    %2283 = vmatpush1.bf16.msra.mxu0 0
    %2284 = vmatprep.subr.bf16.mxu0 0
    %2285 = vmatpush1.bf16.msra.mxu0 0
    %2286 = vmatprep.subr.bf16.mxu0 0
    %2287 = vmatpush1.bf16.msra.mxu0 0
    %2288 = vmatprep.mubr.bf16.mxu0 0
    %2289 = vmatmul.mubr.bf16.gmra.mrb[0].mxu0 %v2251
    %v2290 = vpop.f32.mrb[0].mxu0
    %v2291 = vadd.f32 0.0, %v2290
    %v2292 = vpop.f32.mrb[0].mxu0
    %v2293 = vpop.f32.mrb[0].mxu0
    %v2294 = vpop.f32.mrb[0].mxu0
    %2295 = vdwg.mxu0
    %2296 = vrot.lane.b32.xlu0 %v1557, 64
    %v2297 = vpop.permute.xlu0 %2296
    %v2299 = vsel %vm276, %v2053, 0
    %v2302 = vsel %vm95, %v2297, 0
    %2304 = vmatprep.subr.bf16.mxu0 0
    %2305 = vmatpush1.bf16.msra.mxu0 %v2302
    %2306 = vmatprep.subr.bf16.mxu0 0
    %2307 = vmatpush1.bf16.msra.mxu0 0
    %2308 = vmatprep.subr.bf16.mxu0 0
    %2309 = vmatpush1.bf16.msra.mxu0 0
    %2310 = vmatprep.subr.bf16.mxu0 0
    %2311 = vmatpush1.bf16.msra.mxu0 0
    %2312 = vmatprep.subr.bf16.mxu0 0
    %2313 = vmatpush1.bf16.msra.mxu0 0
    %2314 = vmatprep.subr.bf16.mxu0 0
    %2315 = vmatpush1.bf16.msra.mxu0 0
    %2316 = vmatprep.subr.bf16.mxu0 0
    %2317 = vmatpush1.bf16.msra.mxu0 0
    %2318 = vmatprep.subr.bf16.mxu0 0
    %2319 = vmatpush1.bf16.msra.mxu0 0
    %2320 = vmatprep.subr.bf16.mxu0 0
    %2321 = vmatpush1.bf16.msra.mxu0 0
    %2322 = vmatprep.subr.bf16.mxu0 0
    %2323 = vmatpush1.bf16.msra.mxu0 0
    %2324 = vmatprep.subr.bf16.mxu0 0
    %2325 = vmatpush1.bf16.msra.mxu0 0
    %2326 = vmatprep.subr.bf16.mxu0 0
    %2327 = vmatpush1.bf16.msra.mxu0 0
    %2328 = vmatprep.subr.bf16.mxu0 0
    %2329 = vmatpush1.bf16.msra.mxu0 0
    %2330 = vmatprep.subr.bf16.mxu0 0
    %2331 = vmatpush1.bf16.msra.mxu0 0
    %2332 = vmatprep.subr.bf16.mxu0 0
    %2333 = vmatpush1.bf16.msra.mxu0 0
    %2334 = vmatprep.subr.bf16.mxu0 0
    %2335 = vmatpush1.bf16.msra.mxu0 0
    %2336 = vmatprep.mubr.bf16.mxu0 0
    %2337 = vmatmul.mubr.bf16.gmra.mrb[0].mxu0 %v2299
    %v2338 = vpop.f32.mrb[0].mxu0
    %v2339 = vadd.f32 0.0, %v2338
    %v2340 = vpop.f32.mrb[0].mxu0
    %v2341 = vpop.f32.mrb[0].mxu0
    %v2342 = vpop.f32.mrb[0].mxu0
    %2343 = vdwg.mxu0
    %2344 = vrot.lane.b32.xlu0 %v1558, 64
    %v2345 = vpop.permute.xlu0 %2344
    %v2347 = vsel %vm276, %v2054, 0
    %v2350 = vsel %vm95, %v2345, 0
    %2352 = vmatprep.subr.bf16.mxu0 0
    %2353 = vmatpush1.bf16.msra.mxu0 %v2350
    %2354 = vmatprep.subr.bf16.mxu0 0
    %2355 = vmatpush1.bf16.msra.mxu0 0
    %2356 = vmatprep.subr.bf16.mxu0 0
    %2357 = vmatpush1.bf16.msra.mxu0 0
    %2358 = vmatprep.subr.bf16.mxu0 0
    %2359 = vmatpush1.bf16.msra.mxu0 0
    %2360 = vmatprep.subr.bf16.mxu0 0
    %2361 = vmatpush1.bf16.msra.mxu0 0
    %2362 = vmatprep.subr.bf16.mxu0 0
    %2363 = vmatpush1.bf16.msra.mxu0 0
    %2364 = vmatprep.subr.bf16.mxu0 0
    %2365 = vmatpush1.bf16.msra.mxu0 0
    %2366 = vmatprep.subr.bf16.mxu0 0
    %2367 = vmatpush1.bf16.msra.mxu0 0
    %2368 = vmatprep.subr.bf16.mxu0 0
    %2369 = vmatpush1.bf16.msra.mxu0 0
    %2370 = vmatprep.subr.bf16.mxu0 0
    %2371 = vmatpush1.bf16.msra.mxu0 0
    %2372 = vmatprep.subr.bf16.mxu0 0
    %2373 = vmatpush1.bf16.msra.mxu0 0
    %2374 = vmatprep.subr.bf16.mxu0 0
    %2375 = vmatpush1.bf16.msra.mxu0 0
    %2376 = vmatprep.subr.bf16.mxu0 0
    %2377 = vmatpush1.bf16.msra.mxu0 0
    %2378 = vmatprep.subr.bf16.mxu0 0
    %2379 = vmatpush1.bf16.msra.mxu0 0
    %2380 = vmatprep.subr.bf16.mxu0 0
    %2381 = vmatpush1.bf16.msra.mxu0 0
    %2382 = vmatprep.subr.bf16.mxu0 0
    %2383 = vmatpush1.bf16.msra.mxu0 0
    %2384 = vmatprep.mubr.bf16.mxu0 0
    %2385 = vmatmul.mubr.bf16.gmra.mrb[0].mxu0 %v2347
    %v2386 = vpop.f32.mrb[0].mxu0
    %v2387 = vadd.f32 0.0, %v2386
    %v2388 = vpop.f32.mrb[0].mxu0
    %v2389 = vpop.f32.mrb[0].mxu0
    %v2390 = vpop.f32.mrb[0].mxu0
    %2391 = vdwg.mxu0
    %2392 = vrot.lane.b32.xlu0 %v1559, 64
    %v2393 = vpop.permute.xlu0 %2392
    %v2395 = vsel %vm276, %v2055, 0
    %v2398 = vsel %vm95, %v2393, 0
    %2400 = vmatprep.subr.bf16.mxu0 0
    %2401 = vmatpush1.bf16.msra.mxu0 %v2398
    %2402 = vmatprep.subr.bf16.mxu0 0
    %2403 = vmatpush1.bf16.msra.mxu0 0
    %2404 = vmatprep.subr.bf16.mxu0 0
    %2405 = vmatpush1.bf16.msra.mxu0 0
    %2406 = vmatprep.subr.bf16.mxu0 0
    %2407 = vmatpush1.bf16.msra.mxu0 0
    %2408 = vmatprep.subr.bf16.mxu0 0
    %2409 = vmatpush1.bf16.msra.mxu0 0
    %2410 = vmatprep.subr.bf16.mxu0 0
    %2411 = vmatpush1.bf16.msra.mxu0 0
    %2412 = vmatprep.subr.bf16.mxu0 0
    %2413 = vmatpush1.bf16.msra.mxu0 0
    %2414 = vmatprep.subr.bf16.mxu0 0
    %2415 = vmatpush1.bf16.msra.mxu0 0
    %2416 = vmatprep.subr.bf16.mxu0 0
    %2417 = vmatpush1.bf16.msra.mxu0 0
    %2418 = vmatprep.subr.bf16.mxu0 0
    %2419 = vmatpush1.bf16.msra.mxu0 0
    %2420 = vmatprep.subr.bf16.mxu0 0
    %2421 = vmatpush1.bf16.msra.mxu0 0
    %2422 = vmatprep.subr.bf16.mxu0 0
    %2423 = vmatpush1.bf16.msra.mxu0 0
    %2424 = vmatprep.subr.bf16.mxu0 0
    %2425 = vmatpush1.bf16.msra.mxu0 0
    %2426 = vmatprep.subr.bf16.mxu0 0
    %2427 = vmatpush1.bf16.msra.mxu0 0
    %2428 = vmatprep.subr.bf16.mxu0 0
    %2429 = vmatpush1.bf16.msra.mxu0 0
    %2430 = vmatprep.subr.bf16.mxu0 0
    %2431 = vmatpush1.bf16.msra.mxu0 0
    %2432 = vmatprep.mubr.bf16.mxu0 0
    %2433 = vmatmul.mubr.bf16.gmra.mrb[0].mxu0 %v2395
    %v2434 = vpop.f32.mrb[0].mxu0
    %v2435 = vadd.f32 0.0, %v2434
    %v2436 = vpop.f32.mrb[0].mxu0
    %v2437 = vpop.f32.mrb[0].mxu0
    %v2438 = vpop.f32.mrb[0].mxu0
    %2439 = vdwg.mxu0
    %2442 = vrot.lane.b32.xlu0 %v2195, 8
    %v2443 = vpop.permute.xlu0 %2442
    %2444 = vrot.lane.b32.xlu0 %v2243, 8
    %v2445 = vpop.permute.xlu0 %2444
    %2450 = vrot.lane.b32.xlu0 %v2291, 16
    %v2451 = vpop.permute.xlu0 %2450
    %2452 = vrot.lane.b32.xlu0 %v2339, 16
    %v2453 = vpop.permute.xlu0 %2452
    %2458 = vrot.lane.b32.xlu0 %v2387, 24
    %v2459 = vpop.permute.xlu0 %2458
    %2460 = vrot.lane.b32.xlu0 %v2435, 24
    %v2461 = vpop.permute.xlu0 %2460
    %v2464 = vsel %vm276, %v2099, %v2443
    %v2465 = vsel %vm276, %v2147, %v2445
    %v2466 = vsel %vm1180, %v2464, %v2451
    %v2467 = vsel %vm1180, %v2465, %v2453
    %v2468 = vsel %vm1183, %v2466, %v2459
    %v2469 = vsel %vm1183, %v2467, %v2461
    %v2470 = vpack.c.bf16 %v2469, %v2468
    %2471 = vrot.lane.b32.xlu0 %v1484, 32
    %v2472 = vpop.permute.xlu0 %2471
    %2473 = vrot.lane.b32.xlu0 %v1485, 32
    %v2474 = vpop.permute.xlu0 %2473
    %v2478 = vsel %vm144, %v2470, 0
    %2480 = vmatprep.subr.bf16.mxu0 0
    %2481 = vmatpush1.bf16.msra.mxu0 %v2472
    %2482 = vmatprep.subr.bf16.mxu0 0
    %2483 = vmatpush1.bf16.msra.mxu0 %v2474
    %2484 = vmatprep.subr.bf16.mxu0 0
    %2485 = vmatpush1.bf16.msra.mxu0 0
    %2486 = vmatprep.subr.bf16.mxu0 0
    %2487 = vmatpush1.bf16.msra.mxu0 0
    %2488 = vmatprep.subr.bf16.mxu0 0
    %2489 = vmatpush1.bf16.msra.mxu0 0
    %2490 = vmatprep.subr.bf16.mxu0 0
    %2491 = vmatpush1.bf16.msra.mxu0 0
    %2492 = vmatprep.subr.bf16.mxu0 0
    %2493 = vmatpush1.bf16.msra.mxu0 0
    %2494 = vmatprep.subr.bf16.mxu0 0
    %2495 = vmatpush1.bf16.msra.mxu0 0
    %2496 = vmatprep.subr.bf16.mxu0 0
    %2497 = vmatpush1.bf16.msra.mxu0 0
    %2498 = vmatprep.subr.bf16.mxu0 0
    %2499 = vmatpush1.bf16.msra.mxu0 0
    %2500 = vmatprep.subr.bf16.mxu0 0
    %2501 = vmatpush1.bf16.msra.mxu0 0
    %2502 = vmatprep.subr.bf16.mxu0 0
    %2503 = vmatpush1.bf16.msra.mxu0 0
    %2504 = vmatprep.subr.bf16.mxu0 0
    %2505 = vmatpush1.bf16.msra.mxu0 0
    %2506 = vmatprep.subr.bf16.mxu0 0
    %2507 = vmatpush1.bf16.msra.mxu0 0
    %2508 = vmatprep.subr.bf16.mxu0 0
    %2509 = vmatpush1.bf16.msra.mxu0 0
    %2510 = vmatprep.subr.bf16.mxu0 0
    %2511 = vmatpush1.bf16.msra.mxu0 0
    %2512 = vmatprep.mubr.bf16.mxu0 0
    %2513 = vmatmul.mubr.bf16.gmra.mrb[0].mxu0 %v2478
    %v2514 = vpop.f32.mrb[0].mxu0
    %v2515 = vadd.f32 0.0, %v2514
    %v2516 = vpop.f32.mrb[0].mxu0
    %v2517 = vpop.f32.mrb[0].mxu0
    %v2518 = vadd.f32 0.0, %v2517
    %v2519 = vpop.f32.mrb[0].mxu0
    %2520 = vdwg.mxu0
    %v2521 = vadd.f32 %v1426, %v2515
    %v2522 = vadd.f32 %v1427, %v2518
    %v2523 = vlaneseq
    %v2524 = vshrl.u32 %v2523, 7
    %v2525 = vsub.s32 3, %v2524
    %v2526 = vrot.slane %v26, %v2525
    %v2527 = vadd.f32 %v2521, %v2526
    %v2528 = vadd.f32 %v2522, %v2526
    %v2529 = vsel %vm144, %v2527, 0.0
    %2530 = vadd.xlane.f32.xlu0 %v2529
    %v2531 = vpop.xlane.xlu0 %2530
    %v2532 = vsel %vm144, %v2528, 0.0
    %2533 = vadd.xlane.f32.xlu0 %v2532
    %v2534 = vpop.xlane.xlu0 %2533
    %v2535 = vmul.f32 %v2531, %v151
    %v2536 = vmul.f32 %v2534, %v151
    %v2537 = vsub.f32 %v2527, %v2535
    %v2538 = vsub.f32 %v2528, %v2536
    %v2539 = vmul.f32 %v2537, %v2537
    %v2540 = vmul.f32 %v2538, %v2538
    %v2541 = vsel %vm144, %v2539, 0.0
    %2542 = vadd.xlane.f32.xlu0 %v2541
    %v2543 = vpop.xlane.xlu0 %2542
    %v2544 = vsel %vm144, %v2540, 0.0
    %2545 = vadd.xlane.f32.xlu0 %v2544
    %v2546 = vpop.xlane.xlu0 %2545
    %v2547 = vmul.f32 %v2543, %v151
    %v2548 = vmul.f32 %v2546, %v151
    %v2549 = vadd.f32 %v2547, 1e-05
    %v2550 = vadd.f32 %v2548, 1e-05
    %v2551 = vrsqrt.pop %v2549
    %v2552 = vrsqrt.pop %v2550
    %v2553 = vmul.f32 %v2537, %v2551
    %v2554 = vmul.f32 %v2538, %v2552
    %v2555 = vlaneseq
    %v2556 = vshrl.u32 %v2555, 7
    %v2557 = vsub.s32 4, %v2556
    %v2558 = vrot.slane %v26, %v2557
    %v2559 = vmul.f32 %v2553, %v2558
    %v2560 = vmul.f32 %v2554, %v2558
    %v2561 = vlaneseq
    %v2562 = vshrl.u32 %v2561, 7
    %v2563 = vsub.s32 5, %v2562
    %v2564 = vrot.slane %v26, %v2563
    %v2565 = vadd.f32 %v2559, %v2564
    %v2566 = vadd.f32 %v2560, %v2564
    %v2567 = vpack.c.bf16 %v2566, %v2565
    %v2568 = vlaneseq
    %v2569 = vshrl.u32 %v2568, 7
    %v2570 = vsub.s32 6, %v2569
    %v2571 = vrot.slane %v26, %v2570
    %v2572 = vunpack.c.h.b16 %v1429
    %v2573 = vunpack.c.h.b16 %v1430
    %v2574 = vunpack.c.h.b16 %v1431
    %v2575 = vunpack.c.h.b16 %v1432
    %v2576 = vpack.c.b16 %v2573, %v2572
    %v2577 = vpack.c.b16 %v2575, %v2574
    %v2581 = vsel %vm144, %v2567, 0
    %2583 = vmatprep.subr.bf16.mxu0 0
    %2584 = vmatpush1.bf16.msra.mxu0 %v2576
    %2585 = vmatprep.subr.bf16.mxu0 0
    %2586 = vmatpush1.bf16.msra.mxu0 %v2577
    %2587 = vmatprep.subr.bf16.mxu0 0
    %2588 = vmatpush1.bf16.msra.mxu0 0
    %2589 = vmatprep.subr.bf16.mxu0 0
    %2590 = vmatpush1.bf16.msra.mxu0 0
    %2591 = vmatprep.subr.bf16.mxu0 0
    %2592 = vmatpush1.bf16.msra.mxu0 0
    %2593 = vmatprep.subr.bf16.mxu0 0
    %2594 = vmatpush1.bf16.msra.mxu0 0
    %2595 = vmatprep.subr.bf16.mxu0 0
    %2596 = vmatpush1.bf16.msra.mxu0 0
    %2597 = vmatprep.subr.bf16.mxu0 0
    %2598 = vmatpush1.bf16.msra.mxu0 0
    %2599 = vmatprep.subr.bf16.mxu0 0
    %2600 = vmatpush1.bf16.msra.mxu0 0
    %2601 = vmatprep.subr.bf16.mxu0 0
    %2602 = vmatpush1.bf16.msra.mxu0 0
    %2603 = vmatprep.subr.bf16.mxu0 0
    %2604 = vmatpush1.bf16.msra.mxu0 0
    %2605 = vmatprep.subr.bf16.mxu0 0
    %2606 = vmatpush1.bf16.msra.mxu0 0
    %2607 = vmatprep.subr.bf16.mxu0 0
    %2608 = vmatpush1.bf16.msra.mxu0 0
    %2609 = vmatprep.subr.bf16.mxu0 0
    %2610 = vmatpush1.bf16.msra.mxu0 0
    %2611 = vmatprep.subr.bf16.mxu0 0
    %2612 = vmatpush1.bf16.msra.mxu0 0
    %2613 = vmatprep.subr.bf16.mxu0 0
    %2614 = vmatpush1.bf16.msra.mxu0 0
    %2615 = vmatprep.mubr.bf16.mxu0 0
    %2616 = vmatmul.mubr.bf16.gmra.mrb[0].mxu0 %v2581
    %v2617 = vpop.f32.mrb[0].mxu0
    %v2618 = vadd.f32 %v2571, %v2617
    %v2619 = vpop.f32.mrb[0].mxu0
    %v2620 = vpop.f32.mrb[0].mxu0
    %v2621 = vadd.f32 %v2571, %v2620
    %v2622 = vpop.f32.mrb[0].mxu0
    %2623 = vdwg.mxu0
    %v2624 = vmax.f32 %v2618, 0.0
    %v2625 = vmax.f32 %v2621, 0.0
    %v2626 = vpack.c.bf16 %v2625, %v2624
    %s2627 = scalar_lea.vmem %s3, 32
    %v2628 = vld [vmem:[%s2627] sm:$0xf]
    %v2629 = vld [vmem:[%s2627 + $0x4] sm:$0xf]
    %v2630 = vld [vmem:[%s2627 + $0x8] sm:$0xf]
    %v2631 = vld [vmem:[%s2627 + $0xc] sm:$0xf]
    %v2632 = vld [vmem:[%s2627 + $0x10] sm:$0xf]
    %v2633 = vld [vmem:[%s2627 + $0x14] sm:$0xf]
    %v2634 = vld [vmem:[%s2627 + $0x18] sm:$0xf]
    %v2635 = vld [vmem:[%s2627 + $0x1c] sm:$0xf]
    %v2644 = vunpack.c.l.b16 %v2628
    %v2645 = vunpack.c.l.b16 %v2629
    %v2646 = vunpack.c.l.b16 %v2630
    %v2647 = vunpack.c.l.b16 %v2631
    %v2648 = vunpack.c.l.b16 %v2632
    %v2649 = vunpack.c.l.b16 %v2633
    %v2650 = vunpack.c.l.b16 %v2634
    %v2651 = vunpack.c.l.b16 %v2635
    %v2652 = vpack.c.b16 %v2645, %v2644
    %v2653 = vpack.c.b16 %v2647, %v2646
    %v2654 = vpack.c.b16 %v2649, %v2648
    %v2655 = vpack.c.b16 %v2651, %v2650
    %v2661 = vsel %vm1375, %v2626, 0
    %2663 = vmatprep.subr.bf16.mxu0 0
    %2664 = vmatpush1.bf16.msra.mxu0 %v2652
    %2665 = vmatprep.subr.bf16.mxu0 0
    %2666 = vmatpush1.bf16.msra.mxu0 %v2653
    %2667 = vmatprep.subr.bf16.mxu0 0
    %2668 = vmatpush1.bf16.msra.mxu0 %v2654
    %2669 = vmatprep.subr.bf16.mxu0 0
    %2670 = vmatpush1.bf16.msra.mxu0 %v2655
    %2671 = vmatprep.subr.bf16.mxu0 0
    %2672 = vmatpush1.bf16.msra.mxu0 0
    %2673 = vmatprep.subr.bf16.mxu0 0
    %2674 = vmatpush1.bf16.msra.mxu0 0
    %2675 = vmatprep.subr.bf16.mxu0 0
    %2676 = vmatpush1.bf16.msra.mxu0 0
    %2677 = vmatprep.subr.bf16.mxu0 0
    %2678 = vmatpush1.bf16.msra.mxu0 0
    %2679 = vmatprep.subr.bf16.mxu0 0
    %2680 = vmatpush1.bf16.msra.mxu0 0
    %2681 = vmatprep.subr.bf16.mxu0 0
    %2682 = vmatpush1.bf16.msra.mxu0 0
    %2683 = vmatprep.subr.bf16.mxu0 0
    %2684 = vmatpush1.bf16.msra.mxu0 0
    %2685 = vmatprep.subr.bf16.mxu0 0
    %2686 = vmatpush1.bf16.msra.mxu0 0
    %2687 = vmatprep.subr.bf16.mxu0 0
    %2688 = vmatpush1.bf16.msra.mxu0 0
    %2689 = vmatprep.subr.bf16.mxu0 0
    %2690 = vmatpush1.bf16.msra.mxu0 0
    %2691 = vmatprep.subr.bf16.mxu0 0
    %2692 = vmatpush1.bf16.msra.mxu0 0
    %2693 = vmatprep.subr.bf16.mxu0 0
    %2694 = vmatpush1.bf16.msra.mxu0 0
    %2695 = vmatprep.mubr.bf16.mxu0 0
    %2696 = vmatmul.mubr.bf16.gmra.mrb[0].mxu0 %v2661
    %v2697 = vpop.f32.mrb[0].mxu0
    %v2698 = vadd.f32 0.0, %v2697
    %v2699 = vpop.f32.mrb[0].mxu0
    %v2700 = vpop.f32.mrb[0].mxu0
    %v2701 = vadd.f32 0.0, %v2700
    %v2702 = vpop.f32.mrb[0].mxu0
    %2703 = vdwg.mxu0
    %v2704 = vadd.f32 %v2527, %v2698
    %v2705 = vadd.f32 %v2528, %v2701
    %v2706 = vlaneseq
    %v2707 = vshrl.u32 %v2706, 7
    %v2708 = vsub.s32 7, %v2707
    %v2709 = vrot.slane %v26, %v2708
    %v2710 = vadd.f32 %v2704, %v2709
    %v2711 = vadd.f32 %v2705, %v2709
    %v2712 = vsel %vm144, %v2710, 0.0
    %v2713 = vrot.slane %v2712, 4
    %v2714 = vadd.f32 %v2712, %v2713
    %v2715 = vrot.slane %v2714, 2
    %v2716 = vadd.f32 %v2714, %v2715
    %v2717 = vrot.slane %v2716, 1
    %v2718 = vadd.f32 %v2716, %v2717
    %v2719 = vsel %vm144, %v2711, 0.0
    %v2720 = vrot.slane %v2719, 4
    %v2721 = vadd.f32 %v2719, %v2720
    %v2722 = vrot.slane %v2721, 2
    %v2723 = vadd.f32 %v2721, %v2722
    %v2724 = vrot.slane %v2723, 1
    %v2725 = vadd.f32 %v2723, %v2724
    %v2726 = vrcp.pop 8.0
    %v2727 = vmul.f32 %v2718, %v2726
    %v2728 = vmul.f32 %v2725, %v2726
    %v2729 = vpack.c.bf16 %v2727, %v2727
    %v2730 = vpack.c.bf16 %v2728, %v2728
    %v2731 = vld [vmem:[%s4] sm:$0xf]
    %v2732 = vld [vmem:[%s4 + $0x4] sm:$0xf]
    %v2733 = vld [vmem:[%s4 + $0x8] sm:$0xf]
    %v2734 = vld [vmem:[%s4 + $0xc] sm:$0xf]
    %v2735 = vlaneseq
    %v2736 = vshrl.u32 %v2735, 7
    %v2737 = vsub.s32 0, %v2736
    %v2738 = vrot.slane %v27, %v2737
    %v2741 = vunpack.c.l.b16 %v2729
    %v2742 = vunpack.c.l.b16 %v2730
    %vm2743 = vcmask 1041409
    %v2744 = vsel %vm2743, %v2742, %v2741
    %v2745 = vpack.c.b16 %v2744, %v2744
    %v2750 = vunpack.c.l.b16 %v2731
    %v2751 = vunpack.c.l.b16 %v2732
    %v2752 = vunpack.c.l.b16 %v2733
    %v2753 = vunpack.c.l.b16 %v2734
    %v2754 = vpack.c.b16 %v2751, %v2750
    %v2755 = vpack.c.b16 %v2753, %v2752
    %v2759 = vsel %vm144, %v2745, 0
    %2761 = vmatprep.subr.bf16.mxu0 0
    %2762 = vmatpush1.bf16.msra.mxu0 %v2754
    %2763 = vmatprep.subr.bf16.mxu0 0
    %2764 = vmatpush1.bf16.msra.mxu0 %v2755
    %2765 = vmatprep.subr.bf16.mxu0 0
    %2766 = vmatpush1.bf16.msra.mxu0 0
    %2767 = vmatprep.subr.bf16.mxu0 0
    %2768 = vmatpush1.bf16.msra.mxu0 0
    %2769 = vmatprep.subr.bf16.mxu0 0
    %2770 = vmatpush1.bf16.msra.mxu0 0
    %2771 = vmatprep.subr.bf16.mxu0 0
    %2772 = vmatpush1.bf16.msra.mxu0 0
    %2773 = vmatprep.subr.bf16.mxu0 0
    %2774 = vmatpush1.bf16.msra.mxu0 0
    %2775 = vmatprep.subr.bf16.mxu0 0
    %2776 = vmatpush1.bf16.msra.mxu0 0
    %2777 = vmatprep.subr.bf16.mxu0 0
    %2778 = vmatpush1.bf16.msra.mxu0 0
    %2779 = vmatprep.subr.bf16.mxu0 0
    %2780 = vmatpush1.bf16.msra.mxu0 0
    %2781 = vmatprep.subr.bf16.mxu0 0
    %2782 = vmatpush1.bf16.msra.mxu0 0
    %2783 = vmatprep.subr.bf16.mxu0 0
    %2784 = vmatpush1.bf16.msra.mxu0 0
    %2785 = vmatprep.subr.bf16.mxu0 0
    %2786 = vmatpush1.bf16.msra.mxu0 0
    %2787 = vmatprep.subr.bf16.mxu0 0
    %2788 = vmatpush1.bf16.msra.mxu0 0
    %2789 = vmatprep.subr.bf16.mxu0 0
    %2790 = vmatpush1.bf16.msra.mxu0 0
    %2791 = vmatprep.subr.bf16.mxu0 0
    %2792 = vmatpush1.bf16.msra.mxu0 0
    %2793 = vmatprep.mubr.bf16.mxu0 0
    %2794 = vmatmul.mubr.bf16.gmra.mrb[0].mxu0 %v2759
    %v2795 = vpop.f32.mrb[0].mxu0
    %v2796 = vadd.f32 %v2738, %v2795
    %v2797 = vpop.f32.mrb[0].mxu0
    %v2798 = vpop.f32.mrb[0].mxu0
    %v2799 = vpop.f32.mrb[0].mxu0
    %2800 = vdwg.mxu0
    %vm2801 = vcmask 123904
    %v2802 = vsel %vm2801, %v2796, 0.0
    %2803 = vadd.xlane.f32.xlu0 %v2802
    %v2804 = vpop.xlane.xlu0 %2803
    %v2805 = vrcp.pop 16.0
    %v2806 = vmul.f32 %v2804, %v2805
    %v2807 = vsub.f32 %v2796, %v2806
    %v2808 = vmul.f32 %v2807, %v2807
    %v2809 = vsel %vm2801, %v2808, 0.0
    %2810 = vadd.xlane.f32.xlu0 %v2809
    %v2811 = vpop.xlane.xlu0 %2810
    %v2812 = vmul.f32 %v2811, %v2805
    %v2813 = vadd.f32 %v2812, 1e-05
    %v2814 = vrsqrt.pop %v2813
    %v2815 = vmul.f32 %v2807, %v2814
    %v2816 = vlaneseq
    %v2817 = vshrl.u32 %v2816, 7
    %v2818 = vsub.s32 1, %v2817
    %v2819 = vrot.slane %v27, %v2818
    %v2820 = vmul.f32 %v2815, %v2819
    %v2821 = vlaneseq
    %v2822 = vshrl.u32 %v2821, 7
    %v2823 = vsub.s32 2, %v2822
    %v2824 = vrot.slane %v27, %v2823
    %v2825 = vadd.f32 %v2820, %v2824
    %v2826 = vsel %vm2801, %v2825, 0.0
    %2827 = vadd.xlane.f32.xlu0 %v2826
    %v2828 = vpop.xlane.xlu0 %2827
    %v2829 = vmul.f32 %v2828, %v2805
    %v2830 = vsub.f32 %v2825, %v2829
    %v2831 = vmul.f32 %v2830, %v2830
    %v2832 = vsel %vm2801, %v2831, 0.0
    %2833 = vadd.xlane.f32.xlu0 %v2832
    %v2834 = vpop.xlane.xlu0 %2833
    %v2835 = vmul.f32 %v2834, %v2805
    %v2836 = vadd.f32 %v2835, 1e-05
    %v2837 = vrsqrt.pop %v2836
    %v2838 = vmul.f32 %v2830, %v2837
    %v2839 = vlaneseq
    %v2840 = vshrl.u32 %v2839, 7
    %v2841 = vsub.s32 3, %v2840
    %v2842 = vrot.slane %v27, %v2841
    %v2843 = vmul.f32 %v2838, %v2842
    %v2844 = vlaneseq
    %v2845 = vshrl.u32 %v2844, 7
    %v2846 = vsub.s32 4, %v2845
    %v2847 = vrot.slane %v27, %v2846
    %v2848 = vadd.f32 %v2843, %v2847
    %v2849 = vpack.c.bf16 %v2848, %v2848
    %vm2850 = vcmask 122880
    %2851 = vst.msk [vmem:[#allocation2] sm:$0x1] %vm2850, %v2849
    // Predicated region
    $region26: #{hyper_token_encoder.1} parent=1 // pred_check
      _
    $region27: #{hyper_token_encoder.1} parent=1 // pred_check_branch
      %2853 = sbr.rel (0) target = $region29
    $region28: #{hyper_token_encoder.1} parent=1 // pred_region
      %s2855 = ssub.s32 16, 16
      %2856 = vsyncadd [#allocation3], %s2855
      %s2858 = sshll.u32 [#allocation2], 4
      %s2859 = int_to_ptr.vmem [resolvable:$true] %s2858
      %2861 = dma.vmem_to_hbm [thread:$0]  %s2859, 16, %s6, [#allocation3]
    $region29: #{hyper_token_encoder.1} parent=1 // pred_fallthru
      _
    // Predicated region
    $region30: #{hyper_token_encoder.1} parent=1 // pred_check
      _
    $region31: #{hyper_token_encoder.1} parent=1 // pred_check_branch
      %2863 = sbr.rel (0) target = $region33
    $region32: #{hyper_token_encoder.1} parent=1 // pred_region
      %2864 = dma.done [#allocation3], 16
    $region33: #{hyper_token_encoder.1} parent=1 // pred_fallthru
      _
    %2865 = vsyncpa [#allocation3], 1

</llo_original>
